<compile_context>
chip_gen: v6e
topology: v6e:2x2x1
jax: 0.10.0
libtpu: 0.0.40
codegen_flags: <defaults>
</compile_context>

<pallas_src>
import functools

import jax
import jax.numpy as jnp
import numpy as np
from jax import lax
from jax.experimental import pallas as pl
from jax.experimental.pallas import tpu as pltpu

BIG = 1e30          # "infinite" distance: forbids cross-batch edges
MASKED_KEY = 3e38   # > any packed key: marks already-picked neighbours


def _dgcnn_kernel(xi_ref, xt_ref, xg_ref, meta_ref, bcol_ref, base_ref,
                  w1b_ref, w2_ref, b2_ref, out_ref, *, k, nbits):
    tm = xi_ref.shape[0]
    n = xt_ref.shape[1]
    c_pad = w2_ref.shape[1]

    xi = xi_ref[...]                                               # (TM, C_in) f32
    meta = meta_ref[...]                                           # (2, N) f32
    sq_j = meta[0:1, :]                                            # (1, N)  ||x_j||^2
    brow = meta[1:2, :]                                            # (1, N)  column batch ids
    bcol = bcol_ref[...]                                           # (TM, 1) row batch ids

    # Row tile of squared distances, shifted by +1 so every valid key is a normal
    # positive float (no denormals after the index is packed into the mantissa):
    #   d_ij = ||x_i||^2 + ||x_j||^2 - 2 x_i.x_j + 1  >= 1
    g = jnp.dot(xi, xt_ref[...], preferred_element_type=jnp.float32)   # (TM, N)
    sq_i = jnp.sum(xi * xi, axis=1, keepdims=True)                     # (TM, 1)
    d = sq_i + sq_j - 2.0 * g + 1.0
    same = bcol == brow                                                # (TM, N)
    d = jnp.where(same, jnp.maximum(d, 1.0), BIG)

    # Packed key: high bits = distance, low `nbits` bits = column index.  For
    # non-negative normal floats the f32 ordering equals the bit-pattern ordering,
    # so one jnp.min gives both the min distance and (ties -> lowest) its argmin.
    # NOTE: distances equal after dropping the low `nbits` mantissa bits tie.
    col = lax.broadcasted_iota(jnp.int32, (tm, n), 1)
    idx_mask = jnp.int32((1 << nbits) - 1)
    keep_mask = jnp.int32(-(1 << nbits))                               # ~idx_mask
    packed0 = pltpu.bitcast(
        (pltpu.bitcast(d, jnp.int32) & keep_mask) | col, jnp.float32)  # (TM, N)

    base = base_ref[...]                                               # (TM, H) f32
    xg = xg_ref[...]                                                   # (N, C_in) mm_dtype
    w1b = w1b_ref[...]                                                 # (C_in, H)
    w2 = w2_ref[...]                                                   # (H, C_pad)
    b2 = b2_ref[...]                                                   # (1, C_pad) f32
    mm_dtype = xg.dtype

    def body(_, carry):
        packed, acc = carry
        p = jnp.min(packed, axis=1, keepdims=True)                     # (TM, 1) one reduction
        idx = pltpu.bitcast(p, jnp.int32) & idx_mask                   # (TM, 1) argmin
        sel = col == idx                                               # (TM, N) one-hot, reused
        # gather raw neighbour features with one narrow one-hot MXU matmul,
        # then the tiny loop-invariant W1b projection
        xj = jnp.dot(sel.astype(mm_dtype), xg,
                     preferred_element_type=jnp.float32)               # (TM, C_in)
        xjw = jnp.dot(xj.astype(mm_dtype), w1b,
                      preferred_element_type=jnp.float32)              # (TM, H)
        h = jnp.maximum(base + xjw, 0.0)                               # ReLU([x_i|x_j-x_i]@W1+b1)
        o = jnp.dot(h.astype(mm_dtype), w2,
                    preferred_element_type=jnp.float32) + b2           # (TM, C_pad)
        acc = jnp.maximum(acc, o)                                      # aggr='max'
        packed = jnp.where(sel, jnp.float32(MASKED_KEY), packed)       # mask chosen neighbour
        return packed, acc

    acc0 = jnp.full((tm, c_pad), -jnp.inf, dtype=jnp.float32)
    unroll = True if k <= 8 else 4
    _, acc = lax.fori_loop(0, k, body, (packed0, acc0), unroll=unroll)

    out_ref[...] = jnp.maximum(acc, 0.0)                               # DGCNN's trailing ReLU


def dgcnn_forward(x, pos, batch, params, *, k, tm=None, mm_dtype=jnp.bfloat16):
    """Pallas implementation of DGCNN.forward(x, pos, batch)."""
    del pos  # unused by the PyTorch module's forward as well
    n, c_in = x.shape
    w1, b1, w2, b2 = params
    hdim = w1.shape[1]
    c_out = w2.shape[1]

    x = x.astype(jnp.float32)
    w1 = w1.astype(jnp.float32)
    b1 = b1.astype(jnp.float32).reshape(1, hdim)
    w2 = w2.astype(jnp.float32)
    b2 = b2.astype(jnp.float32).reshape(1, c_out)

    # ---- VMEM budget & tile-size selection (generation aware) ----------------
    try:
        vmem_cap = int(getattr(pltpu.get_tpu_info(), "vmem_capacity_bytes",
                               64 * 2**20))
    except Exception:
        vmem_cap = 64 * 2**20
    budget = int(vmem_cap * 0.75)           # ~48 MiB on v7x, ~96 MiB on v5e/v6e

    esize = jnp.dtype(mm_dtype).itemsize
    c_pad = -(-c_out // 128) * 128          # lane-dense output store

    def vmem_est(tm_, npad_):
        live = 6 * 4 * tm_ * npad_                               # packed/d/iota/sel temps
        tiles = 2 * 4 * tm_ * (c_in + hdim + 128 + c_pad)        # double-buffered tile io
        resid = 2 * (4 * c_in * npad_ + esize * c_in * npad_ + 4 * 8 * npad_
                     + esize * c_in * hdim + esize * hdim * c_pad + 4 * 8 * c_pad)
        return live + tiles + resid

    if tm is None:
        n8 = max(8, -(-n // 8) * 8)
        tm = 8
        for cand in (512, 256, 128, 64, 32, 16, 8):
            if cand > n8:
                continue
            npad_c = -(-n // cand) * cand
            if vmem_est(cand, npad_c) <= 0.8 * budget:
                tm = cand
                break
    tm = max(8, (tm // 8) * 8)
    n_pad = -(-n // tm) * tm

    # ---- hoisted, loop-invariant edge-MLP pieces ------------------------------
    # [x_i | x_j - x_i] @ W1 + b1 = (x_i@W1a - x_i@W1b + b1) + x_j@W1b
    w1a, w1b = w1[:c_in, :], w1[c_in:, :]
    base = x @ w1a - x @ w1b + b1           # (N, H) per-query constant part
    sq = jnp.sum(x * x, axis=1)             # (N,)   ||x_j||^2

    batch_f = batch.astype(jnp.float32)
    pad_n = n_pad - n
    if pad_n:
        x = jnp.pad(x, ((0, pad_n), (0, 0)))
        base = jnp.pad(base, ((0, pad_n), (0, 0)))
        sq = jnp.pad(sq, ((0, pad_n),))
        batch_f = jnp.concatenate([batch_f, jnp.full((pad_n,), -1.0, jnp.float32)])

    # x is passed in three layouts: f32 row tiles (queries), f32 transpose (distance
    # matmul RHS, avoids per-step relayout), mm_dtype rows (one-hot gather payload).
    xt = x.T                                 # (C_in, N_pad) f32
    xg = x.astype(mm_dtype)                  # (N_pad, C_in)
    meta = jnp.stack([sq, batch_f], axis=0)  # (2, N_pad): ||x_j||^2 ; column batch ids
    bcol = batch_f.reshape(n_pad, 1)

    w1bp = w1b.astype(mm_dtype)
    w2p = jnp.pad(w2, ((0, 0), (0, c_pad - c_out))).astype(mm_dtype)
    b2p = jnp.pad(b2, ((0, 0), (0, c_pad - c_out)))

    vmem_limit = int(min(budget, max(16 * 2**20, 1.5 * vmem_est(tm, n_pad))))
    nbits = max(1, (n_pad - 1).bit_length())

    kernel = functools.partial(_dgcnn_kernel, k=k, nbits=nbits)

    def run(single_buffer_residents):
        def resident(shape):
            idx_map = lambda i, _s=shape: (0,) * len(_s)
            if single_buffer_residents:
                return pl.BlockSpec(shape, idx_map, pipeline_mode=pl.Buffered(1))
            return pl.BlockSpec(shape, idx_map)

        return pl.pallas_call(
            kernel,
            out_shape=jax.ShapeDtypeStruct((n_pad, c_pad), jnp.float32),
            grid=(n_pad // tm,),
            in_specs=[
                pl.BlockSpec((tm, c_in), lambda i: (i, 0)),   # x_i row tile (f32)
                resident((c_in, n_pad)),                      # x^T (f32, distance RHS)
                resident((n_pad, c_in)),                      # x   (mm_dtype, gather RHS)
                resident((2, n_pad)),                         # [||x_j||^2 ; batch_j]
                pl.BlockSpec((tm, 1), lambda i: (i, 0)),      # batch ids of tile rows
                pl.BlockSpec((tm, hdim), lambda i: (i, 0)),   # base tile
                resident((c_in, hdim)),                       # W1b (mm_dtype)
                resident((hdim, c_pad)),                      # W2  (mm_dtype, lane-padded)
                resident((1, c_pad)),                         # b2  (f32, lane-padded)
            ],
            out_specs=pl.BlockSpec((tm, c_pad), lambda i: (i, 0)),
            compiler_params=pltpu.CompilerParams(
                dimension_semantics=("parallel",),
                vmem_limit_bytes=vmem_limit),
        )(x, xt, xg, meta, bcol, base, w1bp, w2p, b2p)

    try:
        out = run(True)
    except Exception:
        # fallback if single-buffered (pl.Buffered(1)) residents are unsupported
        out = run(False)

    # TODO(synk): if a batch segment has fewer than k points, the extra iterations
    # pick BIG-distance columns (same degenerate behaviour as the previous version).
    return out[:n, :c_out]


def dgcnn_reference(x, batch, params, *, k):
    """Pure-JAX reference with identical semantics (for validation)."""
    w1, b1, w2, b2 = params
    g = x @ x.T
    sq = jnp.sum(x * x, axis=1, keepdims=True)
    d = sq + sq.T - 2.0 * g
    same = batch[:, None] == batch[None, :]
    d = jnp.where(same, d, BIG)
    idx = jnp.argsort(d, axis=1)[:, :k]                      # (N, k) neighbour set
    xi = x[:, None, :]
    xj = x[idx]                                              # (N, k, C)
    e = jnp.concatenate([jnp.broadcast_to(xi, xj.shape), xj - xi], axis=-1)
    h = jnp.maximum(e @ w1 + b1, 0.0)
    o = h @ w2 + b2
    return jnp.maximum(jnp.max(o, axis=1), 0.0)


if __name__ == "__main__":
    # 2 batch segments (20 + 16 points); TM=8 -> 5 grid steps, exercises row padding
    # (N=36 -> 40) and a tile that straddles the segment boundary.
    N, C_IN, H, C_OUT, K, TM = 36, 8, 16, 16, 4, 8

    key = jax.random.PRNGKey(0)
    kx, kp, k1, k2, k3, k4 = jax.random.split(key, 6)

    x = jax.random.normal(kx, (N, C_IN), dtype=jnp.float32)
    pos = jax.random.normal(kp, (N, 3), dtype=jnp.float32)          # unused by forward
    batch = jnp.concatenate([jnp.zeros(20, jnp.int32), jnp.ones(16, jnp.int32)])

    # deterministic synthetic parameters for nn = Linear(2C,H) -> ReLU -> Linear(H,C_out)
    w1 = jax.random.normal(k1, (2 * C_IN, H), dtype=jnp.float32) * 0.2
    b1 = jax.random.normal(k2, (1, H), dtype=jnp.float32) * 0.1
    w2 = jax.random.normal(k3, (H, C_OUT), dtype=jnp.float32) * 0.2
    b2 = jax.random.normal(k4, (1, C_OUT), dtype=jnp.float32) * 0.1
    params = (w1, b1, w2, b2)

    ref = jax.block_until_ready(dgcnn_reference(x, batch, params, k=K))

    # exact (f32 MXU) path, tight tolerance
    out_f32 = jax.block_until_ready(
        dgcnn_forward(x, pos, batch, params, k=K, tm=TM, mm_dtype=jnp.float32))
    np.testing.assert_allclose(np.asarray(out_f32), np.asarray(ref), rtol=1e-3, atol=1e-3)

    # default bf16 MXU path (neighbour selection stays f32), looser tolerance
    out_bf16 = jax.block_until_ready(
        dgcnn_forward(x, pos, batch, params, k=K, tm=TM))
    np.testing.assert_allclose(np.asarray(out_bf16), np.asarray(ref), rtol=0.08, atol=0.08)

    # auto tile-size / VMEM-budget path (tm=None picks TM from the hardware budget)
    out_auto = jax.block_until_ready(
        dgcnn_forward(x, pos, batch, params, k=K))
    np.testing.assert_allclose(np.asarray(out_auto), np.asarray(ref), rtol=0.08, atol=0.08)

    print("KERNEL_OK")
</pallas_src>

<mosaic_0001>
module attributes {stable_mosaic.version = 11 : i64} {
  func.func @_dgcnn_kernel(%arg0: i32, %arg1: memref<8x8xf32, #tpu.memory_space<vmem>>, %arg2: memref<8x40xf32, #tpu.memory_space<vmem>>, %arg3: memref<40x8xf32, #tpu.memory_space<vmem>>, %arg4: memref<2x40xf32, #tpu.memory_space<vmem>>, %arg5: memref<8x1xf32, #tpu.memory_space<vmem>>, %arg6: memref<8x16xf32, #tpu.memory_space<vmem>>, %arg7: memref<8x16xf32, #tpu.memory_space<vmem>>, %arg8: memref<16x128xf32, #tpu.memory_space<vmem>>, %arg9: memref<1x128xf32, #tpu.memory_space<vmem>>, %arg10: memref<8x128xf32, #tpu.memory_space<vmem>>) attributes {dimension_semantics = [#tpu.dimension_semantics<parallel>], iteration_bounds = array<i64: 5>, scalar_prefetch = 0 : i64, scratch_operands = 0 : i64, tpu.core_type = #tpu.core_type<tc>, window_params = [{transform_indices = @transform_0, window_bounds = array<i64: 8, 8>}, {pipeline_mode = #tpu.pipeline_mode<synchronous>, transform_indices = @transform_1, window_bounds = array<i64: 8, 40>}, {pipeline_mode = #tpu.pipeline_mode<synchronous>, transform_indices = @transform_2, window_bounds = array<i64: 40, 8>}, {pipeline_mode = #tpu.pipeline_mode<synchronous>, transform_indices = @transform_3, window_bounds = array<i64: 2, 40>}, {transform_indices = @transform_4, window_bounds = array<i64: 8, 1>}, {transform_indices = @transform_5, window_bounds = array<i64: 8, 16>}, {pipeline_mode = #tpu.pipeline_mode<synchronous>, transform_indices = @transform_6, window_bounds = array<i64: 8, 16>}, {pipeline_mode = #tpu.pipeline_mode<synchronous>, transform_indices = @transform_7, window_bounds = array<i64: 16, 128>}, {pipeline_mode = #tpu.pipeline_mode<synchronous>, transform_indices = @transform_8, window_bounds = array<i64: 1, 128>}, {transform_indices = @transform_9, window_bounds = array<i64: 8, 128>}]} {
    %c0 = arith.constant 0 : index
    %c0_0 = arith.constant 0 : index
    %0 = vector.load %arg1[%c0, %c0_0] : memref<8x8xf32, #tpu.memory_space<vmem>>, vector<8x8xf32>
    %c0_1 = arith.constant 0 : index
    %c0_2 = arith.constant 0 : index
    %1 = vector.load %arg4[%c0_1, %c0_2] : memref<2x40xf32, #tpu.memory_space<vmem>>, vector<2x40xf32>
    %2 = vector.extract_strided_slice %1 {offsets = [0, 0], sizes = [1, 40], strides = [1, 1]} : vector<2x40xf32> to vector<1x40xf32>
    %3 = vector.extract_strided_slice %1 {offsets = [1, 0], sizes = [1, 40], strides = [1, 1]} : vector<2x40xf32> to vector<1x40xf32>
    %c0_3 = arith.constant 0 : index
    %c0_4 = arith.constant 0 : index
    %4 = vector.load %arg5[%c0_3, %c0_4] : memref<8x1xf32, #tpu.memory_space<vmem>>, vector<8x1xf32>
    %c0_5 = arith.constant 0 : index
    %c0_6 = arith.constant 0 : index
    %5 = vector.load %arg2[%c0_5, %c0_6] : memref<8x40xf32, #tpu.memory_space<vmem>>, vector<8x40xf32>
    %cst = arith.constant dense<0.000000e+00> : vector<8x40xf32>
    %6 = tpu.matmul %0, %5, %cst {dimension_numbers = #tpu.dot_dimension_numbers<[1], [0], [0], [1], [0, 0, 1, 1], [], []>} : vector<8x8xf32>, vector<8x40xf32>, vector<8x40xf32> -> vector<8x40xf32>
    %7 = arith.mulf %0, %0 : vector<8x8xf32>
    %cst_7 = arith.constant dense<0.000000e+00> : vector<8xf32>
    %8 = vector.multi_reduction <add>, %7, %cst_7 [1] : vector<8x8xf32> to vector<8xf32>
    %9 = vector.shape_cast %8 : vector<8xf32> to vector<8x1xf32>
    %10 = vector.broadcast %9 : vector<8x1xf32> to vector<8x40xf32>
    %11 = vector.broadcast %2 : vector<1x40xf32> to vector<8x40xf32>
    %12 = arith.addf %10, %11 : vector<8x40xf32>
    %cst_8 = arith.constant 2.000000e+00 : f32
    %13 = vector.broadcast %cst_8 : f32 to vector<8x40xf32>
    %14 = arith.mulf %13, %6 : vector<8x40xf32>
    %15 = arith.subf %12, %14 : vector<8x40xf32>
    %cst_9 = arith.constant 1.000000e+00 : f32
    %16 = vector.broadcast %cst_9 : f32 to vector<8x40xf32>
    %17 = arith.addf %15, %16 : vector<8x40xf32>
    %18 = vector.broadcast %4 : vector<8x1xf32> to vector<8x40xf32>
    %19 = vector.broadcast %3 : vector<1x40xf32> to vector<8x40xf32>
    %20 = arith.cmpf oeq, %18, %19 : vector<8x40xf32>
    %cst_10 = arith.constant 1.000000e+00 : f32
    %21 = vector.broadcast %cst_10 : f32 to vector<8x40xf32>
    %22 = arith.maximumf %17, %21 : vector<8x40xf32>
    %cst_11 = arith.constant 1.000000e+30 : f32
    %23 = vector.broadcast %cst_11 : f32 to vector<8x40xf32>
    %24 = arith.select %20, %22, %23 : vector<8x40xi1>, vector<8x40xf32>
    %25 = tpu.iota {dimensions = array<i32: 1>} : vector<8x40xi32>
    %26 = tpu.bitcast %24 : vector<8x40xf32> -> vector<8x40xi32>
    %c-64_i32 = arith.constant -64 : i32
    %27 = vector.broadcast %c-64_i32 : i32 to vector<8x40xi32>
    %28 = arith.andi %26, %27 : vector<8x40xi32>
    %29 = arith.ori %28, %25 : vector<8x40xi32>
    %30 = tpu.bitcast %29 : vector<8x40xi32> -> vector<8x40xf32>
    %c0_12 = arith.constant 0 : index
    %c0_13 = arith.constant 0 : index
    %31 = vector.load %arg6[%c0_12, %c0_13] : memref<8x16xf32, #tpu.memory_space<vmem>>, vector<8x16xf32>
    %c0_14 = arith.constant 0 : index
    %c0_15 = arith.constant 0 : index
    %32 = vector.load %arg3[%c0_14, %c0_15] : memref<40x8xf32, #tpu.memory_space<vmem>>, vector<40x8xf32>
    %c0_16 = arith.constant 0 : index
    %c0_17 = arith.constant 0 : index
    %33 = vector.load %arg7[%c0_16, %c0_17] : memref<8x16xf32, #tpu.memory_space<vmem>>, vector<8x16xf32>
    %c0_18 = arith.constant 0 : index
    %c0_19 = arith.constant 0 : index
    %34 = vector.load %arg8[%c0_18, %c0_19] : memref<16x128xf32, #tpu.memory_space<vmem>>, vector<16x128xf32>
    %c0_20 = arith.constant 0 : index
    %c0_21 = arith.constant 0 : index
    %35 = vector.load %arg9[%c0_20, %c0_21] : memref<1x128xf32, #tpu.memory_space<vmem>>, vector<1x128xf32>
    %cst_22 = arith.constant 0xFF800000 : f32
    %36 = vector.broadcast %cst_22 : f32 to vector<8x128xf32>
    %c63_i32 = arith.constant 63 : i32
    %c0_i32 = arith.constant 0 : i32
    %cst_23 = arith.constant dense<0x7F800000> : vector<8xf32>
    %37 = vector.multi_reduction <minimumf>, %30, %cst_23 [1] : vector<8x40xf32> to vector<8xf32>
    %38 = vector.shape_cast %37 : vector<8xf32> to vector<8x1xf32>
    %39 = tpu.bitcast %38 : vector<8x1xf32> -> vector<8x1xi32>
    %40 = vector.broadcast %c63_i32 : i32 to vector<8x1xi32>
    %41 = arith.andi %39, %40 : vector<8x1xi32>
    %42 = vector.broadcast %41 : vector<8x1xi32> to vector<8x40xi32>
    %43 = arith.cmpi eq, %25, %42 : vector<8x40xi32>
    %44 = arith.extui %43 : vector<8x40xi1> to vector<8x40xi32>
    %45 = arith.sitofp %44 : vector<8x40xi32> to vector<8x40xf32>
    %cst_24 = arith.constant dense<0.000000e+00> : vector<8x8xf32>
    %46 = tpu.matmul %45, %32, %cst_24 {dimension_numbers = #tpu.dot_dimension_numbers<[1], [0], [0], [1], [0, 0, 1, 1], [], []>} : vector<8x40xf32>, vector<40x8xf32>, vector<8x8xf32> -> vector<8x8xf32>
    %cst_25 = arith.constant dense<0.000000e+00> : vector<8x16xf32>
    %47 = tpu.matmul %46, %33, %cst_25 {dimension_numbers = #tpu.dot_dimension_numbers<[1], [0], [0], [1], [0, 0, 1, 1], [], []>} : vector<8x8xf32>, vector<8x16xf32>, vector<8x16xf32> -> vector<8x16xf32>
    %48 = arith.addf %31, %47 : vector<8x16xf32>
    %cst_26 = arith.constant 0.000000e+00 : f32
    %49 = vector.broadcast %cst_26 : f32 to vector<8x16xf32>
    %50 = arith.maximumf %48, %49 : vector<8x16xf32>
    %cst_27 = arith.constant dense<0.000000e+00> : vector<8x128xf32>
    %51 = tpu.matmul %50, %34, %cst_27 {dimension_numbers = #tpu.dot_dimension_numbers<[1], [0], [0], [1], [0, 0, 1, 1], [], []>} : vector<8x16xf32>, vector<16x128xf32>, vector<8x128xf32> -> vector<8x128xf32>
    %52 = vector.broadcast %35 : vector<1x128xf32> to vector<8x128xf32>
    %53 = arith.addf %51, %52 : vector<8x128xf32>
    %54 = arith.maximumf %36, %53 : vector<8x128xf32>
    %cst_28 = arith.constant 3.000000e+38 : f32
    %55 = vector.broadcast %cst_28 : f32 to vector<8x40xf32>
    %56 = arith.select %43, %55, %30 : vector<8x40xi1>, vector<8x40xf32>
    %c1_i32 = arith.constant 1 : i32
    %cst_29 = arith.constant dense<0x7F800000> : vector<8xf32>
    %57 = vector.multi_reduction <minimumf>, %56, %cst_29 [1] : vector<8x40xf32> to vector<8xf32>
    %58 = vector.shape_cast %57 : vector<8xf32> to vector<8x1xf32>
    %59 = tpu.bitcast %58 : vector<8x1xf32> -> vector<8x1xi32>
    %60 = vector.broadcast %c63_i32 : i32 to vector<8x1xi32>
    %61 = arith.andi %59, %60 : vector<8x1xi32>
    %62 = vector.broadcast %61 : vector<8x1xi32> to vector<8x40xi32>
    %63 = arith.cmpi eq, %25, %62 : vector<8x40xi32>
    %64 = arith.extui %63 : vector<8x40xi1> to vector<8x40xi32>
    %65 = arith.sitofp %64 : vector<8x40xi32> to vector<8x40xf32>
    %cst_30 = arith.constant dense<0.000000e+00> : vector<8x8xf32>
    %66 = tpu.matmul %65, %32, %cst_30 {dimension_numbers = #tpu.dot_dimension_numbers<[1], [0], [0], [1], [0, 0, 1, 1], [], []>} : vector<8x40xf32>, vector<40x8xf32>, vector<8x8xf32> -> vector<8x8xf32>
    %cst_31 = arith.constant dense<0.000000e+00> : vector<8x16xf32>
    %67 = tpu.matmul %66, %33, %cst_31 {dimension_numbers = #tpu.dot_dimension_numbers<[1], [0], [0], [1], [0, 0, 1, 1], [], []>} : vector<8x8xf32>, vector<8x16xf32>, vector<8x16xf32> -> vector<8x16xf32>
    %68 = arith.addf %31, %67 : vector<8x16xf32>
    %cst_32 = arith.constant 0.000000e+00 : f32
    %69 = vector.broadcast %cst_32 : f32 to vector<8x16xf32>
    %70 = arith.maximumf %68, %69 : vector<8x16xf32>
    %cst_33 = arith.constant dense<0.000000e+00> : vector<8x128xf32>
    %71 = tpu.matmul %70, %34, %cst_33 {dimension_numbers = #tpu.dot_dimension_numbers<[1], [0], [0], [1], [0, 0, 1, 1], [], []>} : vector<8x16xf32>, vector<16x128xf32>, vector<8x128xf32> -> vector<8x128xf32>
    %72 = vector.broadcast %35 : vector<1x128xf32> to vector<8x128xf32>
    %73 = arith.addf %71, %72 : vector<8x128xf32>
    %74 = arith.maximumf %54, %73 : vector<8x128xf32>
    %cst_34 = arith.constant 3.000000e+38 : f32
    %75 = vector.broadcast %cst_34 : f32 to vector<8x40xf32>
    %76 = arith.select %63, %75, %56 : vector<8x40xi1>, vector<8x40xf32>
    %c2_i32 = arith.constant 2 : i32
    %cst_35 = arith.constant dense<0x7F800000> : vector<8xf32>
    %77 = vector.multi_reduction <minimumf>, %76, %cst_35 [1] : vector<8x40xf32> to vector<8xf32>
    %78 = vector.shape_cast %77 : vector<8xf32> to vector<8x1xf32>
    %79 = tpu.bitcast %78 : vector<8x1xf32> -> vector<8x1xi32>
    %80 = vector.broadcast %c63_i32 : i32 to vector<8x1xi32>
    %81 = arith.andi %79, %80 : vector<8x1xi32>
    %82 = vector.broadcast %81 : vector<8x1xi32> to vector<8x40xi32>
    %83 = arith.cmpi eq, %25, %82 : vector<8x40xi32>
    %84 = arith.extui %83 : vector<8x40xi1> to vector<8x40xi32>
    %85 = arith.sitofp %84 : vector<8x40xi32> to vector<8x40xf32>
    %cst_36 = arith.constant dense<0.000000e+00> : vector<8x8xf32>
    %86 = tpu.matmul %85, %32, %cst_36 {dimension_numbers = #tpu.dot_dimension_numbers<[1], [0], [0], [1], [0, 0, 1, 1], [], []>} : vector<8x40xf32>, vector<40x8xf32>, vector<8x8xf32> -> vector<8x8xf32>
    %cst_37 = arith.constant dense<0.000000e+00> : vector<8x16xf32>
    %87 = tpu.matmul %86, %33, %cst_37 {dimension_numbers = #tpu.dot_dimension_numbers<[1], [0], [0], [1], [0, 0, 1, 1], [], []>} : vector<8x8xf32>, vector<8x16xf32>, vector<8x16xf32> -> vector<8x16xf32>
    %88 = arith.addf %31, %87 : vector<8x16xf32>
    %cst_38 = arith.constant 0.000000e+00 : f32
    %89 = vector.broadcast %cst_38 : f32 to vector<8x16xf32>
    %90 = arith.maximumf %88, %89 : vector<8x16xf32>
    %cst_39 = arith.constant dense<0.000000e+00> : vector<8x128xf32>
    %91 = tpu.matmul %90, %34, %cst_39 {dimension_numbers = #tpu.dot_dimension_numbers<[1], [0], [0], [1], [0, 0, 1, 1], [], []>} : vector<8x16xf32>, vector<16x128xf32>, vector<8x128xf32> -> vector<8x128xf32>
    %92 = vector.broadcast %35 : vector<1x128xf32> to vector<8x128xf32>
    %93 = arith.addf %91, %92 : vector<8x128xf32>
    %94 = arith.maximumf %74, %93 : vector<8x128xf32>
    %cst_40 = arith.constant 3.000000e+38 : f32
    %95 = vector.broadcast %cst_40 : f32 to vector<8x40xf32>
    %96 = arith.select %83, %95, %76 : vector<8x40xi1>, vector<8x40xf32>
    %c3_i32 = arith.constant 3 : i32
    %cst_41 = arith.constant dense<0x7F800000> : vector<8xf32>
    %97 = vector.multi_reduction <minimumf>, %96, %cst_41 [1] : vector<8x40xf32> to vector<8xf32>
    %98 = vector.shape_cast %97 : vector<8xf32> to vector<8x1xf32>
    %99 = tpu.bitcast %98 : vector<8x1xf32> -> vector<8x1xi32>
    %100 = vector.broadcast %c63_i32 : i32 to vector<8x1xi32>
    %101 = arith.andi %99, %100 : vector<8x1xi32>
    %102 = vector.broadcast %101 : vector<8x1xi32> to vector<8x40xi32>
    %103 = arith.cmpi eq, %25, %102 : vector<8x40xi32>
    %104 = arith.extui %103 : vector<8x40xi1> to vector<8x40xi32>
    %105 = arith.sitofp %104 : vector<8x40xi32> to vector<8x40xf32>
    %cst_42 = arith.constant dense<0.000000e+00> : vector<8x8xf32>
    %106 = tpu.matmul %105, %32, %cst_42 {dimension_numbers = #tpu.dot_dimension_numbers<[1], [0], [0], [1], [0, 0, 1, 1], [], []>} : vector<8x40xf32>, vector<40x8xf32>, vector<8x8xf32> -> vector<8x8xf32>
    %cst_43 = arith.constant dense<0.000000e+00> : vector<8x16xf32>
    %107 = tpu.matmul %106, %33, %cst_43 {dimension_numbers = #tpu.dot_dimension_numbers<[1], [0], [0], [1], [0, 0, 1, 1], [], []>} : vector<8x8xf32>, vector<8x16xf32>, vector<8x16xf32> -> vector<8x16xf32>
    %108 = arith.addf %31, %107 : vector<8x16xf32>
    %cst_44 = arith.constant 0.000000e+00 : f32
    %109 = vector.broadcast %cst_44 : f32 to vector<8x16xf32>
    %110 = arith.maximumf %108, %109 : vector<8x16xf32>
    %cst_45 = arith.constant dense<0.000000e+00> : vector<8x128xf32>
    %111 = tpu.matmul %110, %34, %cst_45 {dimension_numbers = #tpu.dot_dimension_numbers<[1], [0], [0], [1], [0, 0, 1, 1], [], []>} : vector<8x16xf32>, vector<16x128xf32>, vector<8x128xf32> -> vector<8x128xf32>
    %112 = vector.broadcast %35 : vector<1x128xf32> to vector<8x128xf32>
    %113 = arith.addf %111, %112 : vector<8x128xf32>
    %114 = arith.maximumf %94, %113 : vector<8x128xf32>
    %cst_46 = arith.constant 3.000000e+38 : f32
    %115 = vector.broadcast %cst_46 : f32 to vector<8x40xf32>
    %116 = arith.select %103, %115, %96 : vector<8x40xi1>, vector<8x40xf32>
    %cst_47 = arith.constant 0.000000e+00 : f32
    %117 = vector.broadcast %cst_47 : f32 to vector<8x128xf32>
    %118 = arith.maximumf %114, %117 : vector<8x128xf32>
    %c0_48 = arith.constant 0 : index
    %c0_49 = arith.constant 0 : index
    %119 = vector.load %arg10[%c0_48, %c0_49] : memref<8x128xf32, #tpu.memory_space<vmem>>, vector<8x128xf32>
    tpu.vector_store %arg10[%c0_48, %c0_49], %118 {strides = array<i32>} : memref<8x128xf32, #tpu.memory_space<vmem>>, vector<8x128xf32>,
    return
  }
  func.func @transform_0(%arg0: i32) -> (i32, i32) {
    %c0_i32 = arith.constant 0 : i32
    %c0_i32_0 = arith.constant 0 : i32
    return %arg0, %c0_i32 : i32, i32
  }
  func.func @transform_1(%arg0: i32) -> (i32, i32) {
    %c0_i32 = arith.constant 0 : i32
    %c0_i32_0 = arith.constant 0 : i32
    %c0_i32_1 = arith.constant 0 : i32
    return %c0_i32, %c0_i32_0 : i32, i32
  }
  func.func @transform_2(%arg0: i32) -> (i32, i32) {
    %c0_i32 = arith.constant 0 : i32
    %c0_i32_0 = arith.constant 0 : i32
    %c0_i32_1 = arith.constant 0 : i32
    return %c0_i32, %c0_i32_0 : i32, i32
  }
  func.func @transform_3(%arg0: i32) -> (i32, i32) {
    %c0_i32 = arith.constant 0 : i32
    %c0_i32_0 = arith.constant 0 : i32
    %c0_i32_1 = arith.constant 0 : i32
    return %c0_i32, %c0_i32_0 : i32, i32
  }
  func.func @transform_4(%arg0: i32) -> (i32, i32) {
    %c0_i32 = arith.constant 0 : i32
    %c0_i32_0 = arith.constant 0 : i32
    return %arg0, %c0_i32 : i32, i32
  }
  func.func @transform_5(%arg0: i32) -> (i32, i32) {
    %c0_i32 = arith.constant 0 : i32
    %c0_i32_0 = arith.constant 0 : i32
    return %arg0, %c0_i32 : i32, i32
  }
  func.func @transform_6(%arg0: i32) -> (i32, i32) {
    %c0_i32 = arith.constant 0 : i32
    %c0_i32_0 = arith.constant 0 : i32
    %c0_i32_1 = arith.constant 0 : i32
    return %c0_i32, %c0_i32_0 : i32, i32
  }
  func.func @transform_7(%arg0: i32) -> (i32, i32) {
    %c0_i32 = arith.constant 0 : i32
    %c0_i32_0 = arith.constant 0 : i32
    %c0_i32_1 = arith.constant 0 : i32
    return %c0_i32, %c0_i32_0 : i32, i32
  }
  func.func @transform_8(%arg0: i32) -> (i32, i32) {
    %c0_i32 = arith.constant 0 : i32
    %c0_i32_0 = arith.constant 0 : i32
    %c0_i32_1 = arith.constant 0 : i32
    return %c0_i32, %c0_i32_0 : i32, i32
  }
  func.func @transform_9(%arg0: i32) -> (i32, i32) {
    %c0_i32 = arith.constant 0 : i32
    %c0_i32_0 = arith.constant 0 : i32
    return %arg0, %c0_i32 : i32, i32
  }
}

module attributes {stable_mosaic.version = 11 : i64} {
  func.func @_dgcnn_kernel(%arg0: i32, %arg1: memref<8x8xf32, #tpu.memory_space<vmem>>, %arg2: memref<8x40xf32, #tpu.memory_space<vmem>>, %arg3: memref<40x8xf32, #tpu.memory_space<vmem>>, %arg4: memref<2x40xf32, #tpu.memory_space<vmem>>, %arg5: memref<8x1xf32, #tpu.memory_space<vmem>>, %arg6: memref<8x16xf32, #tpu.memory_space<vmem>>, %arg7: memref<8x16xf32, #tpu.memory_space<vmem>>, %arg8: memref<16x128xf32, #tpu.memory_space<vmem>>, %arg9: memref<1x128xf32, #tpu.memory_space<vmem>>, %arg10: memref<8x128xf32, #tpu.memory_space<vmem>>) attributes {dimension_semantics = [#tpu.dimension_semantics<parallel>], iteration_bounds = array<i64: 5>, scalar_prefetch = 0 : i64, scratch_operands = 0 : i64, tpu.core_type = #tpu.core_type<tc>, window_params = [{transform_indices = @transform_0, window_bounds = array<i64: 8, 8>}, {pipeline_mode = #tpu.pipeline_mode<synchronous>, transform_indices = @transform_1, window_bounds = array<i64: 8, 40>}, {pipeline_mode = #tpu.pipeline_mode<synchronous>, transform_indices = @transform_2, window_bounds = array<i64: 40, 8>}, {pipeline_mode = #tpu.pipeline_mode<synchronous>, transform_indices = @transform_3, window_bounds = array<i64: 2, 40>}, {transform_indices = @transform_4, window_bounds = array<i64: 8, 1>}, {transform_indices = @transform_5, window_bounds = array<i64: 8, 16>}, {pipeline_mode = #tpu.pipeline_mode<synchronous>, transform_indices = @transform_6, window_bounds = array<i64: 8, 16>}, {pipeline_mode = #tpu.pipeline_mode<synchronous>, transform_indices = @transform_7, window_bounds = array<i64: 16, 128>}, {pipeline_mode = #tpu.pipeline_mode<synchronous>, transform_indices = @transform_8, window_bounds = array<i64: 1, 128>}, {transform_indices = @transform_9, window_bounds = array<i64: 8, 128>}]} {
    %c0 = arith.constant 0 : index
    %c0_0 = arith.constant 0 : index
    %0 = vector.load %arg1[%c0, %c0_0] : memref<8x8xf32, #tpu.memory_space<vmem>>, vector<8x8xf32>
    %c0_1 = arith.constant 0 : index
    %c0_2 = arith.constant 0 : index
    %1 = vector.load %arg4[%c0_1, %c0_2] : memref<2x40xf32, #tpu.memory_space<vmem>>, vector<2x40xf32>
    %2 = vector.extract_strided_slice %1 {offsets = [0, 0], sizes = [1, 40], strides = [1, 1]} : vector<2x40xf32> to vector<1x40xf32>
    %3 = vector.extract_strided_slice %1 {offsets = [1, 0], sizes = [1, 40], strides = [1, 1]} : vector<2x40xf32> to vector<1x40xf32>
    %c0_3 = arith.constant 0 : index
    %c0_4 = arith.constant 0 : index
    %4 = vector.load %arg5[%c0_3, %c0_4] : memref<8x1xf32, #tpu.memory_space<vmem>>, vector<8x1xf32>
    %c0_5 = arith.constant 0 : index
    %c0_6 = arith.constant 0 : index
    %5 = vector.load %arg2[%c0_5, %c0_6] : memref<8x40xf32, #tpu.memory_space<vmem>>, vector<8x40xf32>
    %cst = arith.constant dense<0.000000e+00> : vector<8x40xf32>
    %6 = tpu.matmul %0, %5, %cst {dimension_numbers = #tpu.dot_dimension_numbers<[1], [0], [0], [1], [0, 0, 1, 1], [], []>} : vector<8x8xf32>, vector<8x40xf32>, vector<8x40xf32> -> vector<8x40xf32>
    %7 = arith.mulf %0, %0 : vector<8x8xf32>
    %cst_7 = arith.constant dense<0.000000e+00> : vector<8xf32>
    %8 = vector.multi_reduction <add>, %7, %cst_7 [1] : vector<8x8xf32> to vector<8xf32>
    %9 = vector.shape_cast %8 : vector<8xf32> to vector<8x1xf32>
    %10 = vector.broadcast %9 : vector<8x1xf32> to vector<8x40xf32>
    %11 = vector.broadcast %2 : vector<1x40xf32> to vector<8x40xf32>
    %12 = arith.addf %10, %11 : vector<8x40xf32>
    %cst_8 = arith.constant 2.000000e+00 : f32
    %13 = vector.broadcast %cst_8 : f32 to vector<8x40xf32>
    %14 = arith.mulf %13, %6 : vector<8x40xf32>
    %15 = arith.subf %12, %14 : vector<8x40xf32>
    %cst_9 = arith.constant 1.000000e+00 : f32
    %16 = vector.broadcast %cst_9 : f32 to vector<8x40xf32>
    %17 = arith.addf %15, %16 : vector<8x40xf32>
    %18 = vector.broadcast %4 : vector<8x1xf32> to vector<8x40xf32>
    %19 = vector.broadcast %3 : vector<1x40xf32> to vector<8x40xf32>
    %20 = arith.cmpf oeq, %18, %19 : vector<8x40xf32>
    %cst_10 = arith.constant 1.000000e+00 : f32
    %21 = vector.broadcast %cst_10 : f32 to vector<8x40xf32>
    %22 = arith.maximumf %17, %21 : vector<8x40xf32>
    %cst_11 = arith.constant 1.000000e+30 : f32
    %23 = vector.broadcast %cst_11 : f32 to vector<8x40xf32>
    %24 = arith.select %20, %22, %23 : vector<8x40xi1>, vector<8x40xf32>
    %25 = tpu.iota {dimensions = array<i32: 1>} : vector<8x40xi32>
    %26 = tpu.bitcast %24 : vector<8x40xf32> -> vector<8x40xi32>
    %c-64_i32 = arith.constant -64 : i32
    %27 = vector.broadcast %c-64_i32 : i32 to vector<8x40xi32>
    %28 = arith.andi %26, %27 : vector<8x40xi32>
    %29 = arith.ori %28, %25 : vector<8x40xi32>
    %30 = tpu.bitcast %29 : vector<8x40xi32> -> vector<8x40xf32>
    %c0_12 = arith.constant 0 : index
    %c0_13 = arith.constant 0 : index
    %31 = vector.load %arg6[%c0_12, %c0_13] : memref<8x16xf32, #tpu.memory_space<vmem>>, vector<8x16xf32>
    %c0_14 = arith.constant 0 : index
    %c0_15 = arith.constant 0 : index
    %32 = vector.load %arg3[%c0_14, %c0_15] : memref<40x8xf32, #tpu.memory_space<vmem>>, vector<40x8xf32>
    %c0_16 = arith.constant 0 : index
    %c0_17 = arith.constant 0 : index
    %33 = vector.load %arg7[%c0_16, %c0_17] : memref<8x16xf32, #tpu.memory_space<vmem>>, vector<8x16xf32>
    %c0_18 = arith.constant 0 : index
    %c0_19 = arith.constant 0 : index
    %34 = vector.load %arg8[%c0_18, %c0_19] : memref<16x128xf32, #tpu.memory_space<vmem>>, vector<16x128xf32>
    %c0_20 = arith.constant 0 : index
    %c0_21 = arith.constant 0 : index
    %35 = vector.load %arg9[%c0_20, %c0_21] : memref<1x128xf32, #tpu.memory_space<vmem>>, vector<1x128xf32>
    %cst_22 = arith.constant 0xFF800000 : f32
    %36 = vector.broadcast %cst_22 : f32 to vector<8x128xf32>
    %c63_i32 = arith.constant 63 : i32
    %c0_i32 = arith.constant 0 : i32
    %cst_23 = arith.constant dense<0x7F800000> : vector<8xf32>
    %37 = vector.multi_reduction <minimumf>, %30, %cst_23 [1] : vector<8x40xf32> to vector<8xf32>
    %38 = vector.shape_cast %37 : vector<8xf32> to vector<8x1xf32>
    %39 = tpu.bitcast %38 : vector<8x1xf32> -> vector<8x1xi32>
    %40 = vector.broadcast %c63_i32 : i32 to vector<8x1xi32>
    %41 = arith.andi %39, %40 : vector<8x1xi32>
    %42 = vector.broadcast %41 : vector<8x1xi32> to vector<8x40xi32>
    %43 = arith.cmpi eq, %25, %42 : vector<8x40xi32>
    %44 = arith.extui %43 : vector<8x40xi1> to vector<8x40xi32>
    %45 = arith.sitofp %44 : vector<8x40xi32> to vector<8x40xf32>
    %cst_24 = arith.constant dense<0.000000e+00> : vector<8x8xf32>
    %46 = tpu.matmul %45, %32, %cst_24 {dimension_numbers = #tpu.dot_dimension_numbers<[1], [0], [0], [1], [0, 0, 1, 1], [], []>} : vector<8x40xf32>, vector<40x8xf32>, vector<8x8xf32> -> vector<8x8xf32>
    %cst_25 = arith.constant dense<0.000000e+00> : vector<8x16xf32>
    %47 = tpu.matmul %46, %33, %cst_25 {dimension_numbers = #tpu.dot_dimension_numbers<[1], [0], [0], [1], [0, 0, 1, 1], [], []>} : vector<8x8xf32>, vector<8x16xf32>, vector<8x16xf32> -> vector<8x16xf32>
    %48 = arith.addf %31, %47 : vector<8x16xf32>
    %cst_26 = arith.constant 0.000000e+00 : f32
    %49 = vector.broadcast %cst_26 : f32 to vector<8x16xf32>
    %50 = arith.maximumf %48, %49 : vector<8x16xf32>
    %cst_27 = arith.constant dense<0.000000e+00> : vector<8x128xf32>
    %51 = tpu.matmul %50, %34, %cst_27 {dimension_numbers = #tpu.dot_dimension_numbers<[1], [0], [0], [1], [0, 0, 1, 1], [], []>} : vector<8x16xf32>, vector<16x128xf32>, vector<8x128xf32> -> vector<8x128xf32>
    %52 = vector.broadcast %35 : vector<1x128xf32> to vector<8x128xf32>
    %53 = arith.addf %51, %52 : vector<8x128xf32>
    %54 = arith.maximumf %36, %53 : vector<8x128xf32>
    %cst_28 = arith.constant 3.000000e+38 : f32
    %55 = vector.broadcast %cst_28 : f32 to vector<8x40xf32>
    %56 = arith.select %43, %55, %30 : vector<8x40xi1>, vector<8x40xf32>
    %c1_i32 = arith.constant 1 : i32
    %cst_29 = arith.constant dense<0x7F800000> : vector<8xf32>
    %57 = vector.multi_reduction <minimumf>, %56, %cst_29 [1] : vector<8x40xf32> to vector<8xf32>
    %58 = vector.shape_cast %57 : vector<8xf32> to vector<8x1xf32>
    %59 = tpu.bitcast %58 : vector<8x1xf32> -> vector<8x1xi32>
    %60 = vector.broadcast %c63_i32 : i32 to vector<8x1xi32>
    %61 = arith.andi %59, %60 : vector<8x1xi32>
    %62 = vector.broadcast %61 : vector<8x1xi32> to vector<8x40xi32>
    %63 = arith.cmpi eq, %25, %62 : vector<8x40xi32>
    %64 = arith.extui %63 : vector<8x40xi1> to vector<8x40xi32>
    %65 = arith.sitofp %64 : vector<8x40xi32> to vector<8x40xf32>
    %cst_30 = arith.constant dense<0.000000e+00> : vector<8x8xf32>
    %66 = tpu.matmul %65, %32, %cst_30 {dimension_numbers = #tpu.dot_dimension_numbers<[1], [0], [0], [1], [0, 0, 1, 1], [], []>} : vector<8x40xf32>, vector<40x8xf32>, vector<8x8xf32> -> vector<8x8xf32>
    %cst_31 = arith.constant dense<0.000000e+00> : vector<8x16xf32>
    %67 = tpu.matmul %66, %33, %cst_31 {dimension_numbers = #tpu.dot_dimension_numbers<[1], [0], [0], [1], [0, 0, 1, 1], [], []>} : vector<8x8xf32>, vector<8x16xf32>, vector<8x16xf32> -> vector<8x16xf32>
    %68 = arith.addf %31, %67 : vector<8x16xf32>
    %cst_32 = arith.constant 0.000000e+00 : f32
    %69 = vector.broadcast %cst_32 : f32 to vector<8x16xf32>
    %70 = arith.maximumf %68, %69 : vector<8x16xf32>
    %cst_33 = arith.constant dense<0.000000e+00> : vector<8x128xf32>
    %71 = tpu.matmul %70, %34, %cst_33 {dimension_numbers = #tpu.dot_dimension_numbers<[1], [0], [0], [1], [0, 0, 1, 1], [], []>} : vector<8x16xf32>, vector<16x128xf32>, vector<8x128xf32> -> vector<8x128xf32>
    %72 = vector.broadcast %35 : vector<1x128xf32> to vector<8x128xf32>
    %73 = arith.addf %71, %72 : vector<8x128xf32>
    %74 = arith.maximumf %54, %73 : vector<8x128xf32>
    %cst_34 = arith.constant 3.000000e+38 : f32
    %75 = vector.broadcast %cst_34 : f32 to vector<8x40xf32>
    %76 = arith.select %63, %75, %56 : vector<8x40xi1>, vector<8x40xf32>
    %c2_i32 = arith.constant 2 : i32
    %cst_35 = arith.constant dense<0x7F800000> : vector<8xf32>
    %77 = vector.multi_reduction <minimumf>, %76, %cst_35 [1] : vector<8x40xf32> to vector<8xf32>
    %78 = vector.shape_cast %77 : vector<8xf32> to vector<8x1xf32>
    %79 = tpu.bitcast %78 : vector<8x1xf32> -> vector<8x1xi32>
    %80 = vector.broadcast %c63_i32 : i32 to vector<8x1xi32>
    %81 = arith.andi %79, %80 : vector<8x1xi32>
    %82 = vector.broadcast %81 : vector<8x1xi32> to vector<8x40xi32>
    %83 = arith.cmpi eq, %25, %82 : vector<8x40xi32>
    %84 = arith.extui %83 : vector<8x40xi1> to vector<8x40xi32>
    %85 = arith.sitofp %84 : vector<8x40xi32> to vector<8x40xf32>
    %cst_36 = arith.constant dense<0.000000e+00> : vector<8x8xf32>
    %86 = tpu.matmul %85, %32, %cst_36 {dimension_numbers = #tpu.dot_dimension_numbers<[1], [0], [0], [1], [0, 0, 1, 1], [], []>} : vector<8x40xf32>, vector<40x8xf32>, vector<8x8xf32> -> vector<8x8xf32>
    %cst_37 = arith.constant dense<0.000000e+00> : vector<8x16xf32>
    %87 = tpu.matmul %86, %33, %cst_37 {dimension_numbers = #tpu.dot_dimension_numbers<[1], [0], [0], [1], [0, 0, 1, 1], [], []>} : vector<8x8xf32>, vector<8x16xf32>, vector<8x16xf32> -> vector<8x16xf32>
    %88 = arith.addf %31, %87 : vector<8x16xf32>
    %cst_38 = arith.constant 0.000000e+00 : f32
    %89 = vector.broadcast %cst_38 : f32 to vector<8x16xf32>
    %90 = arith.maximumf %88, %89 : vector<8x16xf32>
    %cst_39 = arith.constant dense<0.000000e+00> : vector<8x128xf32>
    %91 = tpu.matmul %90, %34, %cst_39 {dimension_numbers = #tpu.dot_dimension_numbers<[1], [0], [0], [1], [0, 0, 1, 1], [], []>} : vector<8x16xf32>, vector<16x128xf32>, vector<8x128xf32> -> vector<8x128xf32>
    %92 = vector.broadcast %35 : vector<1x128xf32> to vector<8x128xf32>
    %93 = arith.addf %91, %92 : vector<8x128xf32>
    %94 = arith.maximumf %74, %93 : vector<8x128xf32>
    %cst_40 = arith.constant 3.000000e+38 : f32
    %95 = vector.broadcast %cst_40 : f32 to vector<8x40xf32>
    %96 = arith.select %83, %95, %76 : vector<8x40xi1>, vector<8x40xf32>
    %c3_i32 = arith.constant 3 : i32
    %cst_41 = arith.constant dense<0x7F800000> : vector<8xf32>
    %97 = vector.multi_reduction <minimumf>, %96, %cst_41 [1] : vector<8x40xf32> to vector<8xf32>
    %98 = vector.shape_cast %97 : vector<8xf32> to vector<8x1xf32>
    %99 = tpu.bitcast %98 : vector<8x1xf32> -> vector<8x1xi32>
    %100 = vector.broadcast %c63_i32 : i32 to vector<8x1xi32>
    %101 = arith.andi %99, %100 : vector<8x1xi32>
    %102 = vector.broadcast %101 : vector<8x1xi32> to vector<8x40xi32>
    %103 = arith.cmpi eq, %25, %102 : vector<8x40xi32>
    %104 = arith.extui %103 : vector<8x40xi1> to vector<8x40xi32>
    %105 = arith.sitofp %104 : vector<8x40xi32> to vector<8x40xf32>
    %cst_42 = arith.constant dense<0.000000e+00> : vector<8x8xf32>
    %106 = tpu.matmul %105, %32, %cst_42 {dimension_numbers = #tpu.dot_dimension_numbers<[1], [0], [0], [1], [0, 0, 1, 1], [], []>} : vector<8x40xf32>, vector<40x8xf32>, vector<8x8xf32> -> vector<8x8xf32>
    %cst_43 = arith.constant dense<0.000000e+00> : vector<8x16xf32>
    %107 = tpu.matmul %106, %33, %cst_43 {dimension_numbers = #tpu.dot_dimension_numbers<[1], [0], [0], [1], [0, 0, 1, 1], [], []>} : vector<8x8xf32>, vector<8x16xf32>, vector<8x16xf32> -> vector<8x16xf32>
    %108 = arith.addf %31, %107 : vector<8x16xf32>
    %cst_44 = arith.constant 0.000000e+00 : f32
    %109 = vector.broadcast %cst_44 : f32 to vector<8x16xf32>
    %110 = arith.maximumf %108, %109 : vector<8x16xf32>
    %cst_45 = arith.constant dense<0.000000e+00> : vector<8x128xf32>
    %111 = tpu.matmul %110, %34, %cst_45 {dimension_numbers = #tpu.dot_dimension_numbers<[1], [0], [0], [1], [0, 0, 1, 1], [], []>} : vector<8x16xf32>, vector<16x128xf32>, vector<8x128xf32> -> vector<8x128xf32>
    %112 = vector.broadcast %35 : vector<1x128xf32> to vector<8x128xf32>
    %113 = arith.addf %111, %112 : vector<8x128xf32>
    %114 = arith.maximumf %94, %113 : vector<8x128xf32>
    %cst_46 = arith.constant 3.000000e+38 : f32
    %115 = vector.broadcast %cst_46 : f32 to vector<8x40xf32>
    %116 = arith.select %103, %115, %96 : vector<8x40xi1>, vector<8x40xf32>
    %cst_47 = arith.constant 0.000000e+00 : f32
    %117 = vector.broadcast %cst_47 : f32 to vector<8x128xf32>
    %118 = arith.maximumf %114, %117 : vector<8x128xf32>
    %c0_48 = arith.constant 0 : index
    %c0_49 = arith.constant 0 : index
    %119 = vector.load %arg10[%c0_48, %c0_49] : memref<8x128xf32, #tpu.memory_space<vmem>>, vector<8x128xf32>
    tpu.vector_store %arg10[%c0_48, %c0_49], %118 {strides = array<i32>} : memref<8x128xf32, #tpu.memory_space<vmem>>, vector<8x128xf32>,
    return
  }
  func.func @transform_0(%arg0: i32) -> (i32, i32) {
    %c0_i32 = arith.constant 0 : i32
    %c0_i32_0 = arith.constant 0 : i32
    return %arg0, %c0_i32 : i32, i32
  }
  func.func @transform_1(%arg0: i32) -> (i32, i32) {
    %c0_i32 = arith.constant 0 : i32
    %c0_i32_0 = arith.constant 0 : i32
    %c0_i32_1 = arith.constant 0 : i32
    return %c0_i32, %c0_i32_0 : i32, i32
  }
  func.func @transform_2(%arg0: i32) -> (i32, i32) {
    %c0_i32 = arith.constant 0 : i32
    %c0_i32_0 = arith.constant 0 : i32
    %c0_i32_1 = arith.constant 0 : i32
    return %c0_i32, %c0_i32_0 : i32, i32
  }
  func.func @transform_3(%arg0: i32) -> (i32, i32) {
    %c0_i32 = arith.constant 0 : i32
    %c0_i32_0 = arith.constant 0 : i32
    %c0_i32_1 = arith.constant 0 : i32
    return %c0_i32, %c0_i32_0 : i32, i32
  }
  func.func @transform_4(%arg0: i32) -> (i32, i32) {
    %c0_i32 = arith.constant 0 : i32
    %c0_i32_0 = arith.constant 0 : i32
    return %arg0, %c0_i32 : i32, i32
  }
  func.func @transform_5(%arg0: i32) -> (i32, i32) {
    %c0_i32 = arith.constant 0 : i32
    %c0_i32_0 = arith.constant 0 : i32
    return %arg0, %c0_i32 : i32, i32
  }
  func.func @transform_6(%arg0: i32) -> (i32, i32) {
    %c0_i32 = arith.constant 0 : i32
    %c0_i32_0 = arith.constant 0 : i32
    %c0_i32_1 = arith.constant 0 : i32
    return %c0_i32, %c0_i32_0 : i32, i32
  }
  func.func @transform_7(%arg0: i32) -> (i32, i32) {
    %c0_i32 = arith.constant 0 : i32
    %c0_i32_0 = arith.constant 0 : i32
    %c0_i32_1 = arith.constant 0 : i32
    return %c0_i32, %c0_i32_0 : i32, i32
  }
  func.func @transform_8(%arg0: i32) -> (i32, i32) {
    %c0_i32 = arith.constant 0 : i32
    %c0_i32_0 = arith.constant 0 : i32
    %c0_i32_1 = arith.constant 0 : i32
    return %c0_i32, %c0_i32_0 : i32, i32
  }
  func.func @transform_9(%arg0: i32) -> (i32, i32) {
    %c0_i32 = arith.constant 0 : i32
    %c0_i32_0 = arith.constant 0 : i32
    return %arg0, %c0_i32 : i32, i32
  }
}

</mosaic_0001>

<llo_original>
// kernel: tpu_custom_call.1
$region0: #{tpu_custom_call.1}
  #allocation0 [shape = 'u32[]', space=smem, size = 0x4, offset = 0x4, fixed_abs, tag = 'smem constant byte address 0x4 - core index']
  #allocation1 [shape = 'u32[144,128]{1,0:T(1,128)}', space=vmem, size = 0x12000, scoped, tag = 'internal scratch']
  %s0 = inlined_call_operand.vmem [shape: f32[40,8], index: 0, kind: input, shape index: {}]
  %s1 = inlined_call_operand.vmem [shape: f32[8,40], index: 1, kind: input, shape index: {}]
  %s2 = inlined_call_operand.vmem [shape: f32[40,8], index: 2, kind: input, shape index: {}]
  %s3 = inlined_call_operand.vmem [shape: f32[2,40], index: 3, kind: input, shape index: {}]
  %s4 = inlined_call_operand.vmem [shape: f32[40,1], index: 4, kind: input, shape index: {}]
  %s5 = inlined_call_operand.vmem [shape: f32[40,16], index: 5, kind: input, shape index: {}]
  %s6 = inlined_call_operand.vmem [shape: f32[8,16], index: 6, kind: input, shape index: {}]
  %s7 = inlined_call_operand.vmem [shape: f32[16,128], index: 7, kind: input, shape index: {}]
  %s8 = inlined_call_operand.vmem [shape: f32[1,128], index: 8, kind: input, shape index: {}]
  %s9 = inlined_call_operand.hbm [shape: f32[40,128], index: 9, kind: output, shape index: {}]
  %s10 = sld [smem:[#allocation0]]
  $region69: #{tpu_custom_call.1} parent=0
    _
  %s12 = ssub.s32 1, %s10
  %s13 = scalar_select 0, %s12, %s10
  $region1: #{tpu_custom_call.1} parent=0
    #allocation2 [shape = 'u8[8192]{0}', space=vmem, size = 0x2000, scoped, tag = 'output window, operand 0']
    #allocation3 [shape = 's32[2]{0}', space=sflag, size = 0x8, scoped, tag = 'scoped memory for tpu_custom_call.1']
    %14 = vsyncpa [#allocation3], 0
    %s15 = scalar_lea.sflag [#allocation3], 1
    %16 = vsyncpa %s15, 0
    loop: start=0, step=1, limit=7
    $region2: #{tpu_custom_call.1} parent=1 // loop_pre_header
      _
    $region3: #{tpu_custom_call.1} parent=1 // loop_header
      %s18 = sphi 0, %s22
      %p19 = scmp.ge.s32.totalorder %s18, 7
      %s28 = sphi 0, %s30
      %s31 = sphi 0, %s28
      %s32 = sphi 0, %s31
      %s48 = sphi 0, %s32
      %s52 = sphi 0, %s52
      %s54 = sphi 0, %s52
      %s55 = sphi 0, %s54
      %s69 = sphi 0, %s55
      %s73 = sphi 0, %s73
      %s75 = sphi 0, %s73
      %s76 = sphi 0, %s75
      %s90 = sphi 0, %s76
      %s94 = sphi 0, %s94
      %s96 = sphi 0, %s94
      %s97 = sphi 0, %s96
      %s111 = sphi 0, %s97
      %s117 = sphi 0, %s119
      %s120 = sphi 0, %s117
      %s121 = sphi 0, %s120
      %s137 = sphi 0, %s121
      %s143 = sphi 0, %s145
      %s146 = sphi 0, %s143
      %s147 = sphi 0, %s146
      %s163 = sphi 0, %s147
      %s167 = sphi 0, %s167
      %s169 = sphi 0, %s167
      %s170 = sphi 0, %s169
      %s184 = sphi 0, %s170
      %s188 = sphi 0, %s188
      %s190 = sphi 0, %s188
      %s191 = sphi 0, %s190
      %s205 = sphi 0, %s191
      %s209 = sphi 0, %s209
      %s211 = sphi 0, %s209
      %s212 = sphi 0, %s211
      %s226 = sphi 0, %s212
      %s232 = sphi 0, %s234
      %s235 = sphi 0, %s232
      %s236 = sphi 0, %s235
      %s252 = sphi 0, %s236
    $region4: #{tpu_custom_call.1} parent=1 // loop_header_branch
      %21 = sbr.rel (%p19) target = $region8
    $region5: #{tpu_custom_call.1} parent=1 // loop_body
      %s23 = ssub.s32 %s18, 1
      %s24 = ssub.s32 %s18, 2
      %s25 = sadd.s32 %s18, 1
      %s26 = ssub.s32 %s18, %s25
      %p27 = scmp.eq.s32.totalorder %s26, 0
      %s29 = sadd.s32 %s28, 1
      %s30 = scalar_select %p27, %s28, %s29
      %p33 = pneg %p27
      %p34 = scmp.eq.s32.totalorder %s18, 4
      %p35 = por %p33, %p34
      %p36 = scmp.ne.s32.totalorder %s28, %s31
      %p37 = scmp.eq.s32.totalorder %s18, 0
      %p38 = por %p36, %p37
      %p39 = scmp.ne.s32.totalorder %s28, %s31
      %p40 = scmp.eq.s32.totalorder %s23, 4
      %p41 = por %p39, %p40
      %p42 = scmp.ne.s32.totalorder %s31, %s32
      %p43 = scmp.eq.s32.totalorder %s23, 0
      %p44 = por %p42, %p43
      %p45 = scmp.ne.s32.totalorder %s31, %s32
      %p46 = scmp.eq.s32.totalorder %s24, 4
      %p47 = por %p45, %p46
      %p49 = scmp.ne.s32.totalorder %s32, %s48
      %p50 = scmp.eq.s32.totalorder %s24, 0
      %p51 = por %p49, %p50
      %s53 = sadd.s32 %s52, 1
      %p56 = scmp.eq.s32.totalorder %s18, 4
      %p57 = scmp.ne.s32.totalorder %s52, %s54
      %p58 = scmp.eq.s32.totalorder %s18, 0
      %p59 = por %p57, %p58
      %p60 = scmp.ne.s32.totalorder %s52, %s54
      %p61 = scmp.eq.s32.totalorder %s23, 4
      %p62 = por %p60, %p61
      %p63 = scmp.ne.s32.totalorder %s54, %s55
      %p64 = scmp.eq.s32.totalorder %s23, 0
      %p65 = por %p63, %p64
      %p66 = scmp.ne.s32.totalorder %s54, %s55
      %p67 = scmp.eq.s32.totalorder %s24, 4
      %p68 = por %p66, %p67
      %p70 = scmp.ne.s32.totalorder %s55, %s69
      %p71 = scmp.eq.s32.totalorder %s24, 0
      %p72 = por %p70, %p71
      %s74 = sadd.s32 %s73, 1
      %p77 = scmp.eq.s32.totalorder %s18, 4
      %p78 = scmp.ne.s32.totalorder %s73, %s75
      %p79 = scmp.eq.s32.totalorder %s18, 0
      %p80 = por %p78, %p79
      %p81 = scmp.ne.s32.totalorder %s73, %s75
      %p82 = scmp.eq.s32.totalorder %s23, 4
      %p83 = por %p81, %p82
      %p84 = scmp.ne.s32.totalorder %s75, %s76
      %p85 = scmp.eq.s32.totalorder %s23, 0
      %p86 = por %p84, %p85
      %p87 = scmp.ne.s32.totalorder %s75, %s76
      %p88 = scmp.eq.s32.totalorder %s24, 4
      %p89 = por %p87, %p88
      %p91 = scmp.ne.s32.totalorder %s76, %s90
      %p92 = scmp.eq.s32.totalorder %s24, 0
      %p93 = por %p91, %p92
      %s95 = sadd.s32 %s94, 1
      %p98 = scmp.eq.s32.totalorder %s18, 4
      %p99 = scmp.ne.s32.totalorder %s94, %s96
      %p100 = scmp.eq.s32.totalorder %s18, 0
      %p101 = por %p99, %p100
      %p102 = scmp.ne.s32.totalorder %s94, %s96
      %p103 = scmp.eq.s32.totalorder %s23, 4
      %p104 = por %p102, %p103
      %p105 = scmp.ne.s32.totalorder %s96, %s97
      %p106 = scmp.eq.s32.totalorder %s23, 0
      %p107 = por %p105, %p106
      %p108 = scmp.ne.s32.totalorder %s96, %s97
      %p109 = scmp.eq.s32.totalorder %s24, 4
      %p110 = por %p108, %p109
      %p112 = scmp.ne.s32.totalorder %s97, %s111
      %p113 = scmp.eq.s32.totalorder %s24, 0
      %p114 = por %p112, %p113
      %s115 = ssub.s32 %s18, %s25
      %p116 = scmp.eq.s32.totalorder %s115, 0
      %s118 = sadd.s32 %s117, 1
      %s119 = scalar_select %p116, %s117, %s118
      %p122 = pneg %p116
      %p123 = scmp.eq.s32.totalorder %s18, 4
      %p124 = por %p122, %p123
      %p125 = scmp.ne.s32.totalorder %s117, %s120
      %p126 = scmp.eq.s32.totalorder %s18, 0
      %p127 = por %p125, %p126
      %p128 = scmp.ne.s32.totalorder %s117, %s120
      %p129 = scmp.eq.s32.totalorder %s23, 4
      %p130 = por %p128, %p129
      %p131 = scmp.ne.s32.totalorder %s120, %s121
      %p132 = scmp.eq.s32.totalorder %s23, 0
      %p133 = por %p131, %p132
      %p134 = scmp.ne.s32.totalorder %s120, %s121
      %p135 = scmp.eq.s32.totalorder %s24, 4
      %p136 = por %p134, %p135
      %p138 = scmp.ne.s32.totalorder %s121, %s137
      %p139 = scmp.eq.s32.totalorder %s24, 0
      %p140 = por %p138, %p139
      %s141 = ssub.s32 %s18, %s25
      %p142 = scmp.eq.s32.totalorder %s141, 0
      %s144 = sadd.s32 %s143, 1
      %s145 = scalar_select %p142, %s143, %s144
      %p148 = pneg %p142
      %p149 = scmp.eq.s32.totalorder %s18, 4
      %p150 = por %p148, %p149
      %p151 = scmp.ne.s32.totalorder %s143, %s146
      %p152 = scmp.eq.s32.totalorder %s18, 0
      %p153 = por %p151, %p152
      %p154 = scmp.ne.s32.totalorder %s143, %s146
      %p155 = scmp.eq.s32.totalorder %s23, 4
      %p156 = por %p154, %p155
      %p157 = scmp.ne.s32.totalorder %s146, %s147
      %p158 = scmp.eq.s32.totalorder %s23, 0
      %p159 = por %p157, %p158
      %p160 = scmp.ne.s32.totalorder %s146, %s147
      %p161 = scmp.eq.s32.totalorder %s24, 4
      %p162 = por %p160, %p161
      %p164 = scmp.ne.s32.totalorder %s147, %s163
      %p165 = scmp.eq.s32.totalorder %s24, 0
      %p166 = por %p164, %p165
      %s168 = sadd.s32 %s167, 1
      %p171 = scmp.eq.s32.totalorder %s18, 4
      %p172 = scmp.ne.s32.totalorder %s167, %s169
      %p173 = scmp.eq.s32.totalorder %s18, 0
      %p174 = por %p172, %p173
      %p175 = scmp.ne.s32.totalorder %s167, %s169
      %p176 = scmp.eq.s32.totalorder %s23, 4
      %p177 = por %p175, %p176
      %p178 = scmp.ne.s32.totalorder %s169, %s170
      %p179 = scmp.eq.s32.totalorder %s23, 0
      %p180 = por %p178, %p179
      %p181 = scmp.ne.s32.totalorder %s169, %s170
      %p182 = scmp.eq.s32.totalorder %s24, 4
      %p183 = por %p181, %p182
      %p185 = scmp.ne.s32.totalorder %s170, %s184
      %p186 = scmp.eq.s32.totalorder %s24, 0
      %p187 = por %p185, %p186
      %s189 = sadd.s32 %s188, 1
      %p192 = scmp.eq.s32.totalorder %s18, 4
      %p193 = scmp.ne.s32.totalorder %s188, %s190
      %p194 = scmp.eq.s32.totalorder %s18, 0
      %p195 = por %p193, %p194
      %p196 = scmp.ne.s32.totalorder %s188, %s190
      %p197 = scmp.eq.s32.totalorder %s23, 4
      %p198 = por %p196, %p197
      %p199 = scmp.ne.s32.totalorder %s190, %s191
      %p200 = scmp.eq.s32.totalorder %s23, 0
      %p201 = por %p199, %p200
      %p202 = scmp.ne.s32.totalorder %s190, %s191
      %p203 = scmp.eq.s32.totalorder %s24, 4
      %p204 = por %p202, %p203
      %p206 = scmp.ne.s32.totalorder %s191, %s205
      %p207 = scmp.eq.s32.totalorder %s24, 0
      %p208 = por %p206, %p207
      %s210 = sadd.s32 %s209, 1
      %p213 = scmp.eq.s32.totalorder %s18, 4
      %p214 = scmp.ne.s32.totalorder %s209, %s211
      %p215 = scmp.eq.s32.totalorder %s18, 0
      %p216 = por %p214, %p215
      %p217 = scmp.ne.s32.totalorder %s209, %s211
      %p218 = scmp.eq.s32.totalorder %s23, 4
      %p219 = por %p217, %p218
      %p220 = scmp.ne.s32.totalorder %s211, %s212
      %p221 = scmp.eq.s32.totalorder %s23, 0
      %p222 = por %p220, %p221
      %p223 = scmp.ne.s32.totalorder %s211, %s212
      %p224 = scmp.eq.s32.totalorder %s24, 4
      %p225 = por %p223, %p224
      %p227 = scmp.ne.s32.totalorder %s212, %s226
      %p228 = scmp.eq.s32.totalorder %s24, 0
      %p229 = por %p227, %p228
      %s230 = ssub.s32 %s18, %s25
      %p231 = scmp.eq.s32.totalorder %s230, 0
      %s233 = sadd.s32 %s232, 1
      %s234 = scalar_select %p231, %s232, %s233
      %p237 = pneg %p231
      %p238 = scmp.eq.s32.totalorder %s18, 4
      %p239 = por %p237, %p238
      %p240 = scmp.ne.s32.totalorder %s232, %s235
      %p241 = scmp.eq.s32.totalorder %s18, 0
      %p242 = por %p240, %p241
      %p243 = scmp.ne.s32.totalorder %s232, %s235
      %p244 = scmp.eq.s32.totalorder %s23, 4
      %p245 = por %p243, %p244
      %p246 = scmp.ne.s32.totalorder %s235, %s236
      %p247 = scmp.eq.s32.totalorder %s23, 0
      %p248 = por %p246, %p247
      %p249 = scmp.ne.s32.totalorder %s235, %s236
      %p250 = scmp.eq.s32.totalorder %s24, 4
      %p251 = por %p249, %p250
      %p253 = scmp.ne.s32.totalorder %s236, %s252
      %p254 = scmp.eq.s32.totalorder %s24, 0
      %p255 = por %p253, %p254
      %p256 = scmp.le.s32.totalorder 1, %s18
      %p257 = scmp.lt.s32.totalorder %s18, 6
      %p258 = pnand %p256, %p257
      %p259 = pneg %p258
      // Predicated region
      $region9: #{tpu_custom_call.1} parent=5 // pred_check
        _
      $region10: #{tpu_custom_call.1} parent=5 // pred_check_branch
        %261 = sbr.rel (%p258) target = $region12
      $region11: #{tpu_custom_call.1} parent=5 // pred_region
        %s262 = ssub.s32 %s18, 1
        // Predicated region
        $region13: #{tpu_custom_call.1} parent=11 // pred_check
          %p263 = pneg %p65
        $region14: #{tpu_custom_call.1} parent=11 // pred_check_branch
          %265 = sbr.rel (%p263) target = $region16
        $region15: #{tpu_custom_call.1} parent=11 // pred_region
          _
        $region16: #{tpu_custom_call.1} parent=11 // pred_fallthru
          _
        // Predicated region
        $region17: #{tpu_custom_call.1} parent=11 // pred_check
          %p266 = pneg %p86
        $region18: #{tpu_custom_call.1} parent=11 // pred_check_branch
          %268 = sbr.rel (%p266) target = $region20
        $region19: #{tpu_custom_call.1} parent=11 // pred_region
          _
        $region20: #{tpu_custom_call.1} parent=11 // pred_fallthru
          _
        // Predicated region
        $region21: #{tpu_custom_call.1} parent=11 // pred_check
          %p269 = pneg %p107
        $region22: #{tpu_custom_call.1} parent=11 // pred_check_branch
          %271 = sbr.rel (%p269) target = $region24
        $region23: #{tpu_custom_call.1} parent=11 // pred_region
          _
        $region24: #{tpu_custom_call.1} parent=11 // pred_fallthru
          _
        // Predicated region
        $region25: #{tpu_custom_call.1} parent=11 // pred_check
          %p272 = pneg %p180
        $region26: #{tpu_custom_call.1} parent=11 // pred_check_branch
          %274 = sbr.rel (%p272) target = $region28
        $region27: #{tpu_custom_call.1} parent=11 // pred_region
          _
        $region28: #{tpu_custom_call.1} parent=11 // pred_fallthru
          _
        // Predicated region
        $region29: #{tpu_custom_call.1} parent=11 // pred_check
          %p275 = pneg %p201
        $region30: #{tpu_custom_call.1} parent=11 // pred_check_branch
          %277 = sbr.rel (%p275) target = $region32
        $region31: #{tpu_custom_call.1} parent=11 // pred_region
          _
        $region32: #{tpu_custom_call.1} parent=11 // pred_fallthru
          _
        // Predicated region
        $region33: #{tpu_custom_call.1} parent=11 // pred_check
          %p278 = pneg %p222
        $region34: #{tpu_custom_call.1} parent=11 // pred_check_branch
          %280 = sbr.rel (%p278) target = $region36
        $region35: #{tpu_custom_call.1} parent=11 // pred_region
          _
        $region36: #{tpu_custom_call.1} parent=11 // pred_fallthru
          _
      $region12: #{tpu_custom_call.1} parent=5 // pred_fallthru
        _
      %p281 = scmp.lt.s32.totalorder %s18, 5
      // Predicated region
      $region37: #{tpu_custom_call.1} parent=5 // pred_check
        %p282 = pneg %p281
      $region38: #{tpu_custom_call.1} parent=5 // pred_check_branch
        %284 = sbr.rel (%p282) target = $region40
      $region39: #{tpu_custom_call.1} parent=5 // pred_region
        // Predicated region
        $region41: #{tpu_custom_call.1} parent=39 // pred_check
          %p285 = pneg %p38
        $region42: #{tpu_custom_call.1} parent=39 // pred_check_branch
          %287 = sbr.rel (%p285) target = $region44
        $region43: #{tpu_custom_call.1} parent=39 // pred_region
          %p288 = scmp.lt.s32.totalorder %s18, 4
          %s289 = scalar_select %p288, %s18, 4
          %s290 = smul.addr %s289, 8
          %s291 = scalar_lea.vmem %s0, %s290
        $region44: #{tpu_custom_call.1} parent=39 // pred_fallthru
          _
        // Predicated region
        $region45: #{tpu_custom_call.1} parent=39 // pred_check
          %p292 = pneg %p127
        $region46: #{tpu_custom_call.1} parent=39 // pred_check_branch
          %294 = sbr.rel (%p292) target = $region48
        $region47: #{tpu_custom_call.1} parent=39 // pred_region
          %p295 = scmp.lt.s32.totalorder %s18, 4
          %s296 = scalar_select %p295, %s18, 4
          %s297 = smul.addr %s296, 8
          %s298 = scalar_lea.vmem %s4, %s297
        $region48: #{tpu_custom_call.1} parent=39 // pred_fallthru
          _
        // Predicated region
        $region49: #{tpu_custom_call.1} parent=39 // pred_check
          %p299 = pneg %p153
        $region50: #{tpu_custom_call.1} parent=39 // pred_check_branch
          %301 = sbr.rel (%p299) target = $region52
        $region51: #{tpu_custom_call.1} parent=39 // pred_region
          %p302 = scmp.lt.s32.totalorder %s18, 4
          %s303 = scalar_select %p302, %s18, 4
          %s304 = smul.addr %s303, 8
          %s305 = scalar_lea.vmem %s5, %s304
        $region52: #{tpu_custom_call.1} parent=39 // pred_fallthru
          _
      $region40: #{tpu_custom_call.1} parent=5 // pred_fallthru
        _
      %p306 = scmp.le.s32.totalorder 1, %s18
      %p307 = scmp.lt.s32.totalorder %s18, 6
      %p308 = pnand %p306, %p307
      %p309 = pneg %p308
      // Predicated region
      $region53: #{tpu_custom_call.1} parent=5 // pred_check
        _
      $region54: #{tpu_custom_call.1} parent=5 // pred_check_branch
        %311 = sbr.rel (%p308) target = $region56
      $region55: #{tpu_custom_call.1} parent=5 // pred_region
        %s312 = ssub.s32 %s18, 1
        %p313 = scmp.lt.s32.totalorder %s23, 4
        %s314 = scalar_select %p313, %s23, 4
        %s315 = smul.addr %s314, 8
        %s316 = scalar_lea.vmem %s0, %s315
        %p317 = pneg %p44
        %p318 = pneg %p41
        %p319 = pneg %p65
        %p320 = pneg %p62
        %p321 = pneg %p86
        %p322 = pneg %p83
        %p323 = pneg %p107
        %p324 = pneg %p104
        %p325 = scmp.lt.s32.totalorder %s23, 4
        %s326 = scalar_select %p325, %s23, 4
        %s327 = smul.addr %s326, 8
        %s328 = scalar_lea.vmem %s4, %s327
        %p329 = pneg %p133
        %p330 = pneg %p130
        %p331 = scmp.lt.s32.totalorder %s23, 4
        %s332 = scalar_select %p331, %s23, 4
        %s333 = smul.addr %s332, 8
        %s334 = scalar_lea.vmem %s5, %s333
        %p335 = pneg %p159
        %p336 = pneg %p156
        %p337 = pneg %p180
        %p338 = pneg %p177
        %p339 = pneg %p201
        %p340 = pneg %p198
        %p341 = pneg %p222
        %p342 = pneg %p219
        %p343 = pneg %p248
        %p344 = pneg %p245
        %s345 = sand.u32 %s235, 1
        %s346 = scalar_lea.sflag [#allocation3], %s345
        %s347 = sand.u32 %s235, 1
        %s348 = smul.addr %s347, 8
        %s349 = scalar_lea.vmem [#allocation2], %s348
        %p350 = scmp.lt.s32.totalorder %s23, 4
        %s351 = scalar_select %p350, %s23, 4
        %s352 = smul.addr %s351, 8
        %s353 = scalar_lea.vmem %s0, %s352
        %p354 = scmp.lt.s32.totalorder %s23, 4
        %s355 = scalar_select %p354, %s23, 4
        %s356 = smul.addr %s355, 8
        %s357 = scalar_lea.vmem %s4, %s356
        %p358 = scmp.lt.s32.totalorder %s23, 4
        %s359 = scalar_select %p358, %s23, 4
        %s360 = smul.addr %s359, 8
        %s361 = scalar_lea.vmem %s5, %s360
        %v362 = vld [vmem:[%s353] sm:$0xff]
        %v363 = vld [vmem:[%s3] sm:$0x3]
        %v364 = vld [vmem:[%s357] sm:$0xff]
        %v365 = vld [vmem:[%s1] sm:$0xff]
        %vm366 = vcmask 64512
        %v368 = vsel %vm366, %v362, 0
        %370 = vmatprep.subr.mxu0 0.0
        %371 = vmatpush1.msra.mxu0 0.0
        %372 = vmatprep.subr.mxu0 0.0
        %373 = vmatpush1.msra.mxu0 0.0
        %374 = vmatprep.subr.mxu0 0.0
        %375 = vmatpush1.msra.mxu0 0.0
        %376 = vmatprep.subr.mxu0 0.0
        %377 = vmatpush1.msra.mxu0 0.0
        %378 = vmatprep.subr.mxu0 0.0
        %379 = vmatpush1.msra.mxu0 0.0
        %380 = vmatprep.subr.mxu0 0.0
        %381 = vmatpush1.msra.mxu0 0.0
        %382 = vmatprep.subr.mxu0 0.0
        %383 = vmatpush1.msra.mxu0 0.0
        %384 = vmatprep.subr.mxu0 0.0
        %385 = vmatpush1.msra.mxu0 0.0
        %386 = vmatprep.subr.mxu0 0.0
        %387 = vmatpush1.msra.mxu0 0.0
        %388 = vmatprep.subr.mxu0 0.0
        %389 = vmatpush1.msra.mxu0 0.0
        %390 = vmatprep.subr.mxu0 0.0
        %391 = vmatpush1.msra.mxu0 0.0
        %392 = vmatprep.subr.mxu0 0.0
        %393 = vmatpush1.msra.mxu0 0.0
        %394 = vmatprep.subr.mxu0 0.0
        %395 = vmatpush1.msra.mxu0 0.0
        %396 = vmatprep.subr.mxu0 0.0
        %397 = vmatpush1.msra.mxu0 0.0
        %398 = vmatprep.subr.mxu0 0.0
        %399 = vmatpush1.msra.mxu0 0.0
        %400 = vmatprep.subr.mxu0 0.0
        %401 = vmatpush1.msra.mxu0 %v365
        %402 = vmatprep.subr.mxu0 0.0
        %403 = vmatpush2.msra.mxu0 0.0
        %404 = vmatprep.subr.mxu0 0.0
        %405 = vmatpush2.msra.mxu0 0.0
        %406 = vmatprep.subr.mxu0 0.0
        %407 = vmatpush2.msra.mxu0 0.0
        %408 = vmatprep.subr.mxu0 0.0
        %409 = vmatpush2.msra.mxu0 0.0
        %410 = vmatprep.subr.mxu0 0.0
        %411 = vmatpush2.msra.mxu0 0.0
        %412 = vmatprep.subr.mxu0 0.0
        %413 = vmatpush2.msra.mxu0 0.0
        %414 = vmatprep.subr.mxu0 0.0
        %415 = vmatpush2.msra.mxu0 0.0
        %416 = vmatprep.subr.mxu0 0.0
        %417 = vmatpush2.msra.mxu0 0.0
        %418 = vmatprep.subr.mxu0 0.0
        %419 = vmatpush2.msra.mxu0 0.0
        %420 = vmatprep.subr.mxu0 0.0
        %421 = vmatpush2.msra.mxu0 0.0
        %422 = vmatprep.subr.mxu0 0.0
        %423 = vmatpush2.msra.mxu0 0.0
        %424 = vmatprep.subr.mxu0 0.0
        %425 = vmatpush2.msra.mxu0 0.0
        %426 = vmatprep.subr.mxu0 0.0
        %427 = vmatpush2.msra.mxu0 0.0
        %428 = vmatprep.subr.mxu0 0.0
        %429 = vmatpush2.msra.mxu0 0.0
        %430 = vmatprep.subr.mxu0 0.0
        %431 = vmatpush2.msra.mxu0 0.0
        %432 = vmatprep.subr.mxu0 0.0
        %433 = vmatpush2.msra.mxu0 0.0
        %434 = vmatprep.mubr.f32.mxu0 0.0
        %435 = vmatmul.mubr.f32.gmra.mxu0 %v368
        %v436 = vpop.f32.mrf.mxu0
        %v437 = vadd.f32 0.0, %v436
        %v438 = vpop.f32.mrf.mxu0
        %439 = vdwg.mxu0
        %v440 = vmul.f32 %v362, %v362
        %v441 = vsel %vm366, %v440, 0.0
        %442 = vadd.xlane.f32.xlu0 %v441
        %v443 = vpop.xlane.xlu0 %442
        %v444 = vlaneseq
        %v445 = vshrl.u32 %v444, 7
        %v446 = vsub.s32 0, %v445
        %v447 = vrot.slane %v363, %v446
        %v448 = vadd.f32 %v443, %v447
        %v449 = vmul.f32 %v437, 2.0
        %v450 = vsub.f32 %v448, %v449
        %v451 = vadd.f32 %v450, 1.0
        %453 = vset.pattern.permute.xlu0 0
        %454 = vperm.xlu0 %453, %v364
        %v455 = vpop.permute.xlu0 %454
        %v457 = vlaneseq
        %v458 = vshrl.u32 %v457, 7
        %v459 = vsub.s32 1, %v458
        %v460 = vrot.slane %v363, %v459
        %vm461 = vcmp.eq.f32.partialorder %v455, %v460
        %v462 = vmax.f32 %v451, 1.0
        %v463 = vsel %vm461, %v462, 1e+30
        %v464 = vlaneseq
        %v465 = vand.u32 %v464, 127
        %v467 = vand.u32 %v463, 4294967232
        %v468 = vor.u32 %v467, %v465
        %v470 = vld [vmem:[%s361] sm:$0xff]
        %v471 = vld [vmem:[%s2] sm:$0xff]
        %v472 = vld [vmem:[%s2 + $0x8] sm:$0xff]
        %v473 = vld [vmem:[%s2 + $0x10] sm:$0xff]
        %v474 = vld [vmem:[%s2 + $0x18] sm:$0xff]
        %v475 = vld [vmem:[%s2 + $0x20] sm:$0xff]
        %v476 = vld [vmem:[%s6] sm:$0xff]
        %v477 = vld [vmem:[%s7] sm:$0xff]
        %v478 = vld [vmem:[%s7 + $0x8] sm:$0xff]
        %v479 = vld [vmem:[%s8] sm:$0x1]
        %vm480 = vcmask 326656
        %v481 = vsel %vm480, %v468, inf
        %482 = vmin.xlane.f32.xlu0 %v481
        %v483 = vpop.xlane.xlu0 %482
        %v485 = vand.u32 %v483, 63
        %vm486 = vcmp.eq.s32.totalorder %v465, %v485
        %v487 = vsel %vm486, 1, 0
        %v488 = vcvt.s32.f32 %v487
        %v490 = vsel %vm480, %v488, 0
        %492 = vmatprep.subr.mxu0 0.0
        %493 = vmatpush1.msra.mxu0 0.0
        %494 = vmatprep.subr.mxu0 0.0
        %495 = vmatpush1.msra.mxu0 0.0
        %496 = vmatprep.subr.mxu0 0.0
        %497 = vmatpush1.msra.mxu0 0.0
        %498 = vmatprep.subr.mxu0 0.0
        %499 = vmatpush1.msra.mxu0 0.0
        %500 = vmatprep.subr.mxu0 0.0
        %501 = vmatpush1.msra.mxu0 0.0
        %502 = vmatprep.subr.mxu0 0.0
        %503 = vmatpush1.msra.mxu0 0.0
        %504 = vmatprep.subr.mxu0 0.0
        %505 = vmatpush1.msra.mxu0 0.0
        %506 = vmatprep.subr.mxu0 0.0
        %507 = vmatpush1.msra.mxu0 0.0
        %508 = vmatprep.subr.mxu0 0.0
        %509 = vmatpush1.msra.mxu0 0.0
        %510 = vmatprep.subr.mxu0 0.0
        %511 = vmatpush1.msra.mxu0 0.0
        %512 = vmatprep.subr.mxu0 0.0
        %513 = vmatpush1.msra.mxu0 0.0
        %514 = vmatprep.subr.mxu0 0.0
        %515 = vmatpush1.msra.mxu0 %v475
        %516 = vmatprep.subr.mxu0 0.0
        %517 = vmatpush1.msra.mxu0 %v474
        %518 = vmatprep.subr.mxu0 0.0
        %519 = vmatpush1.msra.mxu0 %v473
        %520 = vmatprep.subr.mxu0 0.0
        %521 = vmatpush1.msra.mxu0 %v472
        %522 = vmatprep.subr.mxu0 0.0
        %523 = vmatpush1.msra.mxu0 %v471
        %524 = vmatprep.subr.mxu0 0.0
        %525 = vmatpush2.msra.mxu0 0.0
        %526 = vmatprep.subr.mxu0 0.0
        %527 = vmatpush2.msra.mxu0 0.0
        %528 = vmatprep.subr.mxu0 0.0
        %529 = vmatpush2.msra.mxu0 0.0
        %530 = vmatprep.subr.mxu0 0.0
        %531 = vmatpush2.msra.mxu0 0.0
        %532 = vmatprep.subr.mxu0 0.0
        %533 = vmatpush2.msra.mxu0 0.0
        %534 = vmatprep.subr.mxu0 0.0
        %535 = vmatpush2.msra.mxu0 0.0
        %536 = vmatprep.subr.mxu0 0.0
        %537 = vmatpush2.msra.mxu0 0.0
        %538 = vmatprep.subr.mxu0 0.0
        %539 = vmatpush2.msra.mxu0 0.0
        %540 = vmatprep.subr.mxu0 0.0
        %541 = vmatpush2.msra.mxu0 0.0
        %542 = vmatprep.subr.mxu0 0.0
        %543 = vmatpush2.msra.mxu0 0.0
        %544 = vmatprep.subr.mxu0 0.0
        %545 = vmatpush2.msra.mxu0 0.0
        %546 = vmatprep.subr.mxu0 0.0
        %547 = vmatpush2.msra.mxu0 0.0
        %548 = vmatprep.subr.mxu0 0.0
        %549 = vmatpush2.msra.mxu0 0.0
        %550 = vmatprep.subr.mxu0 0.0
        %551 = vmatpush2.msra.mxu0 0.0
        %552 = vmatprep.subr.mxu0 0.0
        %553 = vmatpush2.msra.mxu0 0.0
        %554 = vmatprep.subr.mxu0 0.0
        %555 = vmatpush2.msra.mxu0 0.0
        %556 = vmatprep.mubr.f32.mxu0 0.0
        %557 = vmatmul.mubr.f32.gmra.mxu0 %v490
        %v558 = vpop.f32.mrf.mxu0
        %v559 = vadd.f32 0.0, %v558
        %v560 = vpop.f32.mrf.mxu0
        %561 = vdwg.mxu0
        %v563 = vsel %vm366, %v559, 0
        %565 = vmatprep.subr.mxu0 0.0
        %566 = vmatpush1.msra.mxu0 0.0
        %567 = vmatprep.subr.mxu0 0.0
        %568 = vmatpush1.msra.mxu0 0.0
        %569 = vmatprep.subr.mxu0 0.0
        %570 = vmatpush1.msra.mxu0 0.0
        %571 = vmatprep.subr.mxu0 0.0
        %572 = vmatpush1.msra.mxu0 0.0
        %573 = vmatprep.subr.mxu0 0.0
        %574 = vmatpush1.msra.mxu0 0.0
        %575 = vmatprep.subr.mxu0 0.0
        %576 = vmatpush1.msra.mxu0 0.0
        %577 = vmatprep.subr.mxu0 0.0
        %578 = vmatpush1.msra.mxu0 0.0
        %579 = vmatprep.subr.mxu0 0.0
        %580 = vmatpush1.msra.mxu0 0.0
        %581 = vmatprep.subr.mxu0 0.0
        %582 = vmatpush1.msra.mxu0 0.0
        %583 = vmatprep.subr.mxu0 0.0
        %584 = vmatpush1.msra.mxu0 0.0
        %585 = vmatprep.subr.mxu0 0.0
        %586 = vmatpush1.msra.mxu0 0.0
        %587 = vmatprep.subr.mxu0 0.0
        %588 = vmatpush1.msra.mxu0 0.0
        %589 = vmatprep.subr.mxu0 0.0
        %590 = vmatpush1.msra.mxu0 0.0
        %591 = vmatprep.subr.mxu0 0.0
        %592 = vmatpush1.msra.mxu0 0.0
        %593 = vmatprep.subr.mxu0 0.0
        %594 = vmatpush1.msra.mxu0 0.0
        %595 = vmatprep.subr.mxu0 0.0
        %596 = vmatpush1.msra.mxu0 %v476
        %597 = vmatprep.subr.mxu0 0.0
        %598 = vmatpush2.msra.mxu0 0.0
        %599 = vmatprep.subr.mxu0 0.0
        %600 = vmatpush2.msra.mxu0 0.0
        %601 = vmatprep.subr.mxu0 0.0
        %602 = vmatpush2.msra.mxu0 0.0
        %603 = vmatprep.subr.mxu0 0.0
        %604 = vmatpush2.msra.mxu0 0.0
        %605 = vmatprep.subr.mxu0 0.0
        %606 = vmatpush2.msra.mxu0 0.0
        %607 = vmatprep.subr.mxu0 0.0
        %608 = vmatpush2.msra.mxu0 0.0
        %609 = vmatprep.subr.mxu0 0.0
        %610 = vmatpush2.msra.mxu0 0.0
        %611 = vmatprep.subr.mxu0 0.0
        %612 = vmatpush2.msra.mxu0 0.0
        %613 = vmatprep.subr.mxu0 0.0
        %614 = vmatpush2.msra.mxu0 0.0
        %615 = vmatprep.subr.mxu0 0.0
        %616 = vmatpush2.msra.mxu0 0.0
        %617 = vmatprep.subr.mxu0 0.0
        %618 = vmatpush2.msra.mxu0 0.0
        %619 = vmatprep.subr.mxu0 0.0
        %620 = vmatpush2.msra.mxu0 0.0
        %621 = vmatprep.subr.mxu0 0.0
        %622 = vmatpush2.msra.mxu0 0.0
        %623 = vmatprep.subr.mxu0 0.0
        %624 = vmatpush2.msra.mxu0 0.0
        %625 = vmatprep.subr.mxu0 0.0
        %626 = vmatpush2.msra.mxu0 0.0
        %627 = vmatprep.subr.mxu0 0.0
        %628 = vmatpush2.msra.mxu0 0.0
        %629 = vmatprep.mubr.f32.mxu0 0.0
        %630 = vmatmul.mubr.f32.gmra.mxu0 %v563
        %v631 = vpop.f32.mrf.mxu0
        %v632 = vadd.f32 0.0, %v631
        %v633 = vpop.f32.mrf.mxu0
        %634 = vdwg.mxu0
        %v635 = vadd.f32 %v470, %v632
        %v636 = vmax.f32 %v635, 0.0
        %v638 = vlaneseq
        %v639 = vshrl.u32 %v638, 7
        %v640 = vsub.s32 0, %v639
        %v641 = vrot.slane %v479, %v640
        %vm643 = vcmask 130048
        %v645 = vsel %vm643, %v636, 0
        %647 = vmatprep.subr.mxu0 0.0
        %648 = vmatpush1.msra.mxu0 0.0
        %649 = vmatprep.subr.mxu0 0.0
        %650 = vmatpush1.msra.mxu0 0.0
        %651 = vmatprep.subr.mxu0 0.0
        %652 = vmatpush1.msra.mxu0 0.0
        %653 = vmatprep.subr.mxu0 0.0
        %654 = vmatpush1.msra.mxu0 0.0
        %655 = vmatprep.subr.mxu0 0.0
        %656 = vmatpush1.msra.mxu0 0.0
        %657 = vmatprep.subr.mxu0 0.0
        %658 = vmatpush1.msra.mxu0 0.0
        %659 = vmatprep.subr.mxu0 0.0
        %660 = vmatpush1.msra.mxu0 0.0
        %661 = vmatprep.subr.mxu0 0.0
        %662 = vmatpush1.msra.mxu0 0.0
        %663 = vmatprep.subr.mxu0 0.0
        %664 = vmatpush1.msra.mxu0 0.0
        %665 = vmatprep.subr.mxu0 0.0
        %666 = vmatpush1.msra.mxu0 0.0
        %667 = vmatprep.subr.mxu0 0.0
        %668 = vmatpush1.msra.mxu0 0.0
        %669 = vmatprep.subr.mxu0 0.0
        %670 = vmatpush1.msra.mxu0 0.0
        %671 = vmatprep.subr.mxu0 0.0
        %672 = vmatpush1.msra.mxu0 0.0
        %673 = vmatprep.subr.mxu0 0.0
        %674 = vmatpush1.msra.mxu0 0.0
        %675 = vmatprep.subr.mxu0 0.0
        %676 = vmatpush1.msra.mxu0 %v478
        %677 = vmatprep.subr.mxu0 0.0
        %678 = vmatpush1.msra.mxu0 %v477
        %679 = vmatprep.subr.mxu0 0.0
        %680 = vmatpush2.msra.mxu0 0.0
        %681 = vmatprep.subr.mxu0 0.0
        %682 = vmatpush2.msra.mxu0 0.0
        %683 = vmatprep.subr.mxu0 0.0
        %684 = vmatpush2.msra.mxu0 0.0
        %685 = vmatprep.subr.mxu0 0.0
        %686 = vmatpush2.msra.mxu0 0.0
        %687 = vmatprep.subr.mxu0 0.0
        %688 = vmatpush2.msra.mxu0 0.0
        %689 = vmatprep.subr.mxu0 0.0
        %690 = vmatpush2.msra.mxu0 0.0
        %691 = vmatprep.subr.mxu0 0.0
        %692 = vmatpush2.msra.mxu0 0.0
        %693 = vmatprep.subr.mxu0 0.0
        %694 = vmatpush2.msra.mxu0 0.0
        %695 = vmatprep.subr.mxu0 0.0
        %696 = vmatpush2.msra.mxu0 0.0
        %697 = vmatprep.subr.mxu0 0.0
        %698 = vmatpush2.msra.mxu0 0.0
        %699 = vmatprep.subr.mxu0 0.0
        %700 = vmatpush2.msra.mxu0 0.0
        %701 = vmatprep.subr.mxu0 0.0
        %702 = vmatpush2.msra.mxu0 0.0
        %703 = vmatprep.subr.mxu0 0.0
        %704 = vmatpush2.msra.mxu0 0.0
        %705 = vmatprep.subr.mxu0 0.0
        %706 = vmatpush2.msra.mxu0 0.0
        %707 = vmatprep.subr.mxu0 0.0
        %708 = vmatpush2.msra.mxu0 0.0
        %709 = vmatprep.subr.mxu0 0.0
        %710 = vmatpush2.msra.mxu0 0.0
        %711 = vmatprep.mubr.f32.mxu0 0.0
        %712 = vmatmul.mubr.f32.gmra.mxu0 %v645
        %v713 = vpop.f32.mrf.mxu0
        %v714 = vadd.f32 %v641, %v713
        %v715 = vpop.f32.mrf.mxu0
        %716 = vdwg.mxu0
        %v717 = vsel %vm486, 3e+38, %v468
        %v718 = vsel %vm480, %v717, inf
        %719 = vmin.xlane.f32.xlu0 %v718
        %v720 = vpop.xlane.xlu0 %719
        %v722 = vand.u32 %v720, 63
        %vm723 = vcmp.eq.s32.totalorder %v465, %v722
        %v724 = vsel %vm723, 1, 0
        %v725 = vcvt.s32.f32 %v724
        %v727 = vsel %vm480, %v725, 0
        %729 = vmatprep.subr.mxu0 0.0
        %730 = vmatpush1.msra.mxu0 0.0
        %731 = vmatprep.subr.mxu0 0.0
        %732 = vmatpush1.msra.mxu0 0.0
        %733 = vmatprep.subr.mxu0 0.0
        %734 = vmatpush1.msra.mxu0 0.0
        %735 = vmatprep.subr.mxu0 0.0
        %736 = vmatpush1.msra.mxu0 0.0
        %737 = vmatprep.subr.mxu0 0.0
        %738 = vmatpush1.msra.mxu0 0.0
        %739 = vmatprep.subr.mxu0 0.0
        %740 = vmatpush1.msra.mxu0 0.0
        %741 = vmatprep.subr.mxu0 0.0
        %742 = vmatpush1.msra.mxu0 0.0
        %743 = vmatprep.subr.mxu0 0.0
        %744 = vmatpush1.msra.mxu0 0.0
        %745 = vmatprep.subr.mxu0 0.0
        %746 = vmatpush1.msra.mxu0 0.0
        %747 = vmatprep.subr.mxu0 0.0
        %748 = vmatpush1.msra.mxu0 0.0
        %749 = vmatprep.subr.mxu0 0.0
        %750 = vmatpush1.msra.mxu0 0.0
        %751 = vmatprep.subr.mxu0 0.0
        %752 = vmatpush1.msra.mxu0 %v475
        %753 = vmatprep.subr.mxu0 0.0
        %754 = vmatpush1.msra.mxu0 %v474
        %755 = vmatprep.subr.mxu0 0.0
        %756 = vmatpush1.msra.mxu0 %v473
        %757 = vmatprep.subr.mxu0 0.0
        %758 = vmatpush1.msra.mxu0 %v472
        %759 = vmatprep.subr.mxu0 0.0
        %760 = vmatpush1.msra.mxu0 %v471
        %761 = vmatprep.subr.mxu0 0.0
        %762 = vmatpush2.msra.mxu0 0.0
        %763 = vmatprep.subr.mxu0 0.0
        %764 = vmatpush2.msra.mxu0 0.0
        %765 = vmatprep.subr.mxu0 0.0
        %766 = vmatpush2.msra.mxu0 0.0
        %767 = vmatprep.subr.mxu0 0.0
        %768 = vmatpush2.msra.mxu0 0.0
        %769 = vmatprep.subr.mxu0 0.0
        %770 = vmatpush2.msra.mxu0 0.0
        %771 = vmatprep.subr.mxu0 0.0
        %772 = vmatpush2.msra.mxu0 0.0
        %773 = vmatprep.subr.mxu0 0.0
        %774 = vmatpush2.msra.mxu0 0.0
        %775 = vmatprep.subr.mxu0 0.0
        %776 = vmatpush2.msra.mxu0 0.0
        %777 = vmatprep.subr.mxu0 0.0
        %778 = vmatpush2.msra.mxu0 0.0
        %779 = vmatprep.subr.mxu0 0.0
        %780 = vmatpush2.msra.mxu0 0.0
        %781 = vmatprep.subr.mxu0 0.0
        %782 = vmatpush2.msra.mxu0 0.0
        %783 = vmatprep.subr.mxu0 0.0
        %784 = vmatpush2.msra.mxu0 0.0
        %785 = vmatprep.subr.mxu0 0.0
        %786 = vmatpush2.msra.mxu0 0.0
        %787 = vmatprep.subr.mxu0 0.0
        %788 = vmatpush2.msra.mxu0 0.0
        %789 = vmatprep.subr.mxu0 0.0
        %790 = vmatpush2.msra.mxu0 0.0
        %791 = vmatprep.subr.mxu0 0.0
        %792 = vmatpush2.msra.mxu0 0.0
        %793 = vmatprep.mubr.f32.mxu0 0.0
        %794 = vmatmul.mubr.f32.gmra.mxu0 %v727
        %v795 = vpop.f32.mrf.mxu0
        %v796 = vadd.f32 0.0, %v795
        %v797 = vpop.f32.mrf.mxu0
        %798 = vdwg.mxu0
        %v800 = vsel %vm366, %v796, 0
        %802 = vmatprep.subr.mxu0 0.0
        %803 = vmatpush1.msra.mxu0 0.0
        %804 = vmatprep.subr.mxu0 0.0
        %805 = vmatpush1.msra.mxu0 0.0
        %806 = vmatprep.subr.mxu0 0.0
        %807 = vmatpush1.msra.mxu0 0.0
        %808 = vmatprep.subr.mxu0 0.0
        %809 = vmatpush1.msra.mxu0 0.0
        %810 = vmatprep.subr.mxu0 0.0
        %811 = vmatpush1.msra.mxu0 0.0
        %812 = vmatprep.subr.mxu0 0.0
        %813 = vmatpush1.msra.mxu0 0.0
        %814 = vmatprep.subr.mxu0 0.0
        %815 = vmatpush1.msra.mxu0 0.0
        %816 = vmatprep.subr.mxu0 0.0
        %817 = vmatpush1.msra.mxu0 0.0
        %818 = vmatprep.subr.mxu0 0.0
        %819 = vmatpush1.msra.mxu0 0.0
        %820 = vmatprep.subr.mxu0 0.0
        %821 = vmatpush1.msra.mxu0 0.0
        %822 = vmatprep.subr.mxu0 0.0
        %823 = vmatpush1.msra.mxu0 0.0
        %824 = vmatprep.subr.mxu0 0.0
        %825 = vmatpush1.msra.mxu0 0.0
        %826 = vmatprep.subr.mxu0 0.0
        %827 = vmatpush1.msra.mxu0 0.0
        %828 = vmatprep.subr.mxu0 0.0
        %829 = vmatpush1.msra.mxu0 0.0
        %830 = vmatprep.subr.mxu0 0.0
        %831 = vmatpush1.msra.mxu0 0.0
        %832 = vmatprep.subr.mxu0 0.0
        %833 = vmatpush1.msra.mxu0 %v476
        %834 = vmatprep.subr.mxu0 0.0
        %835 = vmatpush2.msra.mxu0 0.0
        %836 = vmatprep.subr.mxu0 0.0
        %837 = vmatpush2.msra.mxu0 0.0
        %838 = vmatprep.subr.mxu0 0.0
        %839 = vmatpush2.msra.mxu0 0.0
        %840 = vmatprep.subr.mxu0 0.0
        %841 = vmatpush2.msra.mxu0 0.0
        %842 = vmatprep.subr.mxu0 0.0
        %843 = vmatpush2.msra.mxu0 0.0
        %844 = vmatprep.subr.mxu0 0.0
        %845 = vmatpush2.msra.mxu0 0.0
        %846 = vmatprep.subr.mxu0 0.0
        %847 = vmatpush2.msra.mxu0 0.0
        %848 = vmatprep.subr.mxu0 0.0
        %849 = vmatpush2.msra.mxu0 0.0
        %850 = vmatprep.subr.mxu0 0.0
        %851 = vmatpush2.msra.mxu0 0.0
        %852 = vmatprep.subr.mxu0 0.0
        %853 = vmatpush2.msra.mxu0 0.0
        %854 = vmatprep.subr.mxu0 0.0
        %855 = vmatpush2.msra.mxu0 0.0
        %856 = vmatprep.subr.mxu0 0.0
        %857 = vmatpush2.msra.mxu0 0.0
        %858 = vmatprep.subr.mxu0 0.0
        %859 = vmatpush2.msra.mxu0 0.0
        %860 = vmatprep.subr.mxu0 0.0
        %861 = vmatpush2.msra.mxu0 0.0
        %862 = vmatprep.subr.mxu0 0.0
        %863 = vmatpush2.msra.mxu0 0.0
        %864 = vmatprep.subr.mxu0 0.0
        %865 = vmatpush2.msra.mxu0 0.0
        %866 = vmatprep.mubr.f32.mxu0 0.0
        %867 = vmatmul.mubr.f32.gmra.mxu0 %v800
        %v868 = vpop.f32.mrf.mxu0
        %v869 = vadd.f32 0.0, %v868
        %v870 = vpop.f32.mrf.mxu0
        %871 = vdwg.mxu0
        %v872 = vadd.f32 %v470, %v869
        %v873 = vmax.f32 %v872, 0.0
        %v875 = vsel %vm643, %v873, 0
        %877 = vmatprep.subr.mxu0 0.0
        %878 = vmatpush1.msra.mxu0 0.0
        %879 = vmatprep.subr.mxu0 0.0
        %880 = vmatpush1.msra.mxu0 0.0
        %881 = vmatprep.subr.mxu0 0.0
        %882 = vmatpush1.msra.mxu0 0.0
        %883 = vmatprep.subr.mxu0 0.0
        %884 = vmatpush1.msra.mxu0 0.0
        %885 = vmatprep.subr.mxu0 0.0
        %886 = vmatpush1.msra.mxu0 0.0
        %887 = vmatprep.subr.mxu0 0.0
        %888 = vmatpush1.msra.mxu0 0.0
        %889 = vmatprep.subr.mxu0 0.0
        %890 = vmatpush1.msra.mxu0 0.0
        %891 = vmatprep.subr.mxu0 0.0
        %892 = vmatpush1.msra.mxu0 0.0
        %893 = vmatprep.subr.mxu0 0.0
        %894 = vmatpush1.msra.mxu0 0.0
        %895 = vmatprep.subr.mxu0 0.0
        %896 = vmatpush1.msra.mxu0 0.0
        %897 = vmatprep.subr.mxu0 0.0
        %898 = vmatpush1.msra.mxu0 0.0
        %899 = vmatprep.subr.mxu0 0.0
        %900 = vmatpush1.msra.mxu0 0.0
        %901 = vmatprep.subr.mxu0 0.0
        %902 = vmatpush1.msra.mxu0 0.0
        %903 = vmatprep.subr.mxu0 0.0
        %904 = vmatpush1.msra.mxu0 0.0
        %905 = vmatprep.subr.mxu0 0.0
        %906 = vmatpush1.msra.mxu0 %v478
        %907 = vmatprep.subr.mxu0 0.0
        %908 = vmatpush1.msra.mxu0 %v477
        %909 = vmatprep.subr.mxu0 0.0
        %910 = vmatpush2.msra.mxu0 0.0
        %911 = vmatprep.subr.mxu0 0.0
        %912 = vmatpush2.msra.mxu0 0.0
        %913 = vmatprep.subr.mxu0 0.0
        %914 = vmatpush2.msra.mxu0 0.0
        %915 = vmatprep.subr.mxu0 0.0
        %916 = vmatpush2.msra.mxu0 0.0
        %917 = vmatprep.subr.mxu0 0.0
        %918 = vmatpush2.msra.mxu0 0.0
        %919 = vmatprep.subr.mxu0 0.0
        %920 = vmatpush2.msra.mxu0 0.0
        %921 = vmatprep.subr.mxu0 0.0
        %922 = vmatpush2.msra.mxu0 0.0
        %923 = vmatprep.subr.mxu0 0.0
        %924 = vmatpush2.msra.mxu0 0.0
        %925 = vmatprep.subr.mxu0 0.0
        %926 = vmatpush2.msra.mxu0 0.0
        %927 = vmatprep.subr.mxu0 0.0
        %928 = vmatpush2.msra.mxu0 0.0
        %929 = vmatprep.subr.mxu0 0.0
        %930 = vmatpush2.msra.mxu0 0.0
        %931 = vmatprep.subr.mxu0 0.0
        %932 = vmatpush2.msra.mxu0 0.0
        %933 = vmatprep.subr.mxu0 0.0
        %934 = vmatpush2.msra.mxu0 0.0
        %935 = vmatprep.subr.mxu0 0.0
        %936 = vmatpush2.msra.mxu0 0.0
        %937 = vmatprep.subr.mxu0 0.0
        %938 = vmatpush2.msra.mxu0 0.0
        %939 = vmatprep.subr.mxu0 0.0
        %940 = vmatpush2.msra.mxu0 0.0
        %941 = vmatprep.mubr.f32.mxu0 0.0
        %942 = vmatmul.mubr.f32.gmra.mxu0 %v875
        %v943 = vpop.f32.mrf.mxu0
        %v944 = vadd.f32 %v641, %v943
        %v945 = vpop.f32.mrf.mxu0
        %946 = vdwg.mxu0
        %v947 = vmax.f32 %v714, %v944
        %v948 = vsel %vm723, 3e+38, %v717
        %v949 = vsel %vm480, %v948, inf
        %950 = vmin.xlane.f32.xlu0 %v949
        %v951 = vpop.xlane.xlu0 %950
        %v953 = vand.u32 %v951, 63
        %vm954 = vcmp.eq.s32.totalorder %v465, %v953
        %v955 = vsel %vm954, 1, 0
        %v956 = vcvt.s32.f32 %v955
        %v958 = vsel %vm480, %v956, 0
        %960 = vmatprep.subr.mxu0 0.0
        %961 = vmatpush1.msra.mxu0 0.0
        %962 = vmatprep.subr.mxu0 0.0
        %963 = vmatpush1.msra.mxu0 0.0
        %964 = vmatprep.subr.mxu0 0.0
        %965 = vmatpush1.msra.mxu0 0.0
        %966 = vmatprep.subr.mxu0 0.0
        %967 = vmatpush1.msra.mxu0 0.0
        %968 = vmatprep.subr.mxu0 0.0
        %969 = vmatpush1.msra.mxu0 0.0
        %970 = vmatprep.subr.mxu0 0.0
        %971 = vmatpush1.msra.mxu0 0.0
        %972 = vmatprep.subr.mxu0 0.0
        %973 = vmatpush1.msra.mxu0 0.0
        %974 = vmatprep.subr.mxu0 0.0
        %975 = vmatpush1.msra.mxu0 0.0
        %976 = vmatprep.subr.mxu0 0.0
        %977 = vmatpush1.msra.mxu0 0.0
        %978 = vmatprep.subr.mxu0 0.0
        %979 = vmatpush1.msra.mxu0 0.0
        %980 = vmatprep.subr.mxu0 0.0
        %981 = vmatpush1.msra.mxu0 0.0
        %982 = vmatprep.subr.mxu0 0.0
        %983 = vmatpush1.msra.mxu0 %v475
        %984 = vmatprep.subr.mxu0 0.0
        %985 = vmatpush1.msra.mxu0 %v474
        %986 = vmatprep.subr.mxu0 0.0
        %987 = vmatpush1.msra.mxu0 %v473
        %988 = vmatprep.subr.mxu0 0.0
        %989 = vmatpush1.msra.mxu0 %v472
        %990 = vmatprep.subr.mxu0 0.0
        %991 = vmatpush1.msra.mxu0 %v471
        %992 = vmatprep.subr.mxu0 0.0
        %993 = vmatpush2.msra.mxu0 0.0
        %994 = vmatprep.subr.mxu0 0.0
        %995 = vmatpush2.msra.mxu0 0.0
        %996 = vmatprep.subr.mxu0 0.0
        %997 = vmatpush2.msra.mxu0 0.0
        %998 = vmatprep.subr.mxu0 0.0
        %999 = vmatpush2.msra.mxu0 0.0
        %1000 = vmatprep.subr.mxu0 0.0
        %1001 = vmatpush2.msra.mxu0 0.0
        %1002 = vmatprep.subr.mxu0 0.0
        %1003 = vmatpush2.msra.mxu0 0.0
        %1004 = vmatprep.subr.mxu0 0.0
        %1005 = vmatpush2.msra.mxu0 0.0
        %1006 = vmatprep.subr.mxu0 0.0
        %1007 = vmatpush2.msra.mxu0 0.0
        %1008 = vmatprep.subr.mxu0 0.0
        %1009 = vmatpush2.msra.mxu0 0.0
        %1010 = vmatprep.subr.mxu0 0.0
        %1011 = vmatpush2.msra.mxu0 0.0
        %1012 = vmatprep.subr.mxu0 0.0
        %1013 = vmatpush2.msra.mxu0 0.0
        %1014 = vmatprep.subr.mxu0 0.0
        %1015 = vmatpush2.msra.mxu0 0.0
        %1016 = vmatprep.subr.mxu0 0.0
        %1017 = vmatpush2.msra.mxu0 0.0
        %1018 = vmatprep.subr.mxu0 0.0
        %1019 = vmatpush2.msra.mxu0 0.0
        %1020 = vmatprep.subr.mxu0 0.0
        %1021 = vmatpush2.msra.mxu0 0.0
        %1022 = vmatprep.subr.mxu0 0.0
        %1023 = vmatpush2.msra.mxu0 0.0
        %1024 = vmatprep.mubr.f32.mxu0 0.0
        %1025 = vmatmul.mubr.f32.gmra.mxu0 %v958
        %v1026 = vpop.f32.mrf.mxu0
        %v1027 = vadd.f32 0.0, %v1026
        %v1028 = vpop.f32.mrf.mxu0
        %1029 = vdwg.mxu0
        %v1031 = vsel %vm366, %v1027, 0
        %1033 = vmatprep.subr.mxu0 0.0
        %1034 = vmatpush1.msra.mxu0 0.0
        %1035 = vmatprep.subr.mxu0 0.0
        %1036 = vmatpush1.msra.mxu0 0.0
        %1037 = vmatprep.subr.mxu0 0.0
        %1038 = vmatpush1.msra.mxu0 0.0
        %1039 = vmatprep.subr.mxu0 0.0
        %1040 = vmatpush1.msra.mxu0 0.0
        %1041 = vmatprep.subr.mxu0 0.0
        %1042 = vmatpush1.msra.mxu0 0.0
        %1043 = vmatprep.subr.mxu0 0.0
        %1044 = vmatpush1.msra.mxu0 0.0
        %1045 = vmatprep.subr.mxu0 0.0
        %1046 = vmatpush1.msra.mxu0 0.0
        %1047 = vmatprep.subr.mxu0 0.0
        %1048 = vmatpush1.msra.mxu0 0.0
        %1049 = vmatprep.subr.mxu0 0.0
        %1050 = vmatpush1.msra.mxu0 0.0
        %1051 = vmatprep.subr.mxu0 0.0
        %1052 = vmatpush1.msra.mxu0 0.0
        %1053 = vmatprep.subr.mxu0 0.0
        %1054 = vmatpush1.msra.mxu0 0.0
        %1055 = vmatprep.subr.mxu0 0.0
        %1056 = vmatpush1.msra.mxu0 0.0
        %1057 = vmatprep.subr.mxu0 0.0
        %1058 = vmatpush1.msra.mxu0 0.0
        %1059 = vmatprep.subr.mxu0 0.0
        %1060 = vmatpush1.msra.mxu0 0.0
        %1061 = vmatprep.subr.mxu0 0.0
        %1062 = vmatpush1.msra.mxu0 0.0
        %1063 = vmatprep.subr.mxu0 0.0
        %1064 = vmatpush1.msra.mxu0 %v476
        %1065 = vmatprep.subr.mxu0 0.0
        %1066 = vmatpush2.msra.mxu0 0.0
        %1067 = vmatprep.subr.mxu0 0.0
        %1068 = vmatpush2.msra.mxu0 0.0
        %1069 = vmatprep.subr.mxu0 0.0
        %1070 = vmatpush2.msra.mxu0 0.0
        %1071 = vmatprep.subr.mxu0 0.0
        %1072 = vmatpush2.msra.mxu0 0.0
        %1073 = vmatprep.subr.mxu0 0.0
        %1074 = vmatpush2.msra.mxu0 0.0
        %1075 = vmatprep.subr.mxu0 0.0
        %1076 = vmatpush2.msra.mxu0 0.0
        %1077 = vmatprep.subr.mxu0 0.0
        %1078 = vmatpush2.msra.mxu0 0.0
        %1079 = vmatprep.subr.mxu0 0.0
        %1080 = vmatpush2.msra.mxu0 0.0
        %1081 = vmatprep.subr.mxu0 0.0
        %1082 = vmatpush2.msra.mxu0 0.0
        %1083 = vmatprep.subr.mxu0 0.0
        %1084 = vmatpush2.msra.mxu0 0.0
        %1085 = vmatprep.subr.mxu0 0.0
        %1086 = vmatpush2.msra.mxu0 0.0
        %1087 = vmatprep.subr.mxu0 0.0
        %1088 = vmatpush2.msra.mxu0 0.0
        %1089 = vmatprep.subr.mxu0 0.0
        %1090 = vmatpush2.msra.mxu0 0.0
        %1091 = vmatprep.subr.mxu0 0.0
        %1092 = vmatpush2.msra.mxu0 0.0
        %1093 = vmatprep.subr.mxu0 0.0
        %1094 = vmatpush2.msra.mxu0 0.0
        %1095 = vmatprep.subr.mxu0 0.0
        %1096 = vmatpush2.msra.mxu0 0.0
        %1097 = vmatprep.mubr.f32.mxu0 0.0
        %1098 = vmatmul.mubr.f32.gmra.mxu0 %v1031
        %v1099 = vpop.f32.mrf.mxu0
        %v1100 = vadd.f32 0.0, %v1099
        %v1101 = vpop.f32.mrf.mxu0
        %1102 = vdwg.mxu0
        %v1103 = vadd.f32 %v470, %v1100
        %v1104 = vmax.f32 %v1103, 0.0
        %v1106 = vsel %vm643, %v1104, 0
        %1108 = vmatprep.subr.mxu0 0.0
        %1109 = vmatpush1.msra.mxu0 0.0
        %1110 = vmatprep.subr.mxu0 0.0
        %1111 = vmatpush1.msra.mxu0 0.0
        %1112 = vmatprep.subr.mxu0 0.0
        %1113 = vmatpush1.msra.mxu0 0.0
        %1114 = vmatprep.subr.mxu0 0.0
        %1115 = vmatpush1.msra.mxu0 0.0
        %1116 = vmatprep.subr.mxu0 0.0
        %1117 = vmatpush1.msra.mxu0 0.0
        %1118 = vmatprep.subr.mxu0 0.0
        %1119 = vmatpush1.msra.mxu0 0.0
        %1120 = vmatprep.subr.mxu0 0.0
        %1121 = vmatpush1.msra.mxu0 0.0
        %1122 = vmatprep.subr.mxu0 0.0
        %1123 = vmatpush1.msra.mxu0 0.0
        %1124 = vmatprep.subr.mxu0 0.0
        %1125 = vmatpush1.msra.mxu0 0.0
        %1126 = vmatprep.subr.mxu0 0.0
        %1127 = vmatpush1.msra.mxu0 0.0
        %1128 = vmatprep.subr.mxu0 0.0
        %1129 = vmatpush1.msra.mxu0 0.0
        %1130 = vmatprep.subr.mxu0 0.0
        %1131 = vmatpush1.msra.mxu0 0.0
        %1132 = vmatprep.subr.mxu0 0.0
        %1133 = vmatpush1.msra.mxu0 0.0
        %1134 = vmatprep.subr.mxu0 0.0
        %1135 = vmatpush1.msra.mxu0 0.0
        %1136 = vmatprep.subr.mxu0 0.0
        %1137 = vmatpush1.msra.mxu0 %v478
        %1138 = vmatprep.subr.mxu0 0.0
        %1139 = vmatpush1.msra.mxu0 %v477
        %1140 = vmatprep.subr.mxu0 0.0
        %1141 = vmatpush2.msra.mxu0 0.0
        %1142 = vmatprep.subr.mxu0 0.0
        %1143 = vmatpush2.msra.mxu0 0.0
        %1144 = vmatprep.subr.mxu0 0.0
        %1145 = vmatpush2.msra.mxu0 0.0
        %1146 = vmatprep.subr.mxu0 0.0
        %1147 = vmatpush2.msra.mxu0 0.0
        %1148 = vmatprep.subr.mxu0 0.0
        %1149 = vmatpush2.msra.mxu0 0.0
        %1150 = vmatprep.subr.mxu0 0.0
        %1151 = vmatpush2.msra.mxu0 0.0
        %1152 = vmatprep.subr.mxu0 0.0
        %1153 = vmatpush2.msra.mxu0 0.0
        %1154 = vmatprep.subr.mxu0 0.0
        %1155 = vmatpush2.msra.mxu0 0.0
        %1156 = vmatprep.subr.mxu0 0.0
        %1157 = vmatpush2.msra.mxu0 0.0
        %1158 = vmatprep.subr.mxu0 0.0
        %1159 = vmatpush2.msra.mxu0 0.0
        %1160 = vmatprep.subr.mxu0 0.0
        %1161 = vmatpush2.msra.mxu0 0.0
        %1162 = vmatprep.subr.mxu0 0.0
        %1163 = vmatpush2.msra.mxu0 0.0
        %1164 = vmatprep.subr.mxu0 0.0
        %1165 = vmatpush2.msra.mxu0 0.0
        %1166 = vmatprep.subr.mxu0 0.0
        %1167 = vmatpush2.msra.mxu0 0.0
        %1168 = vmatprep.subr.mxu0 0.0
        %1169 = vmatpush2.msra.mxu0 0.0
        %1170 = vmatprep.subr.mxu0 0.0
        %1171 = vmatpush2.msra.mxu0 0.0
        %1172 = vmatprep.mubr.f32.mxu0 0.0
        %1173 = vmatmul.mubr.f32.gmra.mxu0 %v1106
        %v1174 = vpop.f32.mrf.mxu0
        %v1175 = vadd.f32 %v641, %v1174
        %v1176 = vpop.f32.mrf.mxu0
        %1177 = vdwg.mxu0
        %v1178 = vmax.f32 %v947, %v1175
        %v1179 = vsel %vm954, 3e+38, %v948
        %v1180 = vsel %vm480, %v1179, inf
        %1181 = vmin.xlane.f32.xlu0 %v1180
        %v1182 = vpop.xlane.xlu0 %1181
        %v1184 = vand.u32 %v1182, 63
        %vm1185 = vcmp.eq.s32.totalorder %v465, %v1184
        %v1186 = vsel %vm1185, 1, 0
        %v1187 = vcvt.s32.f32 %v1186
        %v1189 = vsel %vm480, %v1187, 0
        %1191 = vmatprep.subr.mxu0 0.0
        %1192 = vmatpush1.msra.mxu0 0.0
        %1193 = vmatprep.subr.mxu0 0.0
        %1194 = vmatpush1.msra.mxu0 0.0
        %1195 = vmatprep.subr.mxu0 0.0
        %1196 = vmatpush1.msra.mxu0 0.0
        %1197 = vmatprep.subr.mxu0 0.0
        %1198 = vmatpush1.msra.mxu0 0.0
        %1199 = vmatprep.subr.mxu0 0.0
        %1200 = vmatpush1.msra.mxu0 0.0
        %1201 = vmatprep.subr.mxu0 0.0
        %1202 = vmatpush1.msra.mxu0 0.0
        %1203 = vmatprep.subr.mxu0 0.0
        %1204 = vmatpush1.msra.mxu0 0.0
        %1205 = vmatprep.subr.mxu0 0.0
        %1206 = vmatpush1.msra.mxu0 0.0
        %1207 = vmatprep.subr.mxu0 0.0
        %1208 = vmatpush1.msra.mxu0 0.0
        %1209 = vmatprep.subr.mxu0 0.0
        %1210 = vmatpush1.msra.mxu0 0.0
        %1211 = vmatprep.subr.mxu0 0.0
        %1212 = vmatpush1.msra.mxu0 0.0
        %1213 = vmatprep.subr.mxu0 0.0
        %1214 = vmatpush1.msra.mxu0 %v475
        %1215 = vmatprep.subr.mxu0 0.0
        %1216 = vmatpush1.msra.mxu0 %v474
        %1217 = vmatprep.subr.mxu0 0.0
        %1218 = vmatpush1.msra.mxu0 %v473
        %1219 = vmatprep.subr.mxu0 0.0
        %1220 = vmatpush1.msra.mxu0 %v472
        %1221 = vmatprep.subr.mxu0 0.0
        %1222 = vmatpush1.msra.mxu0 %v471
        %1223 = vmatprep.subr.mxu0 0.0
        %1224 = vmatpush2.msra.mxu0 0.0
        %1225 = vmatprep.subr.mxu0 0.0
        %1226 = vmatpush2.msra.mxu0 0.0
        %1227 = vmatprep.subr.mxu0 0.0
        %1228 = vmatpush2.msra.mxu0 0.0
        %1229 = vmatprep.subr.mxu0 0.0
        %1230 = vmatpush2.msra.mxu0 0.0
        %1231 = vmatprep.subr.mxu0 0.0
        %1232 = vmatpush2.msra.mxu0 0.0
        %1233 = vmatprep.subr.mxu0 0.0
        %1234 = vmatpush2.msra.mxu0 0.0
        %1235 = vmatprep.subr.mxu0 0.0
        %1236 = vmatpush2.msra.mxu0 0.0
        %1237 = vmatprep.subr.mxu0 0.0
        %1238 = vmatpush2.msra.mxu0 0.0
        %1239 = vmatprep.subr.mxu0 0.0
        %1240 = vmatpush2.msra.mxu0 0.0
        %1241 = vmatprep.subr.mxu0 0.0
        %1242 = vmatpush2.msra.mxu0 0.0
        %1243 = vmatprep.subr.mxu0 0.0
        %1244 = vmatpush2.msra.mxu0 0.0
        %1245 = vmatprep.subr.mxu0 0.0
        %1246 = vmatpush2.msra.mxu0 0.0
        %1247 = vmatprep.subr.mxu0 0.0
        %1248 = vmatpush2.msra.mxu0 0.0
        %1249 = vmatprep.subr.mxu0 0.0
        %1250 = vmatpush2.msra.mxu0 0.0
        %1251 = vmatprep.subr.mxu0 0.0
        %1252 = vmatpush2.msra.mxu0 0.0
        %1253 = vmatprep.subr.mxu0 0.0
        %1254 = vmatpush2.msra.mxu0 0.0
        %1255 = vmatprep.mubr.f32.mxu0 0.0
        %1256 = vmatmul.mubr.f32.gmra.mxu0 %v1189
        %v1257 = vpop.f32.mrf.mxu0
        %v1258 = vadd.f32 0.0, %v1257
        %v1259 = vpop.f32.mrf.mxu0
        %1260 = vdwg.mxu0
        %v1262 = vsel %vm366, %v1258, 0
        %1264 = vmatprep.subr.mxu0 0.0
        %1265 = vmatpush1.msra.mxu0 0.0
        %1266 = vmatprep.subr.mxu0 0.0
        %1267 = vmatpush1.msra.mxu0 0.0
        %1268 = vmatprep.subr.mxu0 0.0
        %1269 = vmatpush1.msra.mxu0 0.0
        %1270 = vmatprep.subr.mxu0 0.0
        %1271 = vmatpush1.msra.mxu0 0.0
        %1272 = vmatprep.subr.mxu0 0.0
        %1273 = vmatpush1.msra.mxu0 0.0
        %1274 = vmatprep.subr.mxu0 0.0
        %1275 = vmatpush1.msra.mxu0 0.0
        %1276 = vmatprep.subr.mxu0 0.0
        %1277 = vmatpush1.msra.mxu0 0.0
        %1278 = vmatprep.subr.mxu0 0.0
        %1279 = vmatpush1.msra.mxu0 0.0
        %1280 = vmatprep.subr.mxu0 0.0
        %1281 = vmatpush1.msra.mxu0 0.0
        %1282 = vmatprep.subr.mxu0 0.0
        %1283 = vmatpush1.msra.mxu0 0.0
        %1284 = vmatprep.subr.mxu0 0.0
        %1285 = vmatpush1.msra.mxu0 0.0
        %1286 = vmatprep.subr.mxu0 0.0
        %1287 = vmatpush1.msra.mxu0 0.0
        %1288 = vmatprep.subr.mxu0 0.0
        %1289 = vmatpush1.msra.mxu0 0.0
        %1290 = vmatprep.subr.mxu0 0.0
        %1291 = vmatpush1.msra.mxu0 0.0
        %1292 = vmatprep.subr.mxu0 0.0
        %1293 = vmatpush1.msra.mxu0 0.0
        %1294 = vmatprep.subr.mxu0 0.0
        %1295 = vmatpush1.msra.mxu0 %v476
        %1296 = vmatprep.subr.mxu0 0.0
        %1297 = vmatpush2.msra.mxu0 0.0
        %1298 = vmatprep.subr.mxu0 0.0
        %1299 = vmatpush2.msra.mxu0 0.0
        %1300 = vmatprep.subr.mxu0 0.0
        %1301 = vmatpush2.msra.mxu0 0.0
        %1302 = vmatprep.subr.mxu0 0.0
        %1303 = vmatpush2.msra.mxu0 0.0
        %1304 = vmatprep.subr.mxu0 0.0
        %1305 = vmatpush2.msra.mxu0 0.0
        %1306 = vmatprep.subr.mxu0 0.0
        %1307 = vmatpush2.msra.mxu0 0.0
        %1308 = vmatprep.subr.mxu0 0.0
        %1309 = vmatpush2.msra.mxu0 0.0
        %1310 = vmatprep.subr.mxu0 0.0
        %1311 = vmatpush2.msra.mxu0 0.0
        %1312 = vmatprep.subr.mxu0 0.0
        %1313 = vmatpush2.msra.mxu0 0.0
        %1314 = vmatprep.subr.mxu0 0.0
        %1315 = vmatpush2.msra.mxu0 0.0
        %1316 = vmatprep.subr.mxu0 0.0
        %1317 = vmatpush2.msra.mxu0 0.0
        %1318 = vmatprep.subr.mxu0 0.0
        %1319 = vmatpush2.msra.mxu0 0.0
        %1320 = vmatprep.subr.mxu0 0.0
        %1321 = vmatpush2.msra.mxu0 0.0
        %1322 = vmatprep.subr.mxu0 0.0
        %1323 = vmatpush2.msra.mxu0 0.0
        %1324 = vmatprep.subr.mxu0 0.0
        %1325 = vmatpush2.msra.mxu0 0.0
        %1326 = vmatprep.subr.mxu0 0.0
        %1327 = vmatpush2.msra.mxu0 0.0
        %1328 = vmatprep.mubr.f32.mxu0 0.0
        %1329 = vmatmul.mubr.f32.gmra.mxu0 %v1262
        %v1330 = vpop.f32.mrf.mxu0
        %v1331 = vadd.f32 0.0, %v1330
        %v1332 = vpop.f32.mrf.mxu0
        %1333 = vdwg.mxu0
        %v1334 = vadd.f32 %v470, %v1331
        %v1335 = vmax.f32 %v1334, 0.0
        %v1337 = vsel %vm643, %v1335, 0
        %1339 = vmatprep.subr.mxu0 0.0
        %1340 = vmatpush1.msra.mxu0 0.0
        %1341 = vmatprep.subr.mxu0 0.0
        %1342 = vmatpush1.msra.mxu0 0.0
        %1343 = vmatprep.subr.mxu0 0.0
        %1344 = vmatpush1.msra.mxu0 0.0
        %1345 = vmatprep.subr.mxu0 0.0
        %1346 = vmatpush1.msra.mxu0 0.0
        %1347 = vmatprep.subr.mxu0 0.0
        %1348 = vmatpush1.msra.mxu0 0.0
        %1349 = vmatprep.subr.mxu0 0.0
        %1350 = vmatpush1.msra.mxu0 0.0
        %1351 = vmatprep.subr.mxu0 0.0
        %1352 = vmatpush1.msra.mxu0 0.0
        %1353 = vmatprep.subr.mxu0 0.0
        %1354 = vmatpush1.msra.mxu0 0.0
        %1355 = vmatprep.subr.mxu0 0.0
        %1356 = vmatpush1.msra.mxu0 0.0
        %1357 = vmatprep.subr.mxu0 0.0
        %1358 = vmatpush1.msra.mxu0 0.0
        %1359 = vmatprep.subr.mxu0 0.0
        %1360 = vmatpush1.msra.mxu0 0.0
        %1361 = vmatprep.subr.mxu0 0.0
        %1362 = vmatpush1.msra.mxu0 0.0
        %1363 = vmatprep.subr.mxu0 0.0
        %1364 = vmatpush1.msra.mxu0 0.0
        %1365 = vmatprep.subr.mxu0 0.0
        %1366 = vmatpush1.msra.mxu0 0.0
        %1367 = vmatprep.subr.mxu0 0.0
        %1368 = vmatpush1.msra.mxu0 %v478
        %1369 = vmatprep.subr.mxu0 0.0
        %1370 = vmatpush1.msra.mxu0 %v477
        %1371 = vmatprep.subr.mxu0 0.0
        %1372 = vmatpush2.msra.mxu0 0.0
        %1373 = vmatprep.subr.mxu0 0.0
        %1374 = vmatpush2.msra.mxu0 0.0
        %1375 = vmatprep.subr.mxu0 0.0
        %1376 = vmatpush2.msra.mxu0 0.0
        %1377 = vmatprep.subr.mxu0 0.0
        %1378 = vmatpush2.msra.mxu0 0.0
        %1379 = vmatprep.subr.mxu0 0.0
        %1380 = vmatpush2.msra.mxu0 0.0
        %1381 = vmatprep.subr.mxu0 0.0
        %1382 = vmatpush2.msra.mxu0 0.0
        %1383 = vmatprep.subr.mxu0 0.0
        %1384 = vmatpush2.msra.mxu0 0.0
        %1385 = vmatprep.subr.mxu0 0.0
        %1386 = vmatpush2.msra.mxu0 0.0
        %1387 = vmatprep.subr.mxu0 0.0
        %1388 = vmatpush2.msra.mxu0 0.0
        %1389 = vmatprep.subr.mxu0 0.0
        %1390 = vmatpush2.msra.mxu0 0.0
        %1391 = vmatprep.subr.mxu0 0.0
        %1392 = vmatpush2.msra.mxu0 0.0
        %1393 = vmatprep.subr.mxu0 0.0
        %1394 = vmatpush2.msra.mxu0 0.0
        %1395 = vmatprep.subr.mxu0 0.0
        %1396 = vmatpush2.msra.mxu0 0.0
        %1397 = vmatprep.subr.mxu0 0.0
        %1398 = vmatpush2.msra.mxu0 0.0
        %1399 = vmatprep.subr.mxu0 0.0
        %1400 = vmatpush2.msra.mxu0 0.0
        %1401 = vmatprep.subr.mxu0 0.0
        %1402 = vmatpush2.msra.mxu0 0.0
        %1403 = vmatprep.mubr.f32.mxu0 0.0
        %1404 = vmatmul.mubr.f32.gmra.mxu0 %v1337
        %v1405 = vpop.f32.mrf.mxu0
        %v1406 = vadd.f32 %v641, %v1405
        %v1407 = vpop.f32.mrf.mxu0
        %1408 = vdwg.mxu0
        %v1409 = vmax.f32 %v1178, %v1406
        %v1410 = vmax.f32 %v1409, 0.0
        %1411 = vst [vmem:[%s349] sm:$0xff] %v1410
        %s1412 = sand.u32 %s235, 1
        %s1413 = scalar_lea.sflag [#allocation3], %s1412
        %s1414 = sand.u32 %s235, 1
        %s1415 = smul.addr %s1414, 8
        %s1416 = scalar_lea.vmem [#allocation2], %s1415
        // Predicated region
        $region57: #{tpu_custom_call.1} parent=55 // pred_check
          %p1417 = pneg %p245
        $region58: #{tpu_custom_call.1} parent=55 // pred_check_branch
          %1419 = sbr.rel (%p1417) target = $region60
        $region59: #{tpu_custom_call.1} parent=55 // pred_region
          %s1421 = ssub.s32 128, 128
          %1422 = vsyncadd %s1413, %s1421
          %s1423 = smul.addr %s23, 128
          %s1424 = scalar_lea.hbm %s9, %s1423
          %s1426 = sshll.u32 %s1416, 4
          %s1427 = int_to_ptr.vmem [resolvable:$true] %s1426
          %1429 = dma.vmem_to_hbm [thread:$0]  %s1427, 128, %s1424, %s1413
        $region60: #{tpu_custom_call.1} parent=55 // pred_fallthru
          _
      $region56: #{tpu_custom_call.1} parent=5 // pred_fallthru
        _
      %p1430 = scmp.le.s32.totalorder 2, %s18
      // Predicated region
      $region61: #{tpu_custom_call.1} parent=5 // pred_check
        %p1431 = pneg %p1430
      $region62: #{tpu_custom_call.1} parent=5 // pred_check_branch
        %1433 = sbr.rel (%p1431) target = $region64
      $region63: #{tpu_custom_call.1} parent=5 // pred_region
        %s1434 = ssub.s32 %s18, 2
        // Predicated region
        $region65: #{tpu_custom_call.1} parent=63 // pred_check
          %p1435 = pneg %p251
        $region66: #{tpu_custom_call.1} parent=63 // pred_check_branch
          %1437 = sbr.rel (%p1435) target = $region68
        $region67: #{tpu_custom_call.1} parent=63 // pred_region
          %s1438 = sand.u32 %s236, 1
          %s1439 = scalar_lea.sflag [#allocation3], %s1438
          %s1440 = sand.u32 %s236, 1
          %s1441 = smul.addr %s1440, 8
          %s1442 = scalar_lea.vmem [#allocation2], %s1441
          %1443 = dma.done %s1439, 128
        $region68: #{tpu_custom_call.1} parent=63 // pred_fallthru
          _
      $region64: #{tpu_custom_call.1} parent=5 // pred_fallthru
        _
    $region6: #{tpu_custom_call.1} parent=1 // loop_footer
      %s22 = sadd.s32 1, %s18
    $region7: #{tpu_custom_call.1} parent=1 // loop_footer_branch
      %17 = sbr.rel target = $region3
    $region8: #{tpu_custom_call.1} parent=1 // loop_exit
      _
    %1444 = vsyncpa [#allocation3], 1
    %s1445 = scalar_lea.sflag [#allocation3], 1
    %1446 = vsyncpa %s1445, 1

// kernel: tpu_custom_call.1
$region0: #{tpu_custom_call.1}
  #allocation0 [shape = 'u32[]', space=smem, size = 0x4, offset = 0x4, fixed_abs, tag = 'smem constant byte address 0x4 - core index']
  #allocation1 [shape = 'u32[144,128]{1,0:T(1,128)}', space=vmem, size = 0x12000, scoped, tag = 'internal scratch']
  %s0 = inlined_call_operand.vmem [shape: f32[40,8], index: 0, kind: input, shape index: {}]
  %s1 = inlined_call_operand.vmem [shape: f32[8,40], index: 1, kind: input, shape index: {}]
  %s2 = inlined_call_operand.vmem [shape: f32[40,8], index: 2, kind: input, shape index: {}]
  %s3 = inlined_call_operand.vmem [shape: f32[2,40], index: 3, kind: input, shape index: {}]
  %s4 = inlined_call_operand.vmem [shape: f32[40,1], index: 4, kind: input, shape index: {}]
  %s5 = inlined_call_operand.vmem [shape: f32[40,16], index: 5, kind: input, shape index: {}]
  %s6 = inlined_call_operand.vmem [shape: f32[8,16], index: 6, kind: input, shape index: {}]
  %s7 = inlined_call_operand.vmem [shape: f32[16,128], index: 7, kind: input, shape index: {}]
  %s8 = inlined_call_operand.vmem [shape: f32[1,128], index: 8, kind: input, shape index: {}]
  %s9 = inlined_call_operand.hbm [shape: f32[40,128], index: 9, kind: output, shape index: {}]
  %s10 = sld [smem:[#allocation0]]
  $region69: #{tpu_custom_call.1} parent=0
    _
  %s12 = ssub.s32 1, %s10
  %s13 = scalar_select 0, %s12, %s10
  $region1: #{tpu_custom_call.1} parent=0
    #allocation2 [shape = 'u8[8192]{0}', space=vmem, size = 0x2000, scoped, tag = 'output window, operand 0']
    #allocation3 [shape = 's32[2]{0}', space=sflag, size = 0x8, scoped, tag = 'scoped memory for tpu_custom_call.1']
    %14 = vsyncpa [#allocation3], 0
    %s15 = scalar_lea.sflag [#allocation3], 1
    %16 = vsyncpa %s15, 0
    loop: start=0, step=1, limit=7
    $region2: #{tpu_custom_call.1} parent=1 // loop_pre_header
      _
    $region3: #{tpu_custom_call.1} parent=1 // loop_header
      %s18 = sphi 0, %s22
      %p19 = scmp.ge.s32.totalorder %s18, 7
      %s28 = sphi 0, %s30
      %s31 = sphi 0, %s28
      %s32 = sphi 0, %s31
      %s48 = sphi 0, %s32
      %s52 = sphi 0, %s52
      %s54 = sphi 0, %s52
      %s55 = sphi 0, %s54
      %s69 = sphi 0, %s55
      %s73 = sphi 0, %s73
      %s75 = sphi 0, %s73
      %s76 = sphi 0, %s75
      %s90 = sphi 0, %s76
      %s94 = sphi 0, %s94
      %s96 = sphi 0, %s94
      %s97 = sphi 0, %s96
      %s111 = sphi 0, %s97
      %s117 = sphi 0, %s119
      %s120 = sphi 0, %s117
      %s121 = sphi 0, %s120
      %s137 = sphi 0, %s121
      %s143 = sphi 0, %s145
      %s146 = sphi 0, %s143
      %s147 = sphi 0, %s146
      %s163 = sphi 0, %s147
      %s167 = sphi 0, %s167
      %s169 = sphi 0, %s167
      %s170 = sphi 0, %s169
      %s184 = sphi 0, %s170
      %s188 = sphi 0, %s188
      %s190 = sphi 0, %s188
      %s191 = sphi 0, %s190
      %s205 = sphi 0, %s191
      %s209 = sphi 0, %s209
      %s211 = sphi 0, %s209
      %s212 = sphi 0, %s211
      %s226 = sphi 0, %s212
      %s232 = sphi 0, %s234
      %s235 = sphi 0, %s232
      %s236 = sphi 0, %s235
      %s252 = sphi 0, %s236
    $region4: #{tpu_custom_call.1} parent=1 // loop_header_branch
      %21 = sbr.rel (%p19) target = $region8
    $region5: #{tpu_custom_call.1} parent=1 // loop_body
      %s23 = ssub.s32 %s18, 1
      %s24 = ssub.s32 %s18, 2
      %s25 = sadd.s32 %s18, 1
      %s26 = ssub.s32 %s18, %s25
      %p27 = scmp.eq.s32.totalorder %s26, 0
      %s29 = sadd.s32 %s28, 1
      %s30 = scalar_select %p27, %s28, %s29
      %p33 = pneg %p27
      %p34 = scmp.eq.s32.totalorder %s18, 4
      %p35 = por %p33, %p34
      %p36 = scmp.ne.s32.totalorder %s28, %s31
      %p37 = scmp.eq.s32.totalorder %s18, 0
      %p38 = por %p36, %p37
      %p39 = scmp.ne.s32.totalorder %s28, %s31
      %p40 = scmp.eq.s32.totalorder %s23, 4
      %p41 = por %p39, %p40
      %p42 = scmp.ne.s32.totalorder %s31, %s32
      %p43 = scmp.eq.s32.totalorder %s23, 0
      %p44 = por %p42, %p43
      %p45 = scmp.ne.s32.totalorder %s31, %s32
      %p46 = scmp.eq.s32.totalorder %s24, 4
      %p47 = por %p45, %p46
      %p49 = scmp.ne.s32.totalorder %s32, %s48
      %p50 = scmp.eq.s32.totalorder %s24, 0
      %p51 = por %p49, %p50
      %s53 = sadd.s32 %s52, 1
      %p56 = scmp.eq.s32.totalorder %s18, 4
      %p57 = scmp.ne.s32.totalorder %s52, %s54
      %p58 = scmp.eq.s32.totalorder %s18, 0
      %p59 = por %p57, %p58
      %p60 = scmp.ne.s32.totalorder %s52, %s54
      %p61 = scmp.eq.s32.totalorder %s23, 4
      %p62 = por %p60, %p61
      %p63 = scmp.ne.s32.totalorder %s54, %s55
      %p64 = scmp.eq.s32.totalorder %s23, 0
      %p65 = por %p63, %p64
      %p66 = scmp.ne.s32.totalorder %s54, %s55
      %p67 = scmp.eq.s32.totalorder %s24, 4
      %p68 = por %p66, %p67
      %p70 = scmp.ne.s32.totalorder %s55, %s69
      %p71 = scmp.eq.s32.totalorder %s24, 0
      %p72 = por %p70, %p71
      %s74 = sadd.s32 %s73, 1
      %p77 = scmp.eq.s32.totalorder %s18, 4
      %p78 = scmp.ne.s32.totalorder %s73, %s75
      %p79 = scmp.eq.s32.totalorder %s18, 0
      %p80 = por %p78, %p79
      %p81 = scmp.ne.s32.totalorder %s73, %s75
      %p82 = scmp.eq.s32.totalorder %s23, 4
      %p83 = por %p81, %p82
      %p84 = scmp.ne.s32.totalorder %s75, %s76
      %p85 = scmp.eq.s32.totalorder %s23, 0
      %p86 = por %p84, %p85
      %p87 = scmp.ne.s32.totalorder %s75, %s76
      %p88 = scmp.eq.s32.totalorder %s24, 4
      %p89 = por %p87, %p88
      %p91 = scmp.ne.s32.totalorder %s76, %s90
      %p92 = scmp.eq.s32.totalorder %s24, 0
      %p93 = por %p91, %p92
      %s95 = sadd.s32 %s94, 1
      %p98 = scmp.eq.s32.totalorder %s18, 4
      %p99 = scmp.ne.s32.totalorder %s94, %s96
      %p100 = scmp.eq.s32.totalorder %s18, 0
      %p101 = por %p99, %p100
      %p102 = scmp.ne.s32.totalorder %s94, %s96
      %p103 = scmp.eq.s32.totalorder %s23, 4
      %p104 = por %p102, %p103
      %p105 = scmp.ne.s32.totalorder %s96, %s97
      %p106 = scmp.eq.s32.totalorder %s23, 0
      %p107 = por %p105, %p106
      %p108 = scmp.ne.s32.totalorder %s96, %s97
      %p109 = scmp.eq.s32.totalorder %s24, 4
      %p110 = por %p108, %p109
      %p112 = scmp.ne.s32.totalorder %s97, %s111
      %p113 = scmp.eq.s32.totalorder %s24, 0
      %p114 = por %p112, %p113
      %s115 = ssub.s32 %s18, %s25
      %p116 = scmp.eq.s32.totalorder %s115, 0
      %s118 = sadd.s32 %s117, 1
      %s119 = scalar_select %p116, %s117, %s118
      %p122 = pneg %p116
      %p123 = scmp.eq.s32.totalorder %s18, 4
      %p124 = por %p122, %p123
      %p125 = scmp.ne.s32.totalorder %s117, %s120
      %p126 = scmp.eq.s32.totalorder %s18, 0
      %p127 = por %p125, %p126
      %p128 = scmp.ne.s32.totalorder %s117, %s120
      %p129 = scmp.eq.s32.totalorder %s23, 4
      %p130 = por %p128, %p129
      %p131 = scmp.ne.s32.totalorder %s120, %s121
      %p132 = scmp.eq.s32.totalorder %s23, 0
      %p133 = por %p131, %p132
      %p134 = scmp.ne.s32.totalorder %s120, %s121
      %p135 = scmp.eq.s32.totalorder %s24, 4
      %p136 = por %p134, %p135
      %p138 = scmp.ne.s32.totalorder %s121, %s137
      %p139 = scmp.eq.s32.totalorder %s24, 0
      %p140 = por %p138, %p139
      %s141 = ssub.s32 %s18, %s25
      %p142 = scmp.eq.s32.totalorder %s141, 0
      %s144 = sadd.s32 %s143, 1
      %s145 = scalar_select %p142, %s143, %s144
      %p148 = pneg %p142
      %p149 = scmp.eq.s32.totalorder %s18, 4
      %p150 = por %p148, %p149
      %p151 = scmp.ne.s32.totalorder %s143, %s146
      %p152 = scmp.eq.s32.totalorder %s18, 0
      %p153 = por %p151, %p152
      %p154 = scmp.ne.s32.totalorder %s143, %s146
      %p155 = scmp.eq.s32.totalorder %s23, 4
      %p156 = por %p154, %p155
      %p157 = scmp.ne.s32.totalorder %s146, %s147
      %p158 = scmp.eq.s32.totalorder %s23, 0
      %p159 = por %p157, %p158
      %p160 = scmp.ne.s32.totalorder %s146, %s147
      %p161 = scmp.eq.s32.totalorder %s24, 4
      %p162 = por %p160, %p161
      %p164 = scmp.ne.s32.totalorder %s147, %s163
      %p165 = scmp.eq.s32.totalorder %s24, 0
      %p166 = por %p164, %p165
      %s168 = sadd.s32 %s167, 1
      %p171 = scmp.eq.s32.totalorder %s18, 4
      %p172 = scmp.ne.s32.totalorder %s167, %s169
      %p173 = scmp.eq.s32.totalorder %s18, 0
      %p174 = por %p172, %p173
      %p175 = scmp.ne.s32.totalorder %s167, %s169
      %p176 = scmp.eq.s32.totalorder %s23, 4
      %p177 = por %p175, %p176
      %p178 = scmp.ne.s32.totalorder %s169, %s170
      %p179 = scmp.eq.s32.totalorder %s23, 0
      %p180 = por %p178, %p179
      %p181 = scmp.ne.s32.totalorder %s169, %s170
      %p182 = scmp.eq.s32.totalorder %s24, 4
      %p183 = por %p181, %p182
      %p185 = scmp.ne.s32.totalorder %s170, %s184
      %p186 = scmp.eq.s32.totalorder %s24, 0
      %p187 = por %p185, %p186
      %s189 = sadd.s32 %s188, 1
      %p192 = scmp.eq.s32.totalorder %s18, 4
      %p193 = scmp.ne.s32.totalorder %s188, %s190
      %p194 = scmp.eq.s32.totalorder %s18, 0
      %p195 = por %p193, %p194
      %p196 = scmp.ne.s32.totalorder %s188, %s190
      %p197 = scmp.eq.s32.totalorder %s23, 4
      %p198 = por %p196, %p197
      %p199 = scmp.ne.s32.totalorder %s190, %s191
      %p200 = scmp.eq.s32.totalorder %s23, 0
      %p201 = por %p199, %p200
      %p202 = scmp.ne.s32.totalorder %s190, %s191
      %p203 = scmp.eq.s32.totalorder %s24, 4
      %p204 = por %p202, %p203
      %p206 = scmp.ne.s32.totalorder %s191, %s205
      %p207 = scmp.eq.s32.totalorder %s24, 0
      %p208 = por %p206, %p207
      %s210 = sadd.s32 %s209, 1
      %p213 = scmp.eq.s32.totalorder %s18, 4
      %p214 = scmp.ne.s32.totalorder %s209, %s211
      %p215 = scmp.eq.s32.totalorder %s18, 0
      %p216 = por %p214, %p215
      %p217 = scmp.ne.s32.totalorder %s209, %s211
      %p218 = scmp.eq.s32.totalorder %s23, 4
      %p219 = por %p217, %p218
      %p220 = scmp.ne.s32.totalorder %s211, %s212
      %p221 = scmp.eq.s32.totalorder %s23, 0
      %p222 = por %p220, %p221
      %p223 = scmp.ne.s32.totalorder %s211, %s212
      %p224 = scmp.eq.s32.totalorder %s24, 4
      %p225 = por %p223, %p224
      %p227 = scmp.ne.s32.totalorder %s212, %s226
      %p228 = scmp.eq.s32.totalorder %s24, 0
      %p229 = por %p227, %p228
      %s230 = ssub.s32 %s18, %s25
      %p231 = scmp.eq.s32.totalorder %s230, 0
      %s233 = sadd.s32 %s232, 1
      %s234 = scalar_select %p231, %s232, %s233
      %p237 = pneg %p231
      %p238 = scmp.eq.s32.totalorder %s18, 4
      %p239 = por %p237, %p238
      %p240 = scmp.ne.s32.totalorder %s232, %s235
      %p241 = scmp.eq.s32.totalorder %s18, 0
      %p242 = por %p240, %p241
      %p243 = scmp.ne.s32.totalorder %s232, %s235
      %p244 = scmp.eq.s32.totalorder %s23, 4
      %p245 = por %p243, %p244
      %p246 = scmp.ne.s32.totalorder %s235, %s236
      %p247 = scmp.eq.s32.totalorder %s23, 0
      %p248 = por %p246, %p247
      %p249 = scmp.ne.s32.totalorder %s235, %s236
      %p250 = scmp.eq.s32.totalorder %s24, 4
      %p251 = por %p249, %p250
      %p253 = scmp.ne.s32.totalorder %s236, %s252
      %p254 = scmp.eq.s32.totalorder %s24, 0
      %p255 = por %p253, %p254
      %p256 = scmp.le.s32.totalorder 1, %s18
      %p257 = scmp.lt.s32.totalorder %s18, 6
      %p258 = pnand %p256, %p257
      %p259 = pneg %p258
      // Predicated region
      $region9: #{tpu_custom_call.1} parent=5 // pred_check
        _
      $region10: #{tpu_custom_call.1} parent=5 // pred_check_branch
        %261 = sbr.rel (%p258) target = $region12
      $region11: #{tpu_custom_call.1} parent=5 // pred_region
        %s262 = ssub.s32 %s18, 1
        // Predicated region
        $region13: #{tpu_custom_call.1} parent=11 // pred_check
          %p263 = pneg %p65
        $region14: #{tpu_custom_call.1} parent=11 // pred_check_branch
          %265 = sbr.rel (%p263) target = $region16
        $region15: #{tpu_custom_call.1} parent=11 // pred_region
          _
        $region16: #{tpu_custom_call.1} parent=11 // pred_fallthru
          _
        // Predicated region
        $region17: #{tpu_custom_call.1} parent=11 // pred_check
          %p266 = pneg %p86
        $region18: #{tpu_custom_call.1} parent=11 // pred_check_branch
          %268 = sbr.rel (%p266) target = $region20
        $region19: #{tpu_custom_call.1} parent=11 // pred_region
          _
        $region20: #{tpu_custom_call.1} parent=11 // pred_fallthru
          _
        // Predicated region
        $region21: #{tpu_custom_call.1} parent=11 // pred_check
          %p269 = pneg %p107
        $region22: #{tpu_custom_call.1} parent=11 // pred_check_branch
          %271 = sbr.rel (%p269) target = $region24
        $region23: #{tpu_custom_call.1} parent=11 // pred_region
          _
        $region24: #{tpu_custom_call.1} parent=11 // pred_fallthru
          _
        // Predicated region
        $region25: #{tpu_custom_call.1} parent=11 // pred_check
          %p272 = pneg %p180
        $region26: #{tpu_custom_call.1} parent=11 // pred_check_branch
          %274 = sbr.rel (%p272) target = $region28
        $region27: #{tpu_custom_call.1} parent=11 // pred_region
          _
        $region28: #{tpu_custom_call.1} parent=11 // pred_fallthru
          _
        // Predicated region
        $region29: #{tpu_custom_call.1} parent=11 // pred_check
          %p275 = pneg %p201
        $region30: #{tpu_custom_call.1} parent=11 // pred_check_branch
          %277 = sbr.rel (%p275) target = $region32
        $region31: #{tpu_custom_call.1} parent=11 // pred_region
          _
        $region32: #{tpu_custom_call.1} parent=11 // pred_fallthru
          _
        // Predicated region
        $region33: #{tpu_custom_call.1} parent=11 // pred_check
          %p278 = pneg %p222
        $region34: #{tpu_custom_call.1} parent=11 // pred_check_branch
          %280 = sbr.rel (%p278) target = $region36
        $region35: #{tpu_custom_call.1} parent=11 // pred_region
          _
        $region36: #{tpu_custom_call.1} parent=11 // pred_fallthru
          _
      $region12: #{tpu_custom_call.1} parent=5 // pred_fallthru
        _
      %p281 = scmp.lt.s32.totalorder %s18, 5
      // Predicated region
      $region37: #{tpu_custom_call.1} parent=5 // pred_check
        %p282 = pneg %p281
      $region38: #{tpu_custom_call.1} parent=5 // pred_check_branch
        %284 = sbr.rel (%p282) target = $region40
      $region39: #{tpu_custom_call.1} parent=5 // pred_region
        // Predicated region
        $region41: #{tpu_custom_call.1} parent=39 // pred_check
          %p285 = pneg %p38
        $region42: #{tpu_custom_call.1} parent=39 // pred_check_branch
          %287 = sbr.rel (%p285) target = $region44
        $region43: #{tpu_custom_call.1} parent=39 // pred_region
          %p288 = scmp.lt.s32.totalorder %s18, 4
          %s289 = scalar_select %p288, %s18, 4
          %s290 = smul.addr %s289, 8
          %s291 = scalar_lea.vmem %s0, %s290
        $region44: #{tpu_custom_call.1} parent=39 // pred_fallthru
          _
        // Predicated region
        $region45: #{tpu_custom_call.1} parent=39 // pred_check
          %p292 = pneg %p127
        $region46: #{tpu_custom_call.1} parent=39 // pred_check_branch
          %294 = sbr.rel (%p292) target = $region48
        $region47: #{tpu_custom_call.1} parent=39 // pred_region
          %p295 = scmp.lt.s32.totalorder %s18, 4
          %s296 = scalar_select %p295, %s18, 4
          %s297 = smul.addr %s296, 8
          %s298 = scalar_lea.vmem %s4, %s297
        $region48: #{tpu_custom_call.1} parent=39 // pred_fallthru
          _
        // Predicated region
        $region49: #{tpu_custom_call.1} parent=39 // pred_check
          %p299 = pneg %p153
        $region50: #{tpu_custom_call.1} parent=39 // pred_check_branch
          %301 = sbr.rel (%p299) target = $region52
        $region51: #{tpu_custom_call.1} parent=39 // pred_region
          %p302 = scmp.lt.s32.totalorder %s18, 4
          %s303 = scalar_select %p302, %s18, 4
          %s304 = smul.addr %s303, 8
          %s305 = scalar_lea.vmem %s5, %s304
        $region52: #{tpu_custom_call.1} parent=39 // pred_fallthru
          _
      $region40: #{tpu_custom_call.1} parent=5 // pred_fallthru
        _
      %p306 = scmp.le.s32.totalorder 1, %s18
      %p307 = scmp.lt.s32.totalorder %s18, 6
      %p308 = pnand %p306, %p307
      %p309 = pneg %p308
      // Predicated region
      $region53: #{tpu_custom_call.1} parent=5 // pred_check
        _
      $region54: #{tpu_custom_call.1} parent=5 // pred_check_branch
        %311 = sbr.rel (%p308) target = $region56
      $region55: #{tpu_custom_call.1} parent=5 // pred_region
        %s312 = ssub.s32 %s18, 1
        %p313 = scmp.lt.s32.totalorder %s23, 4
        %s314 = scalar_select %p313, %s23, 4
        %s315 = smul.addr %s314, 8
        %s316 = scalar_lea.vmem %s0, %s315
        %p317 = pneg %p44
        %p318 = pneg %p41
        %p319 = pneg %p65
        %p320 = pneg %p62
        %p321 = pneg %p86
        %p322 = pneg %p83
        %p323 = pneg %p107
        %p324 = pneg %p104
        %p325 = scmp.lt.s32.totalorder %s23, 4
        %s326 = scalar_select %p325, %s23, 4
        %s327 = smul.addr %s326, 8
        %s328 = scalar_lea.vmem %s4, %s327
        %p329 = pneg %p133
        %p330 = pneg %p130
        %p331 = scmp.lt.s32.totalorder %s23, 4
        %s332 = scalar_select %p331, %s23, 4
        %s333 = smul.addr %s332, 8
        %s334 = scalar_lea.vmem %s5, %s333
        %p335 = pneg %p159
        %p336 = pneg %p156
        %p337 = pneg %p180
        %p338 = pneg %p177
        %p339 = pneg %p201
        %p340 = pneg %p198
        %p341 = pneg %p222
        %p342 = pneg %p219
        %p343 = pneg %p248
        %p344 = pneg %p245
        %s345 = sand.u32 %s235, 1
        %s346 = scalar_lea.sflag [#allocation3], %s345
        %s347 = sand.u32 %s235, 1
        %s348 = smul.addr %s347, 8
        %s349 = scalar_lea.vmem [#allocation2], %s348
        %p350 = scmp.lt.s32.totalorder %s23, 4
        %s351 = scalar_select %p350, %s23, 4
        %s352 = smul.addr %s351, 8
        %s353 = scalar_lea.vmem %s0, %s352
        %p354 = scmp.lt.s32.totalorder %s23, 4
        %s355 = scalar_select %p354, %s23, 4
        %s356 = smul.addr %s355, 8
        %s357 = scalar_lea.vmem %s4, %s356
        %p358 = scmp.lt.s32.totalorder %s23, 4
        %s359 = scalar_select %p358, %s23, 4
        %s360 = smul.addr %s359, 8
        %s361 = scalar_lea.vmem %s5, %s360
        %v362 = vld [vmem:[%s353] sm:$0xff]
        %v363 = vld [vmem:[%s3] sm:$0x3]
        %v364 = vld [vmem:[%s357] sm:$0xff]
        %v365 = vld [vmem:[%s1] sm:$0xff]
        %vm366 = vcmask 64512
        %v368 = vsel %vm366, %v362, 0
        %370 = vmatprep.subr.mxu0 0.0
        %371 = vmatpush1.msra.mxu0 0.0
        %372 = vmatprep.subr.mxu0 0.0
        %373 = vmatpush1.msra.mxu0 0.0
        %374 = vmatprep.subr.mxu0 0.0
        %375 = vmatpush1.msra.mxu0 0.0
        %376 = vmatprep.subr.mxu0 0.0
        %377 = vmatpush1.msra.mxu0 0.0
        %378 = vmatprep.subr.mxu0 0.0
        %379 = vmatpush1.msra.mxu0 0.0
        %380 = vmatprep.subr.mxu0 0.0
        %381 = vmatpush1.msra.mxu0 0.0
        %382 = vmatprep.subr.mxu0 0.0
        %383 = vmatpush1.msra.mxu0 0.0
        %384 = vmatprep.subr.mxu0 0.0
        %385 = vmatpush1.msra.mxu0 0.0
        %386 = vmatprep.subr.mxu0 0.0
        %387 = vmatpush1.msra.mxu0 0.0
        %388 = vmatprep.subr.mxu0 0.0
        %389 = vmatpush1.msra.mxu0 0.0
        %390 = vmatprep.subr.mxu0 0.0
        %391 = vmatpush1.msra.mxu0 0.0
        %392 = vmatprep.subr.mxu0 0.0
        %393 = vmatpush1.msra.mxu0 0.0
        %394 = vmatprep.subr.mxu0 0.0
        %395 = vmatpush1.msra.mxu0 0.0
        %396 = vmatprep.subr.mxu0 0.0
        %397 = vmatpush1.msra.mxu0 0.0
        %398 = vmatprep.subr.mxu0 0.0
        %399 = vmatpush1.msra.mxu0 0.0
        %400 = vmatprep.subr.mxu0 0.0
        %401 = vmatpush1.msra.mxu0 %v365
        %402 = vmatprep.subr.mxu0 0.0
        %403 = vmatpush2.msra.mxu0 0.0
        %404 = vmatprep.subr.mxu0 0.0
        %405 = vmatpush2.msra.mxu0 0.0
        %406 = vmatprep.subr.mxu0 0.0
        %407 = vmatpush2.msra.mxu0 0.0
        %408 = vmatprep.subr.mxu0 0.0
        %409 = vmatpush2.msra.mxu0 0.0
        %410 = vmatprep.subr.mxu0 0.0
        %411 = vmatpush2.msra.mxu0 0.0
        %412 = vmatprep.subr.mxu0 0.0
        %413 = vmatpush2.msra.mxu0 0.0
        %414 = vmatprep.subr.mxu0 0.0
        %415 = vmatpush2.msra.mxu0 0.0
        %416 = vmatprep.subr.mxu0 0.0
        %417 = vmatpush2.msra.mxu0 0.0
        %418 = vmatprep.subr.mxu0 0.0
        %419 = vmatpush2.msra.mxu0 0.0
        %420 = vmatprep.subr.mxu0 0.0
        %421 = vmatpush2.msra.mxu0 0.0
        %422 = vmatprep.subr.mxu0 0.0
        %423 = vmatpush2.msra.mxu0 0.0
        %424 = vmatprep.subr.mxu0 0.0
        %425 = vmatpush2.msra.mxu0 0.0
        %426 = vmatprep.subr.mxu0 0.0
        %427 = vmatpush2.msra.mxu0 0.0
        %428 = vmatprep.subr.mxu0 0.0
        %429 = vmatpush2.msra.mxu0 0.0
        %430 = vmatprep.subr.mxu0 0.0
        %431 = vmatpush2.msra.mxu0 0.0
        %432 = vmatprep.subr.mxu0 0.0
        %433 = vmatpush2.msra.mxu0 0.0
        %434 = vmatprep.mubr.f32.mxu0 0.0
        %435 = vmatmul.mubr.f32.gmra.mxu0 %v368
        %v436 = vpop.f32.mrf.mxu0
        %v437 = vadd.f32 0.0, %v436
        %v438 = vpop.f32.mrf.mxu0
        %439 = vdwg.mxu0
        %v440 = vmul.f32 %v362, %v362
        %v441 = vsel %vm366, %v440, 0.0
        %442 = vadd.xlane.f32.xlu0 %v441
        %v443 = vpop.xlane.xlu0 %442
        %v444 = vlaneseq
        %v445 = vshrl.u32 %v444, 7
        %v446 = vsub.s32 0, %v445
        %v447 = vrot.slane %v363, %v446
        %v448 = vadd.f32 %v443, %v447
        %v449 = vmul.f32 %v437, 2.0
        %v450 = vsub.f32 %v448, %v449
        %v451 = vadd.f32 %v450, 1.0
        %453 = vset.pattern.permute.xlu0 0
        %454 = vperm.xlu0 %453, %v364
        %v455 = vpop.permute.xlu0 %454
        %v457 = vlaneseq
        %v458 = vshrl.u32 %v457, 7
        %v459 = vsub.s32 1, %v458
        %v460 = vrot.slane %v363, %v459
        %vm461 = vcmp.eq.f32.partialorder %v455, %v460
        %v462 = vmax.f32 %v451, 1.0
        %v463 = vsel %vm461, %v462, 1e+30
        %v464 = vlaneseq
        %v465 = vand.u32 %v464, 127
        %v467 = vand.u32 %v463, 4294967232
        %v468 = vor.u32 %v467, %v465
        %v470 = vld [vmem:[%s361] sm:$0xff]
        %v471 = vld [vmem:[%s2] sm:$0xff]
        %v472 = vld [vmem:[%s2 + $0x8] sm:$0xff]
        %v473 = vld [vmem:[%s2 + $0x10] sm:$0xff]
        %v474 = vld [vmem:[%s2 + $0x18] sm:$0xff]
        %v475 = vld [vmem:[%s2 + $0x20] sm:$0xff]
        %v476 = vld [vmem:[%s6] sm:$0xff]
        %v477 = vld [vmem:[%s7] sm:$0xff]
        %v478 = vld [vmem:[%s7 + $0x8] sm:$0xff]
        %v479 = vld [vmem:[%s8] sm:$0x1]
        %vm480 = vcmask 326656
        %v481 = vsel %vm480, %v468, inf
        %482 = vmin.xlane.f32.xlu0 %v481
        %v483 = vpop.xlane.xlu0 %482
        %v485 = vand.u32 %v483, 63
        %vm486 = vcmp.eq.s32.totalorder %v465, %v485
        %v487 = vsel %vm486, 1, 0
        %v488 = vcvt.s32.f32 %v487
        %v490 = vsel %vm480, %v488, 0
        %492 = vmatprep.subr.mxu0 0.0
        %493 = vmatpush1.msra.mxu0 0.0
        %494 = vmatprep.subr.mxu0 0.0
        %495 = vmatpush1.msra.mxu0 0.0
        %496 = vmatprep.subr.mxu0 0.0
        %497 = vmatpush1.msra.mxu0 0.0
        %498 = vmatprep.subr.mxu0 0.0
        %499 = vmatpush1.msra.mxu0 0.0
        %500 = vmatprep.subr.mxu0 0.0
        %501 = vmatpush1.msra.mxu0 0.0
        %502 = vmatprep.subr.mxu0 0.0
        %503 = vmatpush1.msra.mxu0 0.0
        %504 = vmatprep.subr.mxu0 0.0
        %505 = vmatpush1.msra.mxu0 0.0
        %506 = vmatprep.subr.mxu0 0.0
        %507 = vmatpush1.msra.mxu0 0.0
        %508 = vmatprep.subr.mxu0 0.0
        %509 = vmatpush1.msra.mxu0 0.0
        %510 = vmatprep.subr.mxu0 0.0
        %511 = vmatpush1.msra.mxu0 0.0
        %512 = vmatprep.subr.mxu0 0.0
        %513 = vmatpush1.msra.mxu0 0.0
        %514 = vmatprep.subr.mxu0 0.0
        %515 = vmatpush1.msra.mxu0 %v475
        %516 = vmatprep.subr.mxu0 0.0
        %517 = vmatpush1.msra.mxu0 %v474
        %518 = vmatprep.subr.mxu0 0.0
        %519 = vmatpush1.msra.mxu0 %v473
        %520 = vmatprep.subr.mxu0 0.0
        %521 = vmatpush1.msra.mxu0 %v472
        %522 = vmatprep.subr.mxu0 0.0
        %523 = vmatpush1.msra.mxu0 %v471
        %524 = vmatprep.subr.mxu0 0.0
        %525 = vmatpush2.msra.mxu0 0.0
        %526 = vmatprep.subr.mxu0 0.0
        %527 = vmatpush2.msra.mxu0 0.0
        %528 = vmatprep.subr.mxu0 0.0
        %529 = vmatpush2.msra.mxu0 0.0
        %530 = vmatprep.subr.mxu0 0.0
        %531 = vmatpush2.msra.mxu0 0.0
        %532 = vmatprep.subr.mxu0 0.0
        %533 = vmatpush2.msra.mxu0 0.0
        %534 = vmatprep.subr.mxu0 0.0
        %535 = vmatpush2.msra.mxu0 0.0
        %536 = vmatprep.subr.mxu0 0.0
        %537 = vmatpush2.msra.mxu0 0.0
        %538 = vmatprep.subr.mxu0 0.0
        %539 = vmatpush2.msra.mxu0 0.0
        %540 = vmatprep.subr.mxu0 0.0
        %541 = vmatpush2.msra.mxu0 0.0
        %542 = vmatprep.subr.mxu0 0.0
        %543 = vmatpush2.msra.mxu0 0.0
        %544 = vmatprep.subr.mxu0 0.0
        %545 = vmatpush2.msra.mxu0 0.0
        %546 = vmatprep.subr.mxu0 0.0
        %547 = vmatpush2.msra.mxu0 0.0
        %548 = vmatprep.subr.mxu0 0.0
        %549 = vmatpush2.msra.mxu0 0.0
        %550 = vmatprep.subr.mxu0 0.0
        %551 = vmatpush2.msra.mxu0 0.0
        %552 = vmatprep.subr.mxu0 0.0
        %553 = vmatpush2.msra.mxu0 0.0
        %554 = vmatprep.subr.mxu0 0.0
        %555 = vmatpush2.msra.mxu0 0.0
        %556 = vmatprep.mubr.f32.mxu0 0.0
        %557 = vmatmul.mubr.f32.gmra.mxu0 %v490
        %v558 = vpop.f32.mrf.mxu0
        %v559 = vadd.f32 0.0, %v558
        %v560 = vpop.f32.mrf.mxu0
        %561 = vdwg.mxu0
        %v563 = vsel %vm366, %v559, 0
        %565 = vmatprep.subr.mxu0 0.0
        %566 = vmatpush1.msra.mxu0 0.0
        %567 = vmatprep.subr.mxu0 0.0
        %568 = vmatpush1.msra.mxu0 0.0
        %569 = vmatprep.subr.mxu0 0.0
        %570 = vmatpush1.msra.mxu0 0.0
        %571 = vmatprep.subr.mxu0 0.0
        %572 = vmatpush1.msra.mxu0 0.0
        %573 = vmatprep.subr.mxu0 0.0
        %574 = vmatpush1.msra.mxu0 0.0
        %575 = vmatprep.subr.mxu0 0.0
        %576 = vmatpush1.msra.mxu0 0.0
        %577 = vmatprep.subr.mxu0 0.0
        %578 = vmatpush1.msra.mxu0 0.0
        %579 = vmatprep.subr.mxu0 0.0
        %580 = vmatpush1.msra.mxu0 0.0
        %581 = vmatprep.subr.mxu0 0.0
        %582 = vmatpush1.msra.mxu0 0.0
        %583 = vmatprep.subr.mxu0 0.0
        %584 = vmatpush1.msra.mxu0 0.0
        %585 = vmatprep.subr.mxu0 0.0
        %586 = vmatpush1.msra.mxu0 0.0
        %587 = vmatprep.subr.mxu0 0.0
        %588 = vmatpush1.msra.mxu0 0.0
        %589 = vmatprep.subr.mxu0 0.0
        %590 = vmatpush1.msra.mxu0 0.0
        %591 = vmatprep.subr.mxu0 0.0
        %592 = vmatpush1.msra.mxu0 0.0
        %593 = vmatprep.subr.mxu0 0.0
        %594 = vmatpush1.msra.mxu0 0.0
        %595 = vmatprep.subr.mxu0 0.0
        %596 = vmatpush1.msra.mxu0 %v476
        %597 = vmatprep.subr.mxu0 0.0
        %598 = vmatpush2.msra.mxu0 0.0
        %599 = vmatprep.subr.mxu0 0.0
        %600 = vmatpush2.msra.mxu0 0.0
        %601 = vmatprep.subr.mxu0 0.0
        %602 = vmatpush2.msra.mxu0 0.0
        %603 = vmatprep.subr.mxu0 0.0
        %604 = vmatpush2.msra.mxu0 0.0
        %605 = vmatprep.subr.mxu0 0.0
        %606 = vmatpush2.msra.mxu0 0.0
        %607 = vmatprep.subr.mxu0 0.0
        %608 = vmatpush2.msra.mxu0 0.0
        %609 = vmatprep.subr.mxu0 0.0
        %610 = vmatpush2.msra.mxu0 0.0
        %611 = vmatprep.subr.mxu0 0.0
        %612 = vmatpush2.msra.mxu0 0.0
        %613 = vmatprep.subr.mxu0 0.0
        %614 = vmatpush2.msra.mxu0 0.0
        %615 = vmatprep.subr.mxu0 0.0
        %616 = vmatpush2.msra.mxu0 0.0
        %617 = vmatprep.subr.mxu0 0.0
        %618 = vmatpush2.msra.mxu0 0.0
        %619 = vmatprep.subr.mxu0 0.0
        %620 = vmatpush2.msra.mxu0 0.0
        %621 = vmatprep.subr.mxu0 0.0
        %622 = vmatpush2.msra.mxu0 0.0
        %623 = vmatprep.subr.mxu0 0.0
        %624 = vmatpush2.msra.mxu0 0.0
        %625 = vmatprep.subr.mxu0 0.0
        %626 = vmatpush2.msra.mxu0 0.0
        %627 = vmatprep.subr.mxu0 0.0
        %628 = vmatpush2.msra.mxu0 0.0
        %629 = vmatprep.mubr.f32.mxu0 0.0
        %630 = vmatmul.mubr.f32.gmra.mxu0 %v563
        %v631 = vpop.f32.mrf.mxu0
        %v632 = vadd.f32 0.0, %v631
        %v633 = vpop.f32.mrf.mxu0
        %634 = vdwg.mxu0
        %v635 = vadd.f32 %v470, %v632
        %v636 = vmax.f32 %v635, 0.0
        %v638 = vlaneseq
        %v639 = vshrl.u32 %v638, 7
        %v640 = vsub.s32 0, %v639
        %v641 = vrot.slane %v479, %v640
        %vm643 = vcmask 130048
        %v645 = vsel %vm643, %v636, 0
        %647 = vmatprep.subr.mxu0 0.0
        %648 = vmatpush1.msra.mxu0 0.0
        %649 = vmatprep.subr.mxu0 0.0
        %650 = vmatpush1.msra.mxu0 0.0
        %651 = vmatprep.subr.mxu0 0.0
        %652 = vmatpush1.msra.mxu0 0.0
        %653 = vmatprep.subr.mxu0 0.0
        %654 = vmatpush1.msra.mxu0 0.0
        %655 = vmatprep.subr.mxu0 0.0
        %656 = vmatpush1.msra.mxu0 0.0
        %657 = vmatprep.subr.mxu0 0.0
        %658 = vmatpush1.msra.mxu0 0.0
        %659 = vmatprep.subr.mxu0 0.0
        %660 = vmatpush1.msra.mxu0 0.0
        %661 = vmatprep.subr.mxu0 0.0
        %662 = vmatpush1.msra.mxu0 0.0
        %663 = vmatprep.subr.mxu0 0.0
        %664 = vmatpush1.msra.mxu0 0.0
        %665 = vmatprep.subr.mxu0 0.0
        %666 = vmatpush1.msra.mxu0 0.0
        %667 = vmatprep.subr.mxu0 0.0
        %668 = vmatpush1.msra.mxu0 0.0
        %669 = vmatprep.subr.mxu0 0.0
        %670 = vmatpush1.msra.mxu0 0.0
        %671 = vmatprep.subr.mxu0 0.0
        %672 = vmatpush1.msra.mxu0 0.0
        %673 = vmatprep.subr.mxu0 0.0
        %674 = vmatpush1.msra.mxu0 0.0
        %675 = vmatprep.subr.mxu0 0.0
        %676 = vmatpush1.msra.mxu0 %v478
        %677 = vmatprep.subr.mxu0 0.0
        %678 = vmatpush1.msra.mxu0 %v477
        %679 = vmatprep.subr.mxu0 0.0
        %680 = vmatpush2.msra.mxu0 0.0
        %681 = vmatprep.subr.mxu0 0.0
        %682 = vmatpush2.msra.mxu0 0.0
        %683 = vmatprep.subr.mxu0 0.0
        %684 = vmatpush2.msra.mxu0 0.0
        %685 = vmatprep.subr.mxu0 0.0
        %686 = vmatpush2.msra.mxu0 0.0
        %687 = vmatprep.subr.mxu0 0.0
        %688 = vmatpush2.msra.mxu0 0.0
        %689 = vmatprep.subr.mxu0 0.0
        %690 = vmatpush2.msra.mxu0 0.0
        %691 = vmatprep.subr.mxu0 0.0
        %692 = vmatpush2.msra.mxu0 0.0
        %693 = vmatprep.subr.mxu0 0.0
        %694 = vmatpush2.msra.mxu0 0.0
        %695 = vmatprep.subr.mxu0 0.0
        %696 = vmatpush2.msra.mxu0 0.0
        %697 = vmatprep.subr.mxu0 0.0
        %698 = vmatpush2.msra.mxu0 0.0
        %699 = vmatprep.subr.mxu0 0.0
        %700 = vmatpush2.msra.mxu0 0.0
        %701 = vmatprep.subr.mxu0 0.0
        %702 = vmatpush2.msra.mxu0 0.0
        %703 = vmatprep.subr.mxu0 0.0
        %704 = vmatpush2.msra.mxu0 0.0
        %705 = vmatprep.subr.mxu0 0.0
        %706 = vmatpush2.msra.mxu0 0.0
        %707 = vmatprep.subr.mxu0 0.0
        %708 = vmatpush2.msra.mxu0 0.0
        %709 = vmatprep.subr.mxu0 0.0
        %710 = vmatpush2.msra.mxu0 0.0
        %711 = vmatprep.mubr.f32.mxu0 0.0
        %712 = vmatmul.mubr.f32.gmra.mxu0 %v645
        %v713 = vpop.f32.mrf.mxu0
        %v714 = vadd.f32 %v641, %v713
        %v715 = vpop.f32.mrf.mxu0
        %716 = vdwg.mxu0
        %v717 = vsel %vm486, 3e+38, %v468
        %v718 = vsel %vm480, %v717, inf
        %719 = vmin.xlane.f32.xlu0 %v718
        %v720 = vpop.xlane.xlu0 %719
        %v722 = vand.u32 %v720, 63
        %vm723 = vcmp.eq.s32.totalorder %v465, %v722
        %v724 = vsel %vm723, 1, 0
        %v725 = vcvt.s32.f32 %v724
        %v727 = vsel %vm480, %v725, 0
        %729 = vmatprep.subr.mxu0 0.0
        %730 = vmatpush1.msra.mxu0 0.0
        %731 = vmatprep.subr.mxu0 0.0
        %732 = vmatpush1.msra.mxu0 0.0
        %733 = vmatprep.subr.mxu0 0.0
        %734 = vmatpush1.msra.mxu0 0.0
        %735 = vmatprep.subr.mxu0 0.0
        %736 = vmatpush1.msra.mxu0 0.0
        %737 = vmatprep.subr.mxu0 0.0
        %738 = vmatpush1.msra.mxu0 0.0
        %739 = vmatprep.subr.mxu0 0.0
        %740 = vmatpush1.msra.mxu0 0.0
        %741 = vmatprep.subr.mxu0 0.0
        %742 = vmatpush1.msra.mxu0 0.0
        %743 = vmatprep.subr.mxu0 0.0
        %744 = vmatpush1.msra.mxu0 0.0
        %745 = vmatprep.subr.mxu0 0.0
        %746 = vmatpush1.msra.mxu0 0.0
        %747 = vmatprep.subr.mxu0 0.0
        %748 = vmatpush1.msra.mxu0 0.0
        %749 = vmatprep.subr.mxu0 0.0
        %750 = vmatpush1.msra.mxu0 0.0
        %751 = vmatprep.subr.mxu0 0.0
        %752 = vmatpush1.msra.mxu0 %v475
        %753 = vmatprep.subr.mxu0 0.0
        %754 = vmatpush1.msra.mxu0 %v474
        %755 = vmatprep.subr.mxu0 0.0
        %756 = vmatpush1.msra.mxu0 %v473
        %757 = vmatprep.subr.mxu0 0.0
        %758 = vmatpush1.msra.mxu0 %v472
        %759 = vmatprep.subr.mxu0 0.0
        %760 = vmatpush1.msra.mxu0 %v471
        %761 = vmatprep.subr.mxu0 0.0
        %762 = vmatpush2.msra.mxu0 0.0
        %763 = vmatprep.subr.mxu0 0.0
        %764 = vmatpush2.msra.mxu0 0.0
        %765 = vmatprep.subr.mxu0 0.0
        %766 = vmatpush2.msra.mxu0 0.0
        %767 = vmatprep.subr.mxu0 0.0
        %768 = vmatpush2.msra.mxu0 0.0
        %769 = vmatprep.subr.mxu0 0.0
        %770 = vmatpush2.msra.mxu0 0.0
        %771 = vmatprep.subr.mxu0 0.0
        %772 = vmatpush2.msra.mxu0 0.0
        %773 = vmatprep.subr.mxu0 0.0
        %774 = vmatpush2.msra.mxu0 0.0
        %775 = vmatprep.subr.mxu0 0.0
        %776 = vmatpush2.msra.mxu0 0.0
        %777 = vmatprep.subr.mxu0 0.0
        %778 = vmatpush2.msra.mxu0 0.0
        %779 = vmatprep.subr.mxu0 0.0
        %780 = vmatpush2.msra.mxu0 0.0
        %781 = vmatprep.subr.mxu0 0.0
        %782 = vmatpush2.msra.mxu0 0.0
        %783 = vmatprep.subr.mxu0 0.0
        %784 = vmatpush2.msra.mxu0 0.0
        %785 = vmatprep.subr.mxu0 0.0
        %786 = vmatpush2.msra.mxu0 0.0
        %787 = vmatprep.subr.mxu0 0.0
        %788 = vmatpush2.msra.mxu0 0.0
        %789 = vmatprep.subr.mxu0 0.0
        %790 = vmatpush2.msra.mxu0 0.0
        %791 = vmatprep.subr.mxu0 0.0
        %792 = vmatpush2.msra.mxu0 0.0
        %793 = vmatprep.mubr.f32.mxu0 0.0
        %794 = vmatmul.mubr.f32.gmra.mxu0 %v727
        %v795 = vpop.f32.mrf.mxu0
        %v796 = vadd.f32 0.0, %v795
        %v797 = vpop.f32.mrf.mxu0
        %798 = vdwg.mxu0
        %v800 = vsel %vm366, %v796, 0
        %802 = vmatprep.subr.mxu0 0.0
        %803 = vmatpush1.msra.mxu0 0.0
        %804 = vmatprep.subr.mxu0 0.0
        %805 = vmatpush1.msra.mxu0 0.0
        %806 = vmatprep.subr.mxu0 0.0
        %807 = vmatpush1.msra.mxu0 0.0
        %808 = vmatprep.subr.mxu0 0.0
        %809 = vmatpush1.msra.mxu0 0.0
        %810 = vmatprep.subr.mxu0 0.0
        %811 = vmatpush1.msra.mxu0 0.0
        %812 = vmatprep.subr.mxu0 0.0
        %813 = vmatpush1.msra.mxu0 0.0
        %814 = vmatprep.subr.mxu0 0.0
        %815 = vmatpush1.msra.mxu0 0.0
        %816 = vmatprep.subr.mxu0 0.0
        %817 = vmatpush1.msra.mxu0 0.0
        %818 = vmatprep.subr.mxu0 0.0
        %819 = vmatpush1.msra.mxu0 0.0
        %820 = vmatprep.subr.mxu0 0.0
        %821 = vmatpush1.msra.mxu0 0.0
        %822 = vmatprep.subr.mxu0 0.0
        %823 = vmatpush1.msra.mxu0 0.0
        %824 = vmatprep.subr.mxu0 0.0
        %825 = vmatpush1.msra.mxu0 0.0
        %826 = vmatprep.subr.mxu0 0.0
        %827 = vmatpush1.msra.mxu0 0.0
        %828 = vmatprep.subr.mxu0 0.0
        %829 = vmatpush1.msra.mxu0 0.0
        %830 = vmatprep.subr.mxu0 0.0
        %831 = vmatpush1.msra.mxu0 0.0
        %832 = vmatprep.subr.mxu0 0.0
        %833 = vmatpush1.msra.mxu0 %v476
        %834 = vmatprep.subr.mxu0 0.0
        %835 = vmatpush2.msra.mxu0 0.0
        %836 = vmatprep.subr.mxu0 0.0
        %837 = vmatpush2.msra.mxu0 0.0
        %838 = vmatprep.subr.mxu0 0.0
        %839 = vmatpush2.msra.mxu0 0.0
        %840 = vmatprep.subr.mxu0 0.0
        %841 = vmatpush2.msra.mxu0 0.0
        %842 = vmatprep.subr.mxu0 0.0
        %843 = vmatpush2.msra.mxu0 0.0
        %844 = vmatprep.subr.mxu0 0.0
        %845 = vmatpush2.msra.mxu0 0.0
        %846 = vmatprep.subr.mxu0 0.0
        %847 = vmatpush2.msra.mxu0 0.0
        %848 = vmatprep.subr.mxu0 0.0
        %849 = vmatpush2.msra.mxu0 0.0
        %850 = vmatprep.subr.mxu0 0.0
        %851 = vmatpush2.msra.mxu0 0.0
        %852 = vmatprep.subr.mxu0 0.0
        %853 = vmatpush2.msra.mxu0 0.0
        %854 = vmatprep.subr.mxu0 0.0
        %855 = vmatpush2.msra.mxu0 0.0
        %856 = vmatprep.subr.mxu0 0.0
        %857 = vmatpush2.msra.mxu0 0.0
        %858 = vmatprep.subr.mxu0 0.0
        %859 = vmatpush2.msra.mxu0 0.0
        %860 = vmatprep.subr.mxu0 0.0
        %861 = vmatpush2.msra.mxu0 0.0
        %862 = vmatprep.subr.mxu0 0.0
        %863 = vmatpush2.msra.mxu0 0.0
        %864 = vmatprep.subr.mxu0 0.0
        %865 = vmatpush2.msra.mxu0 0.0
        %866 = vmatprep.mubr.f32.mxu0 0.0
        %867 = vmatmul.mubr.f32.gmra.mxu0 %v800
        %v868 = vpop.f32.mrf.mxu0
        %v869 = vadd.f32 0.0, %v868
        %v870 = vpop.f32.mrf.mxu0
        %871 = vdwg.mxu0
        %v872 = vadd.f32 %v470, %v869
        %v873 = vmax.f32 %v872, 0.0
        %v875 = vsel %vm643, %v873, 0
        %877 = vmatprep.subr.mxu0 0.0
        %878 = vmatpush1.msra.mxu0 0.0
        %879 = vmatprep.subr.mxu0 0.0
        %880 = vmatpush1.msra.mxu0 0.0
        %881 = vmatprep.subr.mxu0 0.0
        %882 = vmatpush1.msra.mxu0 0.0
        %883 = vmatprep.subr.mxu0 0.0
        %884 = vmatpush1.msra.mxu0 0.0
        %885 = vmatprep.subr.mxu0 0.0
        %886 = vmatpush1.msra.mxu0 0.0
        %887 = vmatprep.subr.mxu0 0.0
        %888 = vmatpush1.msra.mxu0 0.0
        %889 = vmatprep.subr.mxu0 0.0
        %890 = vmatpush1.msra.mxu0 0.0
        %891 = vmatprep.subr.mxu0 0.0
        %892 = vmatpush1.msra.mxu0 0.0
        %893 = vmatprep.subr.mxu0 0.0
        %894 = vmatpush1.msra.mxu0 0.0
        %895 = vmatprep.subr.mxu0 0.0
        %896 = vmatpush1.msra.mxu0 0.0
        %897 = vmatprep.subr.mxu0 0.0
        %898 = vmatpush1.msra.mxu0 0.0
        %899 = vmatprep.subr.mxu0 0.0
        %900 = vmatpush1.msra.mxu0 0.0
        %901 = vmatprep.subr.mxu0 0.0
        %902 = vmatpush1.msra.mxu0 0.0
        %903 = vmatprep.subr.mxu0 0.0
        %904 = vmatpush1.msra.mxu0 0.0
        %905 = vmatprep.subr.mxu0 0.0
        %906 = vmatpush1.msra.mxu0 %v478
        %907 = vmatprep.subr.mxu0 0.0
        %908 = vmatpush1.msra.mxu0 %v477
        %909 = vmatprep.subr.mxu0 0.0
        %910 = vmatpush2.msra.mxu0 0.0
        %911 = vmatprep.subr.mxu0 0.0
        %912 = vmatpush2.msra.mxu0 0.0
        %913 = vmatprep.subr.mxu0 0.0
        %914 = vmatpush2.msra.mxu0 0.0
        %915 = vmatprep.subr.mxu0 0.0
        %916 = vmatpush2.msra.mxu0 0.0
        %917 = vmatprep.subr.mxu0 0.0
        %918 = vmatpush2.msra.mxu0 0.0
        %919 = vmatprep.subr.mxu0 0.0
        %920 = vmatpush2.msra.mxu0 0.0
        %921 = vmatprep.subr.mxu0 0.0
        %922 = vmatpush2.msra.mxu0 0.0
        %923 = vmatprep.subr.mxu0 0.0
        %924 = vmatpush2.msra.mxu0 0.0
        %925 = vmatprep.subr.mxu0 0.0
        %926 = vmatpush2.msra.mxu0 0.0
        %927 = vmatprep.subr.mxu0 0.0
        %928 = vmatpush2.msra.mxu0 0.0
        %929 = vmatprep.subr.mxu0 0.0
        %930 = vmatpush2.msra.mxu0 0.0
        %931 = vmatprep.subr.mxu0 0.0
        %932 = vmatpush2.msra.mxu0 0.0
        %933 = vmatprep.subr.mxu0 0.0
        %934 = vmatpush2.msra.mxu0 0.0
        %935 = vmatprep.subr.mxu0 0.0
        %936 = vmatpush2.msra.mxu0 0.0
        %937 = vmatprep.subr.mxu0 0.0
        %938 = vmatpush2.msra.mxu0 0.0
        %939 = vmatprep.subr.mxu0 0.0
        %940 = vmatpush2.msra.mxu0 0.0
        %941 = vmatprep.mubr.f32.mxu0 0.0
        %942 = vmatmul.mubr.f32.gmra.mxu0 %v875
        %v943 = vpop.f32.mrf.mxu0
        %v944 = vadd.f32 %v641, %v943
        %v945 = vpop.f32.mrf.mxu0
        %946 = vdwg.mxu0
        %v947 = vmax.f32 %v714, %v944
        %v948 = vsel %vm723, 3e+38, %v717
        %v949 = vsel %vm480, %v948, inf
        %950 = vmin.xlane.f32.xlu0 %v949
        %v951 = vpop.xlane.xlu0 %950
        %v953 = vand.u32 %v951, 63
        %vm954 = vcmp.eq.s32.totalorder %v465, %v953
        %v955 = vsel %vm954, 1, 0
        %v956 = vcvt.s32.f32 %v955
        %v958 = vsel %vm480, %v956, 0
        %960 = vmatprep.subr.mxu0 0.0
        %961 = vmatpush1.msra.mxu0 0.0
        %962 = vmatprep.subr.mxu0 0.0
        %963 = vmatpush1.msra.mxu0 0.0
        %964 = vmatprep.subr.mxu0 0.0
        %965 = vmatpush1.msra.mxu0 0.0
        %966 = vmatprep.subr.mxu0 0.0
        %967 = vmatpush1.msra.mxu0 0.0
        %968 = vmatprep.subr.mxu0 0.0
        %969 = vmatpush1.msra.mxu0 0.0
        %970 = vmatprep.subr.mxu0 0.0
        %971 = vmatpush1.msra.mxu0 0.0
        %972 = vmatprep.subr.mxu0 0.0
        %973 = vmatpush1.msra.mxu0 0.0
        %974 = vmatprep.subr.mxu0 0.0
        %975 = vmatpush1.msra.mxu0 0.0
        %976 = vmatprep.subr.mxu0 0.0
        %977 = vmatpush1.msra.mxu0 0.0
        %978 = vmatprep.subr.mxu0 0.0
        %979 = vmatpush1.msra.mxu0 0.0
        %980 = vmatprep.subr.mxu0 0.0
        %981 = vmatpush1.msra.mxu0 0.0
        %982 = vmatprep.subr.mxu0 0.0
        %983 = vmatpush1.msra.mxu0 %v475
        %984 = vmatprep.subr.mxu0 0.0
        %985 = vmatpush1.msra.mxu0 %v474
        %986 = vmatprep.subr.mxu0 0.0
        %987 = vmatpush1.msra.mxu0 %v473
        %988 = vmatprep.subr.mxu0 0.0
        %989 = vmatpush1.msra.mxu0 %v472
        %990 = vmatprep.subr.mxu0 0.0
        %991 = vmatpush1.msra.mxu0 %v471
        %992 = vmatprep.subr.mxu0 0.0
        %993 = vmatpush2.msra.mxu0 0.0
        %994 = vmatprep.subr.mxu0 0.0
        %995 = vmatpush2.msra.mxu0 0.0
        %996 = vmatprep.subr.mxu0 0.0
        %997 = vmatpush2.msra.mxu0 0.0
        %998 = vmatprep.subr.mxu0 0.0
        %999 = vmatpush2.msra.mxu0 0.0
        %1000 = vmatprep.subr.mxu0 0.0
        %1001 = vmatpush2.msra.mxu0 0.0
        %1002 = vmatprep.subr.mxu0 0.0
        %1003 = vmatpush2.msra.mxu0 0.0
        %1004 = vmatprep.subr.mxu0 0.0
        %1005 = vmatpush2.msra.mxu0 0.0
        %1006 = vmatprep.subr.mxu0 0.0
        %1007 = vmatpush2.msra.mxu0 0.0
        %1008 = vmatprep.subr.mxu0 0.0
        %1009 = vmatpush2.msra.mxu0 0.0
        %1010 = vmatprep.subr.mxu0 0.0
        %1011 = vmatpush2.msra.mxu0 0.0
        %1012 = vmatprep.subr.mxu0 0.0
        %1013 = vmatpush2.msra.mxu0 0.0
        %1014 = vmatprep.subr.mxu0 0.0
        %1015 = vmatpush2.msra.mxu0 0.0
        %1016 = vmatprep.subr.mxu0 0.0
        %1017 = vmatpush2.msra.mxu0 0.0
        %1018 = vmatprep.subr.mxu0 0.0
        %1019 = vmatpush2.msra.mxu0 0.0
        %1020 = vmatprep.subr.mxu0 0.0
        %1021 = vmatpush2.msra.mxu0 0.0
        %1022 = vmatprep.subr.mxu0 0.0
        %1023 = vmatpush2.msra.mxu0 0.0
        %1024 = vmatprep.mubr.f32.mxu0 0.0
        %1025 = vmatmul.mubr.f32.gmra.mxu0 %v958
        %v1026 = vpop.f32.mrf.mxu0
        %v1027 = vadd.f32 0.0, %v1026
        %v1028 = vpop.f32.mrf.mxu0
        %1029 = vdwg.mxu0
        %v1031 = vsel %vm366, %v1027, 0
        %1033 = vmatprep.subr.mxu0 0.0
        %1034 = vmatpush1.msra.mxu0 0.0
        %1035 = vmatprep.subr.mxu0 0.0
        %1036 = vmatpush1.msra.mxu0 0.0
        %1037 = vmatprep.subr.mxu0 0.0
        %1038 = vmatpush1.msra.mxu0 0.0
        %1039 = vmatprep.subr.mxu0 0.0
        %1040 = vmatpush1.msra.mxu0 0.0
        %1041 = vmatprep.subr.mxu0 0.0
        %1042 = vmatpush1.msra.mxu0 0.0
        %1043 = vmatprep.subr.mxu0 0.0
        %1044 = vmatpush1.msra.mxu0 0.0
        %1045 = vmatprep.subr.mxu0 0.0
        %1046 = vmatpush1.msra.mxu0 0.0
        %1047 = vmatprep.subr.mxu0 0.0
        %1048 = vmatpush1.msra.mxu0 0.0
        %1049 = vmatprep.subr.mxu0 0.0
        %1050 = vmatpush1.msra.mxu0 0.0
        %1051 = vmatprep.subr.mxu0 0.0
        %1052 = vmatpush1.msra.mxu0 0.0
        %1053 = vmatprep.subr.mxu0 0.0
        %1054 = vmatpush1.msra.mxu0 0.0
        %1055 = vmatprep.subr.mxu0 0.0
        %1056 = vmatpush1.msra.mxu0 0.0
        %1057 = vmatprep.subr.mxu0 0.0
        %1058 = vmatpush1.msra.mxu0 0.0
        %1059 = vmatprep.subr.mxu0 0.0
        %1060 = vmatpush1.msra.mxu0 0.0
        %1061 = vmatprep.subr.mxu0 0.0
        %1062 = vmatpush1.msra.mxu0 0.0
        %1063 = vmatprep.subr.mxu0 0.0
        %1064 = vmatpush1.msra.mxu0 %v476
        %1065 = vmatprep.subr.mxu0 0.0
        %1066 = vmatpush2.msra.mxu0 0.0
        %1067 = vmatprep.subr.mxu0 0.0
        %1068 = vmatpush2.msra.mxu0 0.0
        %1069 = vmatprep.subr.mxu0 0.0
        %1070 = vmatpush2.msra.mxu0 0.0
        %1071 = vmatprep.subr.mxu0 0.0
        %1072 = vmatpush2.msra.mxu0 0.0
        %1073 = vmatprep.subr.mxu0 0.0
        %1074 = vmatpush2.msra.mxu0 0.0
        %1075 = vmatprep.subr.mxu0 0.0
        %1076 = vmatpush2.msra.mxu0 0.0
        %1077 = vmatprep.subr.mxu0 0.0
        %1078 = vmatpush2.msra.mxu0 0.0
        %1079 = vmatprep.subr.mxu0 0.0
        %1080 = vmatpush2.msra.mxu0 0.0
        %1081 = vmatprep.subr.mxu0 0.0
        %1082 = vmatpush2.msra.mxu0 0.0
        %1083 = vmatprep.subr.mxu0 0.0
        %1084 = vmatpush2.msra.mxu0 0.0
        %1085 = vmatprep.subr.mxu0 0.0
        %1086 = vmatpush2.msra.mxu0 0.0
        %1087 = vmatprep.subr.mxu0 0.0
        %1088 = vmatpush2.msra.mxu0 0.0
        %1089 = vmatprep.subr.mxu0 0.0
        %1090 = vmatpush2.msra.mxu0 0.0
        %1091 = vmatprep.subr.mxu0 0.0
        %1092 = vmatpush2.msra.mxu0 0.0
        %1093 = vmatprep.subr.mxu0 0.0
        %1094 = vmatpush2.msra.mxu0 0.0
        %1095 = vmatprep.subr.mxu0 0.0
        %1096 = vmatpush2.msra.mxu0 0.0
        %1097 = vmatprep.mubr.f32.mxu0 0.0
        %1098 = vmatmul.mubr.f32.gmra.mxu0 %v1031
        %v1099 = vpop.f32.mrf.mxu0
        %v1100 = vadd.f32 0.0, %v1099
        %v1101 = vpop.f32.mrf.mxu0
        %1102 = vdwg.mxu0
        %v1103 = vadd.f32 %v470, %v1100
        %v1104 = vmax.f32 %v1103, 0.0
        %v1106 = vsel %vm643, %v1104, 0
        %1108 = vmatprep.subr.mxu0 0.0
        %1109 = vmatpush1.msra.mxu0 0.0
        %1110 = vmatprep.subr.mxu0 0.0
        %1111 = vmatpush1.msra.mxu0 0.0
        %1112 = vmatprep.subr.mxu0 0.0
        %1113 = vmatpush1.msra.mxu0 0.0
        %1114 = vmatprep.subr.mxu0 0.0
        %1115 = vmatpush1.msra.mxu0 0.0
        %1116 = vmatprep.subr.mxu0 0.0
        %1117 = vmatpush1.msra.mxu0 0.0
        %1118 = vmatprep.subr.mxu0 0.0
        %1119 = vmatpush1.msra.mxu0 0.0
        %1120 = vmatprep.subr.mxu0 0.0
        %1121 = vmatpush1.msra.mxu0 0.0
        %1122 = vmatprep.subr.mxu0 0.0
        %1123 = vmatpush1.msra.mxu0 0.0
        %1124 = vmatprep.subr.mxu0 0.0
        %1125 = vmatpush1.msra.mxu0 0.0
        %1126 = vmatprep.subr.mxu0 0.0
        %1127 = vmatpush1.msra.mxu0 0.0
        %1128 = vmatprep.subr.mxu0 0.0
        %1129 = vmatpush1.msra.mxu0 0.0
        %1130 = vmatprep.subr.mxu0 0.0
        %1131 = vmatpush1.msra.mxu0 0.0
        %1132 = vmatprep.subr.mxu0 0.0
        %1133 = vmatpush1.msra.mxu0 0.0
        %1134 = vmatprep.subr.mxu0 0.0
        %1135 = vmatpush1.msra.mxu0 0.0
        %1136 = vmatprep.subr.mxu0 0.0
        %1137 = vmatpush1.msra.mxu0 %v478
        %1138 = vmatprep.subr.mxu0 0.0
        %1139 = vmatpush1.msra.mxu0 %v477
        %1140 = vmatprep.subr.mxu0 0.0
        %1141 = vmatpush2.msra.mxu0 0.0
        %1142 = vmatprep.subr.mxu0 0.0
        %1143 = vmatpush2.msra.mxu0 0.0
        %1144 = vmatprep.subr.mxu0 0.0
        %1145 = vmatpush2.msra.mxu0 0.0
        %1146 = vmatprep.subr.mxu0 0.0
        %1147 = vmatpush2.msra.mxu0 0.0
        %1148 = vmatprep.subr.mxu0 0.0
        %1149 = vmatpush2.msra.mxu0 0.0
        %1150 = vmatprep.subr.mxu0 0.0
        %1151 = vmatpush2.msra.mxu0 0.0
        %1152 = vmatprep.subr.mxu0 0.0
        %1153 = vmatpush2.msra.mxu0 0.0
        %1154 = vmatprep.subr.mxu0 0.0
        %1155 = vmatpush2.msra.mxu0 0.0
        %1156 = vmatprep.subr.mxu0 0.0
        %1157 = vmatpush2.msra.mxu0 0.0
        %1158 = vmatprep.subr.mxu0 0.0
        %1159 = vmatpush2.msra.mxu0 0.0
        %1160 = vmatprep.subr.mxu0 0.0
        %1161 = vmatpush2.msra.mxu0 0.0
        %1162 = vmatprep.subr.mxu0 0.0
        %1163 = vmatpush2.msra.mxu0 0.0
        %1164 = vmatprep.subr.mxu0 0.0
        %1165 = vmatpush2.msra.mxu0 0.0
        %1166 = vmatprep.subr.mxu0 0.0
        %1167 = vmatpush2.msra.mxu0 0.0
        %1168 = vmatprep.subr.mxu0 0.0
        %1169 = vmatpush2.msra.mxu0 0.0
        %1170 = vmatprep.subr.mxu0 0.0
        %1171 = vmatpush2.msra.mxu0 0.0
        %1172 = vmatprep.mubr.f32.mxu0 0.0
        %1173 = vmatmul.mubr.f32.gmra.mxu0 %v1106
        %v1174 = vpop.f32.mrf.mxu0
        %v1175 = vadd.f32 %v641, %v1174
        %v1176 = vpop.f32.mrf.mxu0
        %1177 = vdwg.mxu0
        %v1178 = vmax.f32 %v947, %v1175
        %v1179 = vsel %vm954, 3e+38, %v948
        %v1180 = vsel %vm480, %v1179, inf
        %1181 = vmin.xlane.f32.xlu0 %v1180
        %v1182 = vpop.xlane.xlu0 %1181
        %v1184 = vand.u32 %v1182, 63
        %vm1185 = vcmp.eq.s32.totalorder %v465, %v1184
        %v1186 = vsel %vm1185, 1, 0
        %v1187 = vcvt.s32.f32 %v1186
        %v1189 = vsel %vm480, %v1187, 0
        %1191 = vmatprep.subr.mxu0 0.0
        %1192 = vmatpush1.msra.mxu0 0.0
        %1193 = vmatprep.subr.mxu0 0.0
        %1194 = vmatpush1.msra.mxu0 0.0
        %1195 = vmatprep.subr.mxu0 0.0
        %1196 = vmatpush1.msra.mxu0 0.0
        %1197 = vmatprep.subr.mxu0 0.0
        %1198 = vmatpush1.msra.mxu0 0.0
        %1199 = vmatprep.subr.mxu0 0.0
        %1200 = vmatpush1.msra.mxu0 0.0
        %1201 = vmatprep.subr.mxu0 0.0
        %1202 = vmatpush1.msra.mxu0 0.0
        %1203 = vmatprep.subr.mxu0 0.0
        %1204 = vmatpush1.msra.mxu0 0.0
        %1205 = vmatprep.subr.mxu0 0.0
        %1206 = vmatpush1.msra.mxu0 0.0
        %1207 = vmatprep.subr.mxu0 0.0
        %1208 = vmatpush1.msra.mxu0 0.0
        %1209 = vmatprep.subr.mxu0 0.0
        %1210 = vmatpush1.msra.mxu0 0.0
        %1211 = vmatprep.subr.mxu0 0.0
        %1212 = vmatpush1.msra.mxu0 0.0
        %1213 = vmatprep.subr.mxu0 0.0
        %1214 = vmatpush1.msra.mxu0 %v475
        %1215 = vmatprep.subr.mxu0 0.0
        %1216 = vmatpush1.msra.mxu0 %v474
        %1217 = vmatprep.subr.mxu0 0.0
        %1218 = vmatpush1.msra.mxu0 %v473
        %1219 = vmatprep.subr.mxu0 0.0
        %1220 = vmatpush1.msra.mxu0 %v472
        %1221 = vmatprep.subr.mxu0 0.0
        %1222 = vmatpush1.msra.mxu0 %v471
        %1223 = vmatprep.subr.mxu0 0.0
        %1224 = vmatpush2.msra.mxu0 0.0
        %1225 = vmatprep.subr.mxu0 0.0
        %1226 = vmatpush2.msra.mxu0 0.0
        %1227 = vmatprep.subr.mxu0 0.0
        %1228 = vmatpush2.msra.mxu0 0.0
        %1229 = vmatprep.subr.mxu0 0.0
        %1230 = vmatpush2.msra.mxu0 0.0
        %1231 = vmatprep.subr.mxu0 0.0
        %1232 = vmatpush2.msra.mxu0 0.0
        %1233 = vmatprep.subr.mxu0 0.0
        %1234 = vmatpush2.msra.mxu0 0.0
        %1235 = vmatprep.subr.mxu0 0.0
        %1236 = vmatpush2.msra.mxu0 0.0
        %1237 = vmatprep.subr.mxu0 0.0
        %1238 = vmatpush2.msra.mxu0 0.0
        %1239 = vmatprep.subr.mxu0 0.0
        %1240 = vmatpush2.msra.mxu0 0.0
        %1241 = vmatprep.subr.mxu0 0.0
        %1242 = vmatpush2.msra.mxu0 0.0
        %1243 = vmatprep.subr.mxu0 0.0
        %1244 = vmatpush2.msra.mxu0 0.0
        %1245 = vmatprep.subr.mxu0 0.0
        %1246 = vmatpush2.msra.mxu0 0.0
        %1247 = vmatprep.subr.mxu0 0.0
        %1248 = vmatpush2.msra.mxu0 0.0
        %1249 = vmatprep.subr.mxu0 0.0
        %1250 = vmatpush2.msra.mxu0 0.0
        %1251 = vmatprep.subr.mxu0 0.0
        %1252 = vmatpush2.msra.mxu0 0.0
        %1253 = vmatprep.subr.mxu0 0.0
        %1254 = vmatpush2.msra.mxu0 0.0
        %1255 = vmatprep.mubr.f32.mxu0 0.0
        %1256 = vmatmul.mubr.f32.gmra.mxu0 %v1189
        %v1257 = vpop.f32.mrf.mxu0
        %v1258 = vadd.f32 0.0, %v1257
        %v1259 = vpop.f32.mrf.mxu0
        %1260 = vdwg.mxu0
        %v1262 = vsel %vm366, %v1258, 0
        %1264 = vmatprep.subr.mxu0 0.0
        %1265 = vmatpush1.msra.mxu0 0.0
        %1266 = vmatprep.subr.mxu0 0.0
        %1267 = vmatpush1.msra.mxu0 0.0
        %1268 = vmatprep.subr.mxu0 0.0
        %1269 = vmatpush1.msra.mxu0 0.0
        %1270 = vmatprep.subr.mxu0 0.0
        %1271 = vmatpush1.msra.mxu0 0.0
        %1272 = vmatprep.subr.mxu0 0.0
        %1273 = vmatpush1.msra.mxu0 0.0
        %1274 = vmatprep.subr.mxu0 0.0
        %1275 = vmatpush1.msra.mxu0 0.0
        %1276 = vmatprep.subr.mxu0 0.0
        %1277 = vmatpush1.msra.mxu0 0.0
        %1278 = vmatprep.subr.mxu0 0.0
        %1279 = vmatpush1.msra.mxu0 0.0
        %1280 = vmatprep.subr.mxu0 0.0
        %1281 = vmatpush1.msra.mxu0 0.0
        %1282 = vmatprep.subr.mxu0 0.0
        %1283 = vmatpush1.msra.mxu0 0.0
        %1284 = vmatprep.subr.mxu0 0.0
        %1285 = vmatpush1.msra.mxu0 0.0
        %1286 = vmatprep.subr.mxu0 0.0
        %1287 = vmatpush1.msra.mxu0 0.0
        %1288 = vmatprep.subr.mxu0 0.0
        %1289 = vmatpush1.msra.mxu0 0.0
        %1290 = vmatprep.subr.mxu0 0.0
        %1291 = vmatpush1.msra.mxu0 0.0
        %1292 = vmatprep.subr.mxu0 0.0
        %1293 = vmatpush1.msra.mxu0 0.0
        %1294 = vmatprep.subr.mxu0 0.0
        %1295 = vmatpush1.msra.mxu0 %v476
        %1296 = vmatprep.subr.mxu0 0.0
        %1297 = vmatpush2.msra.mxu0 0.0
        %1298 = vmatprep.subr.mxu0 0.0
        %1299 = vmatpush2.msra.mxu0 0.0
        %1300 = vmatprep.subr.mxu0 0.0
        %1301 = vmatpush2.msra.mxu0 0.0
        %1302 = vmatprep.subr.mxu0 0.0
        %1303 = vmatpush2.msra.mxu0 0.0
        %1304 = vmatprep.subr.mxu0 0.0
        %1305 = vmatpush2.msra.mxu0 0.0
        %1306 = vmatprep.subr.mxu0 0.0
        %1307 = vmatpush2.msra.mxu0 0.0
        %1308 = vmatprep.subr.mxu0 0.0
        %1309 = vmatpush2.msra.mxu0 0.0
        %1310 = vmatprep.subr.mxu0 0.0
        %1311 = vmatpush2.msra.mxu0 0.0
        %1312 = vmatprep.subr.mxu0 0.0
        %1313 = vmatpush2.msra.mxu0 0.0
        %1314 = vmatprep.subr.mxu0 0.0
        %1315 = vmatpush2.msra.mxu0 0.0
        %1316 = vmatprep.subr.mxu0 0.0
        %1317 = vmatpush2.msra.mxu0 0.0
        %1318 = vmatprep.subr.mxu0 0.0
        %1319 = vmatpush2.msra.mxu0 0.0
        %1320 = vmatprep.subr.mxu0 0.0
        %1321 = vmatpush2.msra.mxu0 0.0
        %1322 = vmatprep.subr.mxu0 0.0
        %1323 = vmatpush2.msra.mxu0 0.0
        %1324 = vmatprep.subr.mxu0 0.0
        %1325 = vmatpush2.msra.mxu0 0.0
        %1326 = vmatprep.subr.mxu0 0.0
        %1327 = vmatpush2.msra.mxu0 0.0
        %1328 = vmatprep.mubr.f32.mxu0 0.0
        %1329 = vmatmul.mubr.f32.gmra.mxu0 %v1262
        %v1330 = vpop.f32.mrf.mxu0
        %v1331 = vadd.f32 0.0, %v1330
        %v1332 = vpop.f32.mrf.mxu0
        %1333 = vdwg.mxu0
        %v1334 = vadd.f32 %v470, %v1331
        %v1335 = vmax.f32 %v1334, 0.0
        %v1337 = vsel %vm643, %v1335, 0
        %1339 = vmatprep.subr.mxu0 0.0
        %1340 = vmatpush1.msra.mxu0 0.0
        %1341 = vmatprep.subr.mxu0 0.0
        %1342 = vmatpush1.msra.mxu0 0.0
        %1343 = vmatprep.subr.mxu0 0.0
        %1344 = vmatpush1.msra.mxu0 0.0
        %1345 = vmatprep.subr.mxu0 0.0
        %1346 = vmatpush1.msra.mxu0 0.0
        %1347 = vmatprep.subr.mxu0 0.0
        %1348 = vmatpush1.msra.mxu0 0.0
        %1349 = vmatprep.subr.mxu0 0.0
        %1350 = vmatpush1.msra.mxu0 0.0
        %1351 = vmatprep.subr.mxu0 0.0
        %1352 = vmatpush1.msra.mxu0 0.0
        %1353 = vmatprep.subr.mxu0 0.0
        %1354 = vmatpush1.msra.mxu0 0.0
        %1355 = vmatprep.subr.mxu0 0.0
        %1356 = vmatpush1.msra.mxu0 0.0
        %1357 = vmatprep.subr.mxu0 0.0
        %1358 = vmatpush1.msra.mxu0 0.0
        %1359 = vmatprep.subr.mxu0 0.0
        %1360 = vmatpush1.msra.mxu0 0.0
        %1361 = vmatprep.subr.mxu0 0.0
        %1362 = vmatpush1.msra.mxu0 0.0
        %1363 = vmatprep.subr.mxu0 0.0
        %1364 = vmatpush1.msra.mxu0 0.0
        %1365 = vmatprep.subr.mxu0 0.0
        %1366 = vmatpush1.msra.mxu0 0.0
        %1367 = vmatprep.subr.mxu0 0.0
        %1368 = vmatpush1.msra.mxu0 %v478
        %1369 = vmatprep.subr.mxu0 0.0
        %1370 = vmatpush1.msra.mxu0 %v477
        %1371 = vmatprep.subr.mxu0 0.0
        %1372 = vmatpush2.msra.mxu0 0.0
        %1373 = vmatprep.subr.mxu0 0.0
        %1374 = vmatpush2.msra.mxu0 0.0
        %1375 = vmatprep.subr.mxu0 0.0
        %1376 = vmatpush2.msra.mxu0 0.0
        %1377 = vmatprep.subr.mxu0 0.0
        %1378 = vmatpush2.msra.mxu0 0.0
        %1379 = vmatprep.subr.mxu0 0.0
        %1380 = vmatpush2.msra.mxu0 0.0
        %1381 = vmatprep.subr.mxu0 0.0
        %1382 = vmatpush2.msra.mxu0 0.0
        %1383 = vmatprep.subr.mxu0 0.0
        %1384 = vmatpush2.msra.mxu0 0.0
        %1385 = vmatprep.subr.mxu0 0.0
        %1386 = vmatpush2.msra.mxu0 0.0
        %1387 = vmatprep.subr.mxu0 0.0
        %1388 = vmatpush2.msra.mxu0 0.0
        %1389 = vmatprep.subr.mxu0 0.0
        %1390 = vmatpush2.msra.mxu0 0.0
        %1391 = vmatprep.subr.mxu0 0.0
        %1392 = vmatpush2.msra.mxu0 0.0
        %1393 = vmatprep.subr.mxu0 0.0
        %1394 = vmatpush2.msra.mxu0 0.0
        %1395 = vmatprep.subr.mxu0 0.0
        %1396 = vmatpush2.msra.mxu0 0.0
        %1397 = vmatprep.subr.mxu0 0.0
        %1398 = vmatpush2.msra.mxu0 0.0
        %1399 = vmatprep.subr.mxu0 0.0
        %1400 = vmatpush2.msra.mxu0 0.0
        %1401 = vmatprep.subr.mxu0 0.0
        %1402 = vmatpush2.msra.mxu0 0.0
        %1403 = vmatprep.mubr.f32.mxu0 0.0
        %1404 = vmatmul.mubr.f32.gmra.mxu0 %v1337
        %v1405 = vpop.f32.mrf.mxu0
        %v1406 = vadd.f32 %v641, %v1405
        %v1407 = vpop.f32.mrf.mxu0
        %1408 = vdwg.mxu0
        %v1409 = vmax.f32 %v1178, %v1406
        %v1410 = vmax.f32 %v1409, 0.0
        %1411 = vst [vmem:[%s349] sm:$0xff] %v1410
        %s1412 = sand.u32 %s235, 1
        %s1413 = scalar_lea.sflag [#allocation3], %s1412
        %s1414 = sand.u32 %s235, 1
        %s1415 = smul.addr %s1414, 8
        %s1416 = scalar_lea.vmem [#allocation2], %s1415
        // Predicated region
        $region57: #{tpu_custom_call.1} parent=55 // pred_check
          %p1417 = pneg %p245
        $region58: #{tpu_custom_call.1} parent=55 // pred_check_branch
          %1419 = sbr.rel (%p1417) target = $region60
        $region59: #{tpu_custom_call.1} parent=55 // pred_region
          %s1421 = ssub.s32 128, 128
          %1422 = vsyncadd %s1413, %s1421
          %s1423 = smul.addr %s23, 128
          %s1424 = scalar_lea.hbm %s9, %s1423
          %s1426 = sshll.u32 %s1416, 4
          %s1427 = int_to_ptr.vmem [resolvable:$true] %s1426
          %1429 = dma.vmem_to_hbm [thread:$0]  %s1427, 128, %s1424, %s1413
        $region60: #{tpu_custom_call.1} parent=55 // pred_fallthru
          _
      $region56: #{tpu_custom_call.1} parent=5 // pred_fallthru
        _
      %p1430 = scmp.le.s32.totalorder 2, %s18
      // Predicated region
      $region61: #{tpu_custom_call.1} parent=5 // pred_check
        %p1431 = pneg %p1430
      $region62: #{tpu_custom_call.1} parent=5 // pred_check_branch
        %1433 = sbr.rel (%p1431) target = $region64
      $region63: #{tpu_custom_call.1} parent=5 // pred_region
        %s1434 = ssub.s32 %s18, 2
        // Predicated region
        $region65: #{tpu_custom_call.1} parent=63 // pred_check
          %p1435 = pneg %p251
        $region66: #{tpu_custom_call.1} parent=63 // pred_check_branch
          %1437 = sbr.rel (%p1435) target = $region68
        $region67: #{tpu_custom_call.1} parent=63 // pred_region
          %s1438 = sand.u32 %s236, 1
          %s1439 = scalar_lea.sflag [#allocation3], %s1438
          %s1440 = sand.u32 %s236, 1
          %s1441 = smul.addr %s1440, 8
          %s1442 = scalar_lea.vmem [#allocation2], %s1441
          %1443 = dma.done %s1439, 128
        $region68: #{tpu_custom_call.1} parent=63 // pred_fallthru
          _
      $region64: #{tpu_custom_call.1} parent=5 // pred_fallthru
        _
    $region6: #{tpu_custom_call.1} parent=1 // loop_footer
      %s22 = sadd.s32 1, %s18
    $region7: #{tpu_custom_call.1} parent=1 // loop_footer_branch
      %17 = sbr.rel target = $region3
    $region8: #{tpu_custom_call.1} parent=1 // loop_exit
      _
    %1444 = vsyncpa [#allocation3], 1
    %s1445 = scalar_lea.sflag [#allocation3], 1
    %1446 = vsyncpa %s1445, 1

</llo_original>
